<compile_context>
chip_gen: v5e
topology: v5e:2x2
jax: 0.10.0
libtpu: 0.0.40
codegen_flags: <defaults>
</compile_context>

<pallas_src>
from typing import NamedTuple

import jax
import jax.numpy as jnp
from jax.experimental import pallas as pl
from jax.experimental.pallas import tpu as pltpu


CP = 128                       # lane-dense padded channel width for activations
MAX_TILE_ROWS = 128            # output rows per grid step (use 512-1024 at real
                               # detection resolutions; keeps VMEM << v7x 64 MiB)
VMEM_LIMIT = 48 * 1024 * 1024  # scoped-VMEM headroom; stays under v7x physical


class NestedTensor(NamedTuple):
    tensors: jnp.ndarray   # features, NCHW (PyTorch convention)
    mask: jnp.ndarray      # bool [B, H, W]


def _round_up(v, m):
    return ((v + m - 1) // m) * m


def _pick_tile(L, cap=MAX_TILE_ROWS):
    """Split L output rows into nt tiles of tile_l rows (tile_l multiple of 8)."""
    nt = max(1, -(-L // cap))
    tile = _round_up(-(-L // nt), 8)
    nt = -(-L // tile)
    return tile, nt


# --------------------------------------------------------------------------
# Core kernel: sum of statically-offset [tile_l, Cin] x [Cin, 128] MXU taps,
# accumulated in a f32 VMEM scratch, fused bias + ReLU, lane-dense bf16 store.
#
# 3x3 stride-2 pad-1 conv phase trick: with xpad the zero-padded input,
#   P[p,q][a,b] = xpad[2a+p, 2b+q]  (4 sub-images of size [Ho+1, Wo+1, Cin]),
# tap (dh,dw) of the window reads P[dh%2,dw%2] at offset (dh//2, dw//2).  After
# flattening a phase row-major, every tap window is a contiguous row range at
# off = (dh//2)*(Wo+1) + (dw//2); rows with column index == Wo are cross-row
# garbage and are dropped in the wrapper.  Tiles carry a (Wo+2)-row halo.
# --------------------------------------------------------------------------
def _tapped_matmul_relu(ph_tiled, w_bf16, bias_row, taps, tile_l, out_rows):
    """ph_tiled: [B, NPH, nt, tile_l+halo, Cin] bf16 (per-tile, halo baked in)
    w_bf16:    [NT, Cin, CP] bf16       bias_row: [1, CP] f32
    returns    [B, out_rows, CP] bf16   (bias + ReLU fused)."""
    B, NPH, nt, rows_blk, Cin = ph_tiled.shape
    NT = w_bf16.shape[0]
    assert len(taps) == NT

    def kernel(ph_ref, w_ref, b_ref, o_ref, acc_ref):
        for t, (phase, off) in enumerate(taps):            # statically unrolled MXU taps
            lhs = ph_ref[0, phase, 0, off:off + tile_l, :]  # [tile_l, Cin] bf16
            contrib = jnp.dot(lhs, w_ref[t], preferred_element_type=jnp.float32)
            if t == 0:
                acc_ref[...] = contrib                      # overwrite: no zero-init pass
            else:
                acc_ref[...] += contrib                     # f32 VMEM scratch accumulate
        # fused bias + ReLU, lane-dense bf16 store
        o_ref[0, 0] = jnp.maximum(acc_ref[...] + b_ref[...], 0.0).astype(o_ref.dtype)

    out = pl.pallas_call(
        kernel,
        out_shape=jax.ShapeDtypeStruct((B, nt, tile_l, CP), jnp.bfloat16),
        grid=(B, nt),
        in_specs=[
            pl.BlockSpec((1, NPH, 1, rows_blk, Cin), lambda b, t: (b, 0, t, 0, 0)),
            pl.BlockSpec((NT, Cin, CP), lambda b, t: (0, 0, 0)),
            pl.BlockSpec((1, CP), lambda b, t: (0, 0)),
        ],
        out_specs=pl.BlockSpec((1, 1, tile_l, CP), lambda b, t: (b, t, 0, 0)),
        scratch_shapes=[pltpu.VMEM((tile_l, CP), jnp.float32)],
        compiler_params=pltpu.CompilerParams(
            dimension_semantics=("parallel", "parallel"),   # batch + row-tile both parallel
            vmem_limit_bytes=VMEM_LIMIT),
    )(ph_tiled, w_bf16, bias_row)

    return out.reshape(B, nt * tile_l, CP)[:, :out_rows, :]


def _build_phases_tiled(x, tile_l, nt, halo):
    """x: [B, Hi, Wi, C] (Hi, Wi even) -> [B, 4, nt, tile_l+halo, C] (1-row-per-tile
    halo duplicated; duplication fraction ~= halo/tile_l, negligible)."""
    B, Hi, Wi, C = x.shape
    Ho, Wo = Hi // 2, Wi // 2
    Wp = Wo + 1
    xp = jnp.pad(x, ((0, 0), (1, 1), (1, 1), (0, 0)))
    ph = jnp.stack([xp[:, p::2, q::2, :] for p in (0, 1) for q in (0, 1)], axis=1)
    ph = ph.reshape(B, 4, (Ho + 1) * Wp, C)
    rows_needed = nt * tile_l + halo
    ph = jnp.pad(ph, ((0, 0), (0, 0), (0, rows_needed - (Ho + 1) * Wp), (0, 0)))
    idx = jnp.arange(nt)[:, None] * tile_l + jnp.arange(tile_l + halo)[None, :]
    return ph[:, :, idx, :]                                  # [B, 4, nt, tile_l+halo, C]


def _build_patches_tiled(x, tile_l, nt):
    """Layer1 (tiny Cin): fold 9 taps x Cin into K = 9*Cin im2col patches.
    x: [B, H, W, C] -> [B, 1, nt, tile_l, 9*C]."""
    B, H, W, C = x.shape
    Ho, Wo = H // 2, W // 2
    xp = jnp.pad(x, ((0, 0), (1, 1), (1, 1), (0, 0)))
    pats = jnp.concatenate(
        [xp[:, dh:dh + H:2, dw:dw + W:2, :] for dh in range(3) for dw in range(3)],
        axis=-1)                                             # [B, Ho, Wo, 9C]
    pats = pats.reshape(B, Ho * Wo, 9 * C)
    pats = jnp.pad(pats, ((0, 0), (0, nt * tile_l - Ho * Wo), (0, 0)))
    return pats.reshape(B, 1, nt, tile_l, 9 * C)


# --------------------------------------------------------------------------
# F.interpolate(mask[None].float(), size=(h,w)).to(bool)[0]   (nearest)
# Pure gather with src = floor(dst * in/out) -> plain JAX indexing.
# --------------------------------------------------------------------------
def interpolate_mask_nearest(mask_bool, out_hw):
    B, H, W = mask_bool.shape
    h_out, w_out = out_hw
    idx_h = (jnp.arange(h_out) * H) // h_out
    idx_w = (jnp.arange(w_out) * W) // w_out
    return mask_bool[:, idx_h[:, None], idx_w[None, :]]


# --------------------------------------------------------------------------
# BackboneBase
# --------------------------------------------------------------------------
class BackboneBase:
    """Mirror of the PyTorch BackboneBase forward.  The backbone body is a
    synthetic 4-stage stride-2 conv stack (layer1..layer4); requires_grad_
    gating in the reference is a training-time concern with no forward effect."""

    def __init__(self, backbone_params, train_backbone, num_channels,
                 return_interm_indices, total_finetune=False,
                 max_tile_rows=MAX_TILE_ROWS):
        self.return_layers = {}
        for idx, layer_index in enumerate(return_interm_indices):
            self.return_layers['layer{}'.format(5 - len(return_interm_indices) + idx)] = \
                '{}'.format(layer_index)
        self.num_channels = num_channels
        self.max_tile_rows = max_tile_rows

        # Pre-pack weights ONCE.  Layer1: [3,3,Cin,Cout] -> [1, 9*Cin, 128]
        # (single K=36 matmul).  Layers 2-4: [9, 128, 128] (Cin and Cout padded
        # so every hidden activation stays lane-dense 128-wide; pad lanes stay
        # exactly zero thanks to zero-padded bias + ReLU).
        self.packed = {}
        self.true_cout = {}
        for li in range(1, 5):
            name = 'layer%d' % li
            w, b = backbone_params[name]
            kh, kw, cin, cout = w.shape
            if li == 1:
                wk = w.reshape(kh * kw * cin, cout)          # K = 9*Cin, (dh,dw,c) order
                wk = jnp.pad(wk, ((0, 0), (0, CP - cout)))[None]       # [1, 9*Cin, 128]
            else:
                wk = w.reshape(kh * kw, cin, cout)
                wk = jnp.pad(wk, ((0, 0), (0, CP - cin), (0, CP - cout)))  # [9,128,128]
            bias_row = jnp.pad(b, (0, CP - cout)).reshape(1, CP).astype(jnp.float32)
            self.packed[name] = (wk.astype(jnp.bfloat16), bias_row)
            self.true_cout[name] = cout

    def forward(self, tensor_list: NestedTensor):
        x = tensor_list.tensors                 # NCHW (PyTorch interface)
        m = tensor_list.mask                    # [B, H, W] bool
        assert m is not None
        h = jnp.transpose(x, (0, 2, 3, 1)).astype(jnp.bfloat16)   # NHWC, bf16 once

        xs = {}
        for li in range(1, 5):                  # IntermediateLayerGetter over layer1..4
            name = 'layer%d' % li
            wk, bias_row = self.packed[name]
            B, Hi, Wi, _ = h.shape
            assert Hi % 2 == 0 and Wi % 2 == 0
            Ho, Wo = Hi // 2, Wi // 2

            if li == 1:                         # single K=9*Cin tap (im2col on 4 channels)
                L = Ho * Wo
                tile_l, nt = _pick_tile(L, self.max_tile_rows)
                ph = _build_patches_tiled(h, tile_l, nt)
                taps = [(0, 0)]
                flat = _tapped_matmul_relu(ph, wk, bias_row, taps, tile_l, L)
                h = flat.reshape(B, Ho, Wo, CP)
            else:                               # 9 phase-decomposed taps, Cin = 128
                Wp = Wo + 1
                L = Ho * Wp
                halo = Wp + 1
                tile_l, nt = _pick_tile(L, self.max_tile_rows)
                ph = _build_phases_tiled(h, tile_l, nt, halo)
                taps = [((dh % 2) * 2 + (dw % 2), (dh // 2) * Wp + (dw // 2))
                        for dh in range(3) for dw in range(3)]
                flat = _tapped_matmul_relu(ph, wk, bias_row, taps, tile_l, L)
                h = flat.reshape(B, Ho, Wp, CP)[:, :, :Wo, :]   # drop garbage column

            if name in self.return_layers:
                xs[self.return_layers[name]] = \
                    h[..., :self.true_cout[name]].astype(jnp.float32)

        out = {}
        for key, feat in xs.items():
            mask = interpolate_mask_nearest(m, feat.shape[1:3])
            out[key] = NestedTensor(jnp.transpose(feat, (0, 3, 1, 2)), mask)   # NCHW
        return out


def init_backbone_params(key, c_in, widths=(16, 32, 64, 64)):
    params = {}
    cin = c_in
    for i, cout in enumerate(widths, start=1):
        key, kw, kb = jax.random.split(key, 3)
        w = jax.random.normal(kw, (3, 3, cin, cout), jnp.float32) * (1.0 / (3 * 3 * cin) ** 0.5)
        b = jax.random.normal(kb, (cout,), jnp.float32) * 0.01
        params['layer%d' % i] = (w, b)
        cin = cout
    return params


if __name__ == "__main__":
    key = jax.random.PRNGKey(0)
    k_x, k_m, k_p = jax.random.split(key, 3)

    B, C, H, W = 2, 4, 32, 32
    x = jax.random.normal(k_x, (B, C, H, W), jnp.float32)
    mask = jax.random.uniform(k_m, (B, H, W)) > 0.7          # bool padding mask

    params = init_backbone_params(k_p, C)
    model = BackboneBase(params, train_backbone=True,
                         num_channels=[32, 64, 64],
                         return_interm_indices=[1, 2, 3])

    fwd = jax.jit(lambda xx, mm: model.forward(NestedTensor(xx, mm)))
    out = fwd(x, mask)

    expected_hw = {'1': (8, 8), '2': (4, 4), '3': (2, 2)}
    for name, nt in out.items():
        jax.block_until_ready(nt.tensors)
        jax.block_until_ready(nt.mask)
        assert nt.tensors.shape[0] == B
        assert nt.tensors.shape[-2:] == expected_hw[name]
        assert nt.mask.shape[-2:] == expected_hw[name]
        assert nt.mask.dtype == jnp.bool_
        assert bool(jnp.all(jnp.isfinite(nt.tensors)))

    print("KERNEL_OK")
</pallas_src>

<mosaic_0001>
module attributes {stable_mosaic.version = 11 : i64} {
  func.func @kernel(%arg0: i32, %arg1: i32, %arg2: memref<1x1x1x128x36xbf16, #tpu.memory_space<vmem>>, %arg3: memref<1x36x128xbf16, #tpu.memory_space<vmem>>, %arg4: memref<1x128xf32, #tpu.memory_space<vmem>>, %arg5: memref<1x1x128x128xbf16, #tpu.memory_space<vmem>>, %arg6: memref<128x128xf32, #tpu.memory_space<vmem>>) attributes {dimension_semantics = [#tpu.dimension_semantics<parallel>, #tpu.dimension_semantics<parallel>], iteration_bounds = array<i64: 2, 2>, scalar_prefetch = 0 : i64, scratch_operands = 1 : i64, tpu.core_type = #tpu.core_type<tc>, window_params = [{transform_indices = @transform_0, window_bounds = array<i64: 1, 1, 1, 128, 36>}, {pipeline_mode = #tpu.pipeline_mode<synchronous>, transform_indices = @transform_1, window_bounds = array<i64: 1, 36, 128>}, {pipeline_mode = #tpu.pipeline_mode<synchronous>, transform_indices = @transform_2, window_bounds = array<i64: 1, 128>}, {transform_indices = @transform_3, window_bounds = array<i64: 1, 1, 128, 128>}]} {
    %c0 = arith.constant 0 : index
    %c0_0 = arith.constant 0 : index
    %c0_1 = arith.constant 0 : index
    %c0_2 = arith.constant 0 : index
    %c0_3 = arith.constant 0 : index
    %0 = vector.load %arg2[%c0, %c0_0, %c0_1, %c0_2, %c0_3] : memref<1x1x1x128x36xbf16, #tpu.memory_space<vmem>>, vector<1x1x1x128x36xbf16>
    %1 = vector.shape_cast %0 : vector<1x1x1x128x36xbf16> to vector<128x36xbf16>
    %c0_4 = arith.constant 0 : index
    %c0_5 = arith.constant 0 : index
    %c0_6 = arith.constant 0 : index
    %2 = vector.load %arg3[%c0_4, %c0_5, %c0_6] : memref<1x36x128xbf16, #tpu.memory_space<vmem>>, vector<1x36x128xbf16>
    %3 = vector.shape_cast %2 : vector<1x36x128xbf16> to vector<36x128xbf16>
    %cst = arith.constant dense<0.000000e+00> : vector<128x128xf32>
    %4 = tpu.matmul %1, %3, %cst {dimension_numbers = #tpu.dot_dimension_numbers<[1], [0], [0], [1], [0, 0, 1, 1], [], []>} : vector<128x36xbf16>, vector<36x128xbf16>, vector<128x128xf32> -> vector<128x128xf32>
    %c0_7 = arith.constant 0 : index
    %c0_8 = arith.constant 0 : index
    %5 = vector.load %arg6[%c0_7, %c0_8] : memref<128x128xf32, #tpu.memory_space<vmem>>, vector<128x128xf32>
    tpu.vector_store %arg6[%c0_7, %c0_8], %4 {strides = array<i32>} : memref<128x128xf32, #tpu.memory_space<vmem>>, vector<128x128xf32>,
    %c0_9 = arith.constant 0 : index
    %c0_10 = arith.constant 0 : index
    %6 = vector.load %arg6[%c0_9, %c0_10] : memref<128x128xf32, #tpu.memory_space<vmem>>, vector<128x128xf32>
    %c0_11 = arith.constant 0 : index
    %c0_12 = arith.constant 0 : index
    %7 = vector.load %arg4[%c0_11, %c0_12] : memref<1x128xf32, #tpu.memory_space<vmem>>, vector<1x128xf32>
    %8 = vector.broadcast %7 : vector<1x128xf32> to vector<128x128xf32>
    %9 = arith.addf %6, %8 : vector<128x128xf32>
    %cst_13 = arith.constant 0.000000e+00 : f32
    %10 = vector.broadcast %cst_13 : f32 to vector<128x128xf32>
    %11 = arith.maximumf %9, %10 : vector<128x128xf32>
    %12 = arith.truncf %11 : vector<128x128xf32> to vector<128x128xbf16>
    %c0_14 = arith.constant 0 : index
    %c0_15 = arith.constant 0 : index
    %c0_16 = arith.constant 0 : index
    %c0_17 = arith.constant 0 : index
    %13 = vector.load %arg5[%c0_14, %c0_15, %c0_16, %c0_17] : memref<1x1x128x128xbf16, #tpu.memory_space<vmem>>, vector<1x1x128x128xbf16>
    %14 = vector.shape_cast %13 : vector<1x1x128x128xbf16> to vector<128x128xbf16>
    %15 = vector.shape_cast %12 : vector<128x128xbf16> to vector<1x1x128x128xbf16>
    tpu.vector_store %arg5[%c0_14, %c0_15, %c0_16, %c0_17], %15 {strides = array<i32>} : memref<1x1x128x128xbf16, #tpu.memory_space<vmem>>, vector<1x1x128x128xbf16>,
    return
  }
  func.func @transform_0(%arg0: i32, %arg1: i32) -> (i32, i32, i32, i32, i32) {
    %c0_i32 = arith.constant 0 : i32
    %c0_i32_0 = arith.constant 0 : i32
    %c0_i32_1 = arith.constant 0 : i32
    %c0_i32_2 = arith.constant 0 : i32
    return %arg0, %c0_i32, %arg1, %c0_i32_0, %c0_i32_1 : i32, i32, i32, i32, i32
  }
  func.func @transform_1(%arg0: i32, %arg1: i32) -> (i32, i32, i32) {
    %c0_i32 = arith.constant 0 : i32
    %c0_i32_0 = arith.constant 0 : i32
    %c0_i32_1 = arith.constant 0 : i32
    %c0_i32_2 = arith.constant 0 : i32
    return %c0_i32, %c0_i32_0, %c0_i32_1 : i32, i32, i32
  }
  func.func @transform_2(%arg0: i32, %arg1: i32) -> (i32, i32) {
    %c0_i32 = arith.constant 0 : i32
    %c0_i32_0 = arith.constant 0 : i32
    %c0_i32_1 = arith.constant 0 : i32
    return %c0_i32, %c0_i32_0 : i32, i32
  }
  func.func @transform_3(%arg0: i32, %arg1: i32) -> (i32, i32, i32, i32) {
    %c0_i32 = arith.constant 0 : i32
    %c0_i32_0 = arith.constant 0 : i32
    %c0_i32_1 = arith.constant 0 : i32
    return %arg0, %arg1, %c0_i32, %c0_i32_0 : i32, i32, i32, i32
  }
}

module attributes {stable_mosaic.version = 11 : i64} {
  func.func @kernel(%arg0: i32, %arg1: i32, %arg2: memref<1x4x1x82x128xbf16, #tpu.memory_space<vmem>>, %arg3: memref<9x128x128xbf16, #tpu.memory_space<vmem>>, %arg4: memref<1x128xf32, #tpu.memory_space<vmem>>, %arg5: memref<1x1x72x128xbf16, #tpu.memory_space<vmem>>, %arg6: memref<72x128xf32, #tpu.memory_space<vmem>>) attributes {dimension_semantics = [#tpu.dimension_semantics<parallel>, #tpu.dimension_semantics<parallel>], iteration_bounds = array<i64: 2, 1>, scalar_prefetch = 0 : i64, scratch_operands = 1 : i64, tpu.core_type = #tpu.core_type<tc>, window_params = [{transform_indices = @transform_0, window_bounds = array<i64: 1, 4, 1, 82, 128>}, {pipeline_mode = #tpu.pipeline_mode<synchronous>, transform_indices = @transform_1, window_bounds = array<i64: 9, 128, 128>}, {pipeline_mode = #tpu.pipeline_mode<synchronous>, transform_indices = @transform_2, window_bounds = array<i64: 1, 128>}, {transform_indices = @transform_3, window_bounds = array<i64: 1, 1, 72, 128>}]} {
    %c0 = arith.constant 0 : index
    %c0_0 = arith.constant 0 : index
    %c0_1 = arith.constant 0 : index
    %c0_2 = arith.constant 0 : index
    %c0_3 = arith.constant 0 : index
    %0 = vector.load %arg2[%c0, %c0_0, %c0_1, %c0_2, %c0_3] : memref<1x4x1x82x128xbf16, #tpu.memory_space<vmem>>, vector<1x1x1x72x128xbf16>
    %1 = vector.shape_cast %0 : vector<1x1x1x72x128xbf16> to vector<72x128xbf16>
    %c0_4 = arith.constant 0 : index
    %c0_5 = arith.constant 0 : index
    %c0_6 = arith.constant 0 : index
    %2 = vector.load %arg3[%c0_4, %c0_5, %c0_6] : memref<9x128x128xbf16, #tpu.memory_space<vmem>>, vector<1x128x128xbf16>
    %3 = vector.shape_cast %2 : vector<1x128x128xbf16> to vector<128x128xbf16>
    %cst = arith.constant dense<0.000000e+00> : vector<72x128xf32>
    %4 = tpu.matmul %1, %3, %cst {dimension_numbers = #tpu.dot_dimension_numbers<[1], [0], [0], [1], [0, 0, 1, 1], [], []>} : vector<72x128xbf16>, vector<128x128xbf16>, vector<72x128xf32> -> vector<72x128xf32>
    %c0_7 = arith.constant 0 : index
    %c0_8 = arith.constant 0 : index
    %5 = vector.load %arg6[%c0_7, %c0_8] : memref<72x128xf32, #tpu.memory_space<vmem>>, vector<72x128xf32>
    tpu.vector_store %arg6[%c0_7, %c0_8], %4 {strides = array<i32>} : memref<72x128xf32, #tpu.memory_space<vmem>>, vector<72x128xf32>,
    %c0_9 = arith.constant 0 : index
    %c1 = arith.constant 1 : index
    %c0_10 = arith.constant 0 : index
    %c0_11 = arith.constant 0 : index
    %c0_12 = arith.constant 0 : index
    %6 = vector.load %arg2[%c0_9, %c1, %c0_10, %c0_11, %c0_12] : memref<1x4x1x82x128xbf16, #tpu.memory_space<vmem>>, vector<1x1x1x72x128xbf16>
    %7 = vector.shape_cast %6 : vector<1x1x1x72x128xbf16> to vector<72x128xbf16>
    %c1_13 = arith.constant 1 : index
    %c0_14 = arith.constant 0 : index
    %c0_15 = arith.constant 0 : index
    %8 = vector.load %arg3[%c1_13, %c0_14, %c0_15] : memref<9x128x128xbf16, #tpu.memory_space<vmem>>, vector<1x128x128xbf16>
    %9 = vector.shape_cast %8 : vector<1x128x128xbf16> to vector<128x128xbf16>
    %cst_16 = arith.constant dense<0.000000e+00> : vector<72x128xf32>
    %10 = tpu.matmul %7, %9, %cst_16 {dimension_numbers = #tpu.dot_dimension_numbers<[1], [0], [0], [1], [0, 0, 1, 1], [], []>} : vector<72x128xbf16>, vector<128x128xbf16>, vector<72x128xf32> -> vector<72x128xf32>
    %c0_17 = arith.constant 0 : index
    %c0_18 = arith.constant 0 : index
    %11 = vector.load %arg6[%c0_17, %c0_18] : memref<72x128xf32, #tpu.memory_space<vmem>>, vector<72x128xf32>
    %12 = arith.addf %11, %10 : vector<72x128xf32>
    %c0_19 = arith.constant 0 : index
    %c0_20 = arith.constant 0 : index
    %13 = vector.load %arg6[%c0_19, %c0_20] : memref<72x128xf32, #tpu.memory_space<vmem>>, vector<72x128xf32>
    tpu.vector_store %arg6[%c0_19, %c0_20], %12 {strides = array<i32>} : memref<72x128xf32, #tpu.memory_space<vmem>>, vector<72x128xf32>,
    %c0_21 = arith.constant 0 : index
    %c0_22 = arith.constant 0 : index
    %c0_23 = arith.constant 0 : index
    %c1_24 = arith.constant 1 : index
    %c0_25 = arith.constant 0 : index
    %14 = vector.load %arg2[%c0_21, %c0_22, %c0_23, %c1_24, %c0_25] : memref<1x4x1x82x128xbf16, #tpu.memory_space<vmem>>, vector<1x1x1x72x128xbf16>
    %15 = vector.shape_cast %14 : vector<1x1x1x72x128xbf16> to vector<72x128xbf16>
    %c2 = arith.constant 2 : index
    %c0_26 = arith.constant 0 : index
    %c0_27 = arith.constant 0 : index
    %16 = vector.load %arg3[%c2, %c0_26, %c0_27] : memref<9x128x128xbf16, #tpu.memory_space<vmem>>, vector<1x128x128xbf16>
    %17 = vector.shape_cast %16 : vector<1x128x128xbf16> to vector<128x128xbf16>
    %cst_28 = arith.constant dense<0.000000e+00> : vector<72x128xf32>
    %18 = tpu.matmul %15, %17, %cst_28 {dimension_numbers = #tpu.dot_dimension_numbers<[1], [0], [0], [1], [0, 0, 1, 1], [], []>} : vector<72x128xbf16>, vector<128x128xbf16>, vector<72x128xf32> -> vector<72x128xf32>
    %c0_29 = arith.constant 0 : index
    %c0_30 = arith.constant 0 : index
    %19 = vector.load %arg6[%c0_29, %c0_30] : memref<72x128xf32, #tpu.memory_space<vmem>>, vector<72x128xf32>
    %20 = arith.addf %19, %18 : vector<72x128xf32>
    %c0_31 = arith.constant 0 : index
    %c0_32 = arith.constant 0 : index
    %21 = vector.load %arg6[%c0_31, %c0_32] : memref<72x128xf32, #tpu.memory_space<vmem>>, vector<72x128xf32>
    tpu.vector_store %arg6[%c0_31, %c0_32], %20 {strides = array<i32>} : memref<72x128xf32, #tpu.memory_space<vmem>>, vector<72x128xf32>,
    %c0_33 = arith.constant 0 : index
    %c2_34 = arith.constant 2 : index
    %c0_35 = arith.constant 0 : index
    %c0_36 = arith.constant 0 : index
    %c0_37 = arith.constant 0 : index
    %22 = vector.load %arg2[%c0_33, %c2_34, %c0_35, %c0_36, %c0_37] : memref<1x4x1x82x128xbf16, #tpu.memory_space<vmem>>, vector<1x1x1x72x128xbf16>
    %23 = vector.shape_cast %22 : vector<1x1x1x72x128xbf16> to vector<72x128xbf16>
    %c3 = arith.constant 3 : index
    %c0_38 = arith.constant 0 : index
    %c0_39 = arith.constant 0 : index
    %24 = vector.load %arg3[%c3, %c0_38, %c0_39] : memref<9x128x128xbf16, #tpu.memory_space<vmem>>, vector<1x128x128xbf16>
    %25 = vector.shape_cast %24 : vector<1x128x128xbf16> to vector<128x128xbf16>
    %cst_40 = arith.constant dense<0.000000e+00> : vector<72x128xf32>
    %26 = tpu.matmul %23, %25, %cst_40 {dimension_numbers = #tpu.dot_dimension_numbers<[1], [0], [0], [1], [0, 0, 1, 1], [], []>} : vector<72x128xbf16>, vector<128x128xbf16>, vector<72x128xf32> -> vector<72x128xf32>
    %c0_41 = arith.constant 0 : index
    %c0_42 = arith.constant 0 : index
    %27 = vector.load %arg6[%c0_41, %c0_42] : memref<72x128xf32, #tpu.memory_space<vmem>>, vector<72x128xf32>
    %28 = arith.addf %27, %26 : vector<72x128xf32>
    %c0_43 = arith.constant 0 : index
    %c0_44 = arith.constant 0 : index
    %29 = vector.load %arg6[%c0_43, %c0_44] : memref<72x128xf32, #tpu.memory_space<vmem>>, vector<72x128xf32>
    tpu.vector_store %arg6[%c0_43, %c0_44], %28 {strides = array<i32>} : memref<72x128xf32, #tpu.memory_space<vmem>>, vector<72x128xf32>,
    %c0_45 = arith.constant 0 : index
    %c3_46 = arith.constant 3 : index
    %c0_47 = arith.constant 0 : index
    %c0_48 = arith.constant 0 : index
    %c0_49 = arith.constant 0 : index
    %30 = vector.load %arg2[%c0_45, %c3_46, %c0_47, %c0_48, %c0_49] : memref<1x4x1x82x128xbf16, #tpu.memory_space<vmem>>, vector<1x1x1x72x128xbf16>
    %31 = vector.shape_cast %30 : vector<1x1x1x72x128xbf16> to vector<72x128xbf16>
    %c4 = arith.constant 4 : index
    %c0_50 = arith.constant 0 : index
    %c0_51 = arith.constant 0 : index
    %32 = vector.load %arg3[%c4, %c0_50, %c0_51] : memref<9x128x128xbf16, #tpu.memory_space<vmem>>, vector<1x128x128xbf16>
    %33 = vector.shape_cast %32 : vector<1x128x128xbf16> to vector<128x128xbf16>
    %cst_52 = arith.constant dense<0.000000e+00> : vector<72x128xf32>
    %34 = tpu.matmul %31, %33, %cst_52 {dimension_numbers = #tpu.dot_dimension_numbers<[1], [0], [0], [1], [0, 0, 1, 1], [], []>} : vector<72x128xbf16>, vector<128x128xbf16>, vector<72x128xf32> -> vector<72x128xf32>
    %c0_53 = arith.constant 0 : index
    %c0_54 = arith.constant 0 : index
    %35 = vector.load %arg6[%c0_53, %c0_54] : memref<72x128xf32, #tpu.memory_space<vmem>>, vector<72x128xf32>
    %36 = arith.addf %35, %34 : vector<72x128xf32>
    %c0_55 = arith.constant 0 : index
    %c0_56 = arith.constant 0 : index
    %37 = vector.load %arg6[%c0_55, %c0_56] : memref<72x128xf32, #tpu.memory_space<vmem>>, vector<72x128xf32>
    tpu.vector_store %arg6[%c0_55, %c0_56], %36 {strides = array<i32>} : memref<72x128xf32, #tpu.memory_space<vmem>>, vector<72x128xf32>,
    %c0_57 = arith.constant 0 : index
    %c2_58 = arith.constant 2 : index
    %c0_59 = arith.constant 0 : index
    %c1_60 = arith.constant 1 : index
    %c0_61 = arith.constant 0 : index
    %38 = vector.load %arg2[%c0_57, %c2_58, %c0_59, %c1_60, %c0_61] : memref<1x4x1x82x128xbf16, #tpu.memory_space<vmem>>, vector<1x1x1x72x128xbf16>
    %39 = vector.shape_cast %38 : vector<1x1x1x72x128xbf16> to vector<72x128xbf16>
    %c5 = arith.constant 5 : index
    %c0_62 = arith.constant 0 : index
    %c0_63 = arith.constant 0 : index
    %40 = vector.load %arg3[%c5, %c0_62, %c0_63] : memref<9x128x128xbf16, #tpu.memory_space<vmem>>, vector<1x128x128xbf16>
    %41 = vector.shape_cast %40 : vector<1x128x128xbf16> to vector<128x128xbf16>
    %cst_64 = arith.constant dense<0.000000e+00> : vector<72x128xf32>
    %42 = tpu.matmul %39, %41, %cst_64 {dimension_numbers = #tpu.dot_dimension_numbers<[1], [0], [0], [1], [0, 0, 1, 1], [], []>} : vector<72x128xbf16>, vector<128x128xbf16>, vector<72x128xf32> -> vector<72x128xf32>
    %c0_65 = arith.constant 0 : index
    %c0_66 = arith.constant 0 : index
    %43 = vector.load %arg6[%c0_65, %c0_66] : memref<72x128xf32, #tpu.memory_space<vmem>>, vector<72x128xf32>
    %44 = arith.addf %43, %42 : vector<72x128xf32>
    %c0_67 = arith.constant 0 : index
    %c0_68 = arith.constant 0 : index
    %45 = vector.load %arg6[%c0_67, %c0_68] : memref<72x128xf32, #tpu.memory_space<vmem>>, vector<72x128xf32>
    tpu.vector_store %arg6[%c0_67, %c0_68], %44 {strides = array<i32>} : memref<72x128xf32, #tpu.memory_space<vmem>>, vector<72x128xf32>,
    %c0_69 = arith.constant 0 : index
    %c0_70 = arith.constant 0 : index
    %c0_71 = arith.constant 0 : index
    %c9 = arith.constant 9 : index
    %c0_72 = arith.constant 0 : index
    %46 = vector.load %arg2[%c0_69, %c0_70, %c0_71, %c9, %c0_72] : memref<1x4x1x82x128xbf16, #tpu.memory_space<vmem>>, vector<1x1x1x72x128xbf16>
    %47 = vector.shape_cast %46 : vector<1x1x1x72x128xbf16> to vector<72x128xbf16>
    %c6 = arith.constant 6 : index
    %c0_73 = arith.constant 0 : index
    %c0_74 = arith.constant 0 : index
    %48 = vector.load %arg3[%c6, %c0_73, %c0_74] : memref<9x128x128xbf16, #tpu.memory_space<vmem>>, vector<1x128x128xbf16>
    %49 = vector.shape_cast %48 : vector<1x128x128xbf16> to vector<128x128xbf16>
    %cst_75 = arith.constant dense<0.000000e+00> : vector<72x128xf32>
    %50 = tpu.matmul %47, %49, %cst_75 {dimension_numbers = #tpu.dot_dimension_numbers<[1], [0], [0], [1], [0, 0, 1, 1], [], []>} : vector<72x128xbf16>, vector<128x128xbf16>, vector<72x128xf32> -> vector<72x128xf32>
    %c0_76 = arith.constant 0 : index
    %c0_77 = arith.constant 0 : index
    %51 = vector.load %arg6[%c0_76, %c0_77] : memref<72x128xf32, #tpu.memory_space<vmem>>, vector<72x128xf32>
    %52 = arith.addf %51, %50 : vector<72x128xf32>
    %c0_78 = arith.constant 0 : index
    %c0_79 = arith.constant 0 : index
    %53 = vector.load %arg6[%c0_78, %c0_79] : memref<72x128xf32, #tpu.memory_space<vmem>>, vector<72x128xf32>
    tpu.vector_store %arg6[%c0_78, %c0_79], %52 {strides = array<i32>} : memref<72x128xf32, #tpu.memory_space<vmem>>, vector<72x128xf32>,
    %c0_80 = arith.constant 0 : index
    %c1_81 = arith.constant 1 : index
    %c0_82 = arith.constant 0 : index
    %c9_83 = arith.constant 9 : index
    %c0_84 = arith.constant 0 : index
    %54 = vector.load %arg2[%c0_80, %c1_81, %c0_82, %c9_83, %c0_84] : memref<1x4x1x82x128xbf16, #tpu.memory_space<vmem>>, vector<1x1x1x72x128xbf16>
    %55 = vector.shape_cast %54 : vector<1x1x1x72x128xbf16> to vector<72x128xbf16>
    %c7 = arith.constant 7 : index
    %c0_85 = arith.constant 0 : index
    %c0_86 = arith.constant 0 : index
    %56 = vector.load %arg3[%c7, %c0_85, %c0_86] : memref<9x128x128xbf16, #tpu.memory_space<vmem>>, vector<1x128x128xbf16>
    %57 = vector.shape_cast %56 : vector<1x128x128xbf16> to vector<128x128xbf16>
    %cst_87 = arith.constant dense<0.000000e+00> : vector<72x128xf32>
    %58 = tpu.matmul %55, %57, %cst_87 {dimension_numbers = #tpu.dot_dimension_numbers<[1], [0], [0], [1], [0, 0, 1, 1], [], []>} : vector<72x128xbf16>, vector<128x128xbf16>, vector<72x128xf32> -> vector<72x128xf32>
    %c0_88 = arith.constant 0 : index
    %c0_89 = arith.constant 0 : index
    %59 = vector.load %arg6[%c0_88, %c0_89] : memref<72x128xf32, #tpu.memory_space<vmem>>, vector<72x128xf32>
    %60 = arith.addf %59, %58 : vector<72x128xf32>
    %c0_90 = arith.constant 0 : index
    %c0_91 = arith.constant 0 : index
    %61 = vector.load %arg6[%c0_90, %c0_91] : memref<72x128xf32, #tpu.memory_space<vmem>>, vector<72x128xf32>
    tpu.vector_store %arg6[%c0_90, %c0_91], %60 {strides = array<i32>} : memref<72x128xf32, #tpu.memory_space<vmem>>, vector<72x128xf32>,
    %c0_92 = arith.constant 0 : index
    %c0_93 = arith.constant 0 : index
    %c0_94 = arith.constant 0 : index
    %c10 = arith.constant 10 : index
    %c0_95 = arith.constant 0 : index
    %62 = vector.load %arg2[%c0_92, %c0_93, %c0_94, %c10, %c0_95] : memref<1x4x1x82x128xbf16, #tpu.memory_space<vmem>>, vector<1x1x1x72x128xbf16>
    %63 = vector.shape_cast %62 : vector<1x1x1x72x128xbf16> to vector<72x128xbf16>
    %c8 = arith.constant 8 : index
    %c0_96 = arith.constant 0 : index
    %c0_97 = arith.constant 0 : index
    %64 = vector.load %arg3[%c8, %c0_96, %c0_97] : memref<9x128x128xbf16, #tpu.memory_space<vmem>>, vector<1x128x128xbf16>
    %65 = vector.shape_cast %64 : vector<1x128x128xbf16> to vector<128x128xbf16>
    %cst_98 = arith.constant dense<0.000000e+00> : vector<72x128xf32>
    %66 = tpu.matmul %63, %65, %cst_98 {dimension_numbers = #tpu.dot_dimension_numbers<[1], [0], [0], [1], [0, 0, 1, 1], [], []>} : vector<72x128xbf16>, vector<128x128xbf16>, vector<72x128xf32> -> vector<72x128xf32>
    %c0_99 = arith.constant 0 : index
    %c0_100 = arith.constant 0 : index
    %67 = vector.load %arg6[%c0_99, %c0_100] : memref<72x128xf32, #tpu.memory_space<vmem>>, vector<72x128xf32>
    %68 = arith.addf %67, %66 : vector<72x128xf32>
    %c0_101 = arith.constant 0 : index
    %c0_102 = arith.constant 0 : index
    %69 = vector.load %arg6[%c0_101, %c0_102] : memref<72x128xf32, #tpu.memory_space<vmem>>, vector<72x128xf32>
    tpu.vector_store %arg6[%c0_101, %c0_102], %68 {strides = array<i32>} : memref<72x128xf32, #tpu.memory_space<vmem>>, vector<72x128xf32>,
    %c0_103 = arith.constant 0 : index
    %c0_104 = arith.constant 0 : index
    %70 = vector.load %arg6[%c0_103, %c0_104] : memref<72x128xf32, #tpu.memory_space<vmem>>, vector<72x128xf32>
    %c0_105 = arith.constant 0 : index
    %c0_106 = arith.constant 0 : index
    %71 = vector.load %arg4[%c0_105, %c0_106] : memref<1x128xf32, #tpu.memory_space<vmem>>, vector<1x128xf32>
    %72 = vector.broadcast %71 : vector<1x128xf32> to vector<72x128xf32>
    %73 = arith.addf %70, %72 : vector<72x128xf32>
    %cst_107 = arith.constant 0.000000e+00 : f32
    %74 = vector.broadcast %cst_107 : f32 to vector<72x128xf32>
    %75 = arith.maximumf %73, %74 : vector<72x128xf32>
    %76 = arith.truncf %75 : vector<72x128xf32> to vector<72x128xbf16>
    %c0_108 = arith.constant 0 : index
    %c0_109 = arith.constant 0 : index
    %c0_110 = arith.constant 0 : index
    %c0_111 = arith.constant 0 : index
    %77 = vector.load %arg5[%c0_108, %c0_109, %c0_110, %c0_111] : memref<1x1x72x128xbf16, #tpu.memory_space<vmem>>, vector<1x1x72x128xbf16>
    %78 = vector.shape_cast %77 : vector<1x1x72x128xbf16> to vector<72x128xbf16>
    %79 = vector.shape_cast %76 : vector<72x128xbf16> to vector<1x1x72x128xbf16>
    tpu.vector_store %arg5[%c0_108, %c0_109, %c0_110, %c0_111], %79 {strides = array<i32>} : memref<1x1x72x128xbf16, #tpu.memory_space<vmem>>, vector<1x1x72x128xbf16>,
    return
  }
  func.func @transform_0(%arg0: i32, %arg1: i32) -> (i32, i32, i32, i32, i32) {
    %c0_i32 = arith.constant 0 : i32
    %c0_i32_0 = arith.constant 0 : i32
    %c0_i32_1 = arith.constant 0 : i32
    %c0_i32_2 = arith.constant 0 : i32
    return %arg0, %c0_i32, %arg1, %c0_i32_0, %c0_i32_1 : i32, i32, i32, i32, i32
  }
  func.func @transform_1(%arg0: i32, %arg1: i32) -> (i32, i32, i32) {
    %c0_i32 = arith.constant 0 : i32
    %c0_i32_0 = arith.constant 0 : i32
    %c0_i32_1 = arith.constant 0 : i32
    %c0_i32_2 = arith.constant 0 : i32
    return %c0_i32, %c0_i32_0, %c0_i32_1 : i32, i32, i32
  }
  func.func @transform_2(%arg0: i32, %arg1: i32) -> (i32, i32) {
    %c0_i32 = arith.constant 0 : i32
    %c0_i32_0 = arith.constant 0 : i32
    %c0_i32_1 = arith.constant 0 : i32
    return %c0_i32, %c0_i32_0 : i32, i32
  }
  func.func @transform_3(%arg0: i32, %arg1: i32) -> (i32, i32, i32, i32) {
    %c0_i32 = arith.constant 0 : i32
    %c0_i32_0 = arith.constant 0 : i32
    %c0_i32_1 = arith.constant 0 : i32
    return %arg0, %arg1, %c0_i32, %c0_i32_0 : i32, i32, i32, i32
  }
}

module attributes {stable_mosaic.version = 11 : i64} {
  func.func @kernel(%arg0: i32, %arg1: i32, %arg2: memref<1x4x1x30x128xbf16, #tpu.memory_space<vmem>>, %arg3: memref<9x128x128xbf16, #tpu.memory_space<vmem>>, %arg4: memref<1x128xf32, #tpu.memory_space<vmem>>, %arg5: memref<1x1x24x128xbf16, #tpu.memory_space<vmem>>, %arg6: memref<24x128xf32, #tpu.memory_space<vmem>>) attributes {dimension_semantics = [#tpu.dimension_semantics<parallel>, #tpu.dimension_semantics<parallel>], iteration_bounds = array<i64: 2, 1>, scalar_prefetch = 0 : i64, scratch_operands = 1 : i64, tpu.core_type = #tpu.core_type<tc>, window_params = [{transform_indices = @transform_0, window_bounds = array<i64: 1, 4, 1, 30, 128>}, {pipeline_mode = #tpu.pipeline_mode<synchronous>, transform_indices = @transform_1, window_bounds = array<i64: 9, 128, 128>}, {pipeline_mode = #tpu.pipeline_mode<synchronous>, transform_indices = @transform_2, window_bounds = array<i64: 1, 128>}, {transform_indices = @transform_3, window_bounds = array<i64: 1, 1, 24, 128>}]} {
    %c0 = arith.constant 0 : index
    %c0_0 = arith.constant 0 : index
    %c0_1 = arith.constant 0 : index
    %c0_2 = arith.constant 0 : index
    %c0_3 = arith.constant 0 : index
    %0 = vector.load %arg2[%c0, %c0_0, %c0_1, %c0_2, %c0_3] : memref<1x4x1x30x128xbf16, #tpu.memory_space<vmem>>, vector<1x1x1x24x128xbf16>
    %1 = vector.shape_cast %0 : vector<1x1x1x24x128xbf16> to vector<24x128xbf16>
    %c0_4 = arith.constant 0 : index
    %c0_5 = arith.constant 0 : index
    %c0_6 = arith.constant 0 : index
    %2 = vector.load %arg3[%c0_4, %c0_5, %c0_6] : memref<9x128x128xbf16, #tpu.memory_space<vmem>>, vector<1x128x128xbf16>
    %3 = vector.shape_cast %2 : vector<1x128x128xbf16> to vector<128x128xbf16>
    %cst = arith.constant dense<0.000000e+00> : vector<24x128xf32>
    %4 = tpu.matmul %1, %3, %cst {dimension_numbers = #tpu.dot_dimension_numbers<[1], [0], [0], [1], [0, 0, 1, 1], [], []>} : vector<24x128xbf16>, vector<128x128xbf16>, vector<24x128xf32> -> vector<24x128xf32>
    %c0_7 = arith.constant 0 : index
    %c0_8 = arith.constant 0 : index
    %5 = vector.load %arg6[%c0_7, %c0_8] : memref<24x128xf32, #tpu.memory_space<vmem>>, vector<24x128xf32>
    tpu.vector_store %arg6[%c0_7, %c0_8], %4 {strides = array<i32>} : memref<24x128xf32, #tpu.memory_space<vmem>>, vector<24x128xf32>,
    %c0_9 = arith.constant 0 : index
    %c1 = arith.constant 1 : index
    %c0_10 = arith.constant 0 : index
    %c0_11 = arith.constant 0 : index
    %c0_12 = arith.constant 0 : index
    %6 = vector.load %arg2[%c0_9, %c1, %c0_10, %c0_11, %c0_12] : memref<1x4x1x30x128xbf16, #tpu.memory_space<vmem>>, vector<1x1x1x24x128xbf16>
    %7 = vector.shape_cast %6 : vector<1x1x1x24x128xbf16> to vector<24x128xbf16>
    %c1_13 = arith.constant 1 : index
    %c0_14 = arith.constant 0 : index
    %c0_15 = arith.constant 0 : index
    %8 = vector.load %arg3[%c1_13, %c0_14, %c0_15] : memref<9x128x128xbf16, #tpu.memory_space<vmem>>, vector<1x128x128xbf16>
    %9 = vector.shape_cast %8 : vector<1x128x128xbf16> to vector<128x128xbf16>
    %cst_16 = arith.constant dense<0.000000e+00> : vector<24x128xf32>
    %10 = tpu.matmul %7, %9, %cst_16 {dimension_numbers = #tpu.dot_dimension_numbers<[1], [0], [0], [1], [0, 0, 1, 1], [], []>} : vector<24x128xbf16>, vector<128x128xbf16>, vector<24x128xf32> -> vector<24x128xf32>
    %c0_17 = arith.constant 0 : index
    %c0_18 = arith.constant 0 : index
    %11 = vector.load %arg6[%c0_17, %c0_18] : memref<24x128xf32, #tpu.memory_space<vmem>>, vector<24x128xf32>
    %12 = arith.addf %11, %10 : vector<24x128xf32>
    %c0_19 = arith.constant 0 : index
    %c0_20 = arith.constant 0 : index
    %13 = vector.load %arg6[%c0_19, %c0_20] : memref<24x128xf32, #tpu.memory_space<vmem>>, vector<24x128xf32>
    tpu.vector_store %arg6[%c0_19, %c0_20], %12 {strides = array<i32>} : memref<24x128xf32, #tpu.memory_space<vmem>>, vector<24x128xf32>,
    %c0_21 = arith.constant 0 : index
    %c0_22 = arith.constant 0 : index
    %c0_23 = arith.constant 0 : index
    %c1_24 = arith.constant 1 : index
    %c0_25 = arith.constant 0 : index
    %14 = vector.load %arg2[%c0_21, %c0_22, %c0_23, %c1_24, %c0_25] : memref<1x4x1x30x128xbf16, #tpu.memory_space<vmem>>, vector<1x1x1x24x128xbf16>
    %15 = vector.shape_cast %14 : vector<1x1x1x24x128xbf16> to vector<24x128xbf16>
    %c2 = arith.constant 2 : index
    %c0_26 = arith.constant 0 : index
    %c0_27 = arith.constant 0 : index
    %16 = vector.load %arg3[%c2, %c0_26, %c0_27] : memref<9x128x128xbf16, #tpu.memory_space<vmem>>, vector<1x128x128xbf16>
    %17 = vector.shape_cast %16 : vector<1x128x128xbf16> to vector<128x128xbf16>
    %cst_28 = arith.constant dense<0.000000e+00> : vector<24x128xf32>
    %18 = tpu.matmul %15, %17, %cst_28 {dimension_numbers = #tpu.dot_dimension_numbers<[1], [0], [0], [1], [0, 0, 1, 1], [], []>} : vector<24x128xbf16>, vector<128x128xbf16>, vector<24x128xf32> -> vector<24x128xf32>
    %c0_29 = arith.constant 0 : index
    %c0_30 = arith.constant 0 : index
    %19 = vector.load %arg6[%c0_29, %c0_30] : memref<24x128xf32, #tpu.memory_space<vmem>>, vector<24x128xf32>
    %20 = arith.addf %19, %18 : vector<24x128xf32>
    %c0_31 = arith.constant 0 : index
    %c0_32 = arith.constant 0 : index
    %21 = vector.load %arg6[%c0_31, %c0_32] : memref<24x128xf32, #tpu.memory_space<vmem>>, vector<24x128xf32>
    tpu.vector_store %arg6[%c0_31, %c0_32], %20 {strides = array<i32>} : memref<24x128xf32, #tpu.memory_space<vmem>>, vector<24x128xf32>,
    %c0_33 = arith.constant 0 : index
    %c2_34 = arith.constant 2 : index
    %c0_35 = arith.constant 0 : index
    %c0_36 = arith.constant 0 : index
    %c0_37 = arith.constant 0 : index
    %22 = vector.load %arg2[%c0_33, %c2_34, %c0_35, %c0_36, %c0_37] : memref<1x4x1x30x128xbf16, #tpu.memory_space<vmem>>, vector<1x1x1x24x128xbf16>
    %23 = vector.shape_cast %22 : vector<1x1x1x24x128xbf16> to vector<24x128xbf16>
    %c3 = arith.constant 3 : index
    %c0_38 = arith.constant 0 : index
    %c0_39 = arith.constant 0 : index
    %24 = vector.load %arg3[%c3, %c0_38, %c0_39] : memref<9x128x128xbf16, #tpu.memory_space<vmem>>, vector<1x128x128xbf16>
    %25 = vector.shape_cast %24 : vector<1x128x128xbf16> to vector<128x128xbf16>
    %cst_40 = arith.constant dense<0.000000e+00> : vector<24x128xf32>
    %26 = tpu.matmul %23, %25, %cst_40 {dimension_numbers = #tpu.dot_dimension_numbers<[1], [0], [0], [1], [0, 0, 1, 1], [], []>} : vector<24x128xbf16>, vector<128x128xbf16>, vector<24x128xf32> -> vector<24x128xf32>
    %c0_41 = arith.constant 0 : index
    %c0_42 = arith.constant 0 : index
    %27 = vector.load %arg6[%c0_41, %c0_42] : memref<24x128xf32, #tpu.memory_space<vmem>>, vector<24x128xf32>
    %28 = arith.addf %27, %26 : vector<24x128xf32>
    %c0_43 = arith.constant 0 : index
    %c0_44 = arith.constant 0 : index
    %29 = vector.load %arg6[%c0_43, %c0_44] : memref<24x128xf32, #tpu.memory_space<vmem>>, vector<24x128xf32>
    tpu.vector_store %arg6[%c0_43, %c0_44], %28 {strides = array<i32>} : memref<24x128xf32, #tpu.memory_space<vmem>>, vector<24x128xf32>,
    %c0_45 = arith.constant 0 : index
    %c3_46 = arith.constant 3 : index
    %c0_47 = arith.constant 0 : index
    %c0_48 = arith.constant 0 : index
    %c0_49 = arith.constant 0 : index
    %30 = vector.load %arg2[%c0_45, %c3_46, %c0_47, %c0_48, %c0_49] : memref<1x4x1x30x128xbf16, #tpu.memory_space<vmem>>, vector<1x1x1x24x128xbf16>
    %31 = vector.shape_cast %30 : vector<1x1x1x24x128xbf16> to vector<24x128xbf16>
    %c4 = arith.constant 4 : index
    %c0_50 = arith.constant 0 : index
    %c0_51 = arith.constant 0 : index
    %32 = vector.load %arg3[%c4, %c0_50, %c0_51] : memref<9x128x128xbf16, #tpu.memory_space<vmem>>, vector<1x128x128xbf16>
    %33 = vector.shape_cast %32 : vector<1x128x128xbf16> to vector<128x128xbf16>
    %cst_52 = arith.constant dense<0.000000e+00> : vector<24x128xf32>
    %34 = tpu.matmul %31, %33, %cst_52 {dimension_numbers = #tpu.dot_dimension_numbers<[1], [0], [0], [1], [0, 0, 1, 1], [], []>} : vector<24x128xbf16>, vector<128x128xbf16>, vector<24x128xf32> -> vector<24x128xf32>
    %c0_53 = arith.constant 0 : index
    %c0_54 = arith.constant 0 : index
    %35 = vector.load %arg6[%c0_53, %c0_54] : memref<24x128xf32, #tpu.memory_space<vmem>>, vector<24x128xf32>
    %36 = arith.addf %35, %34 : vector<24x128xf32>
    %c0_55 = arith.constant 0 : index
    %c0_56 = arith.constant 0 : index
    %37 = vector.load %arg6[%c0_55, %c0_56] : memref<24x128xf32, #tpu.memory_space<vmem>>, vector<24x128xf32>
    tpu.vector_store %arg6[%c0_55, %c0_56], %36 {strides = array<i32>} : memref<24x128xf32, #tpu.memory_space<vmem>>, vector<24x128xf32>,
    %c0_57 = arith.constant 0 : index
    %c2_58 = arith.constant 2 : index
    %c0_59 = arith.constant 0 : index
    %c1_60 = arith.constant 1 : index
    %c0_61 = arith.constant 0 : index
    %38 = vector.load %arg2[%c0_57, %c2_58, %c0_59, %c1_60, %c0_61] : memref<1x4x1x30x128xbf16, #tpu.memory_space<vmem>>, vector<1x1x1x24x128xbf16>
    %39 = vector.shape_cast %38 : vector<1x1x1x24x128xbf16> to vector<24x128xbf16>
    %c5 = arith.constant 5 : index
    %c0_62 = arith.constant 0 : index
    %c0_63 = arith.constant 0 : index
    %40 = vector.load %arg3[%c5, %c0_62, %c0_63] : memref<9x128x128xbf16, #tpu.memory_space<vmem>>, vector<1x128x128xbf16>
    %41 = vector.shape_cast %40 : vector<1x128x128xbf16> to vector<128x128xbf16>
    %cst_64 = arith.constant dense<0.000000e+00> : vector<24x128xf32>
    %42 = tpu.matmul %39, %41, %cst_64 {dimension_numbers = #tpu.dot_dimension_numbers<[1], [0], [0], [1], [0, 0, 1, 1], [], []>} : vector<24x128xbf16>, vector<128x128xbf16>, vector<24x128xf32> -> vector<24x128xf32>
    %c0_65 = arith.constant 0 : index
    %c0_66 = arith.constant 0 : index
    %43 = vector.load %arg6[%c0_65, %c0_66] : memref<24x128xf32, #tpu.memory_space<vmem>>, vector<24x128xf32>
    %44 = arith.addf %43, %42 : vector<24x128xf32>
    %c0_67 = arith.constant 0 : index
    %c0_68 = arith.constant 0 : index
    %45 = vector.load %arg6[%c0_67, %c0_68] : memref<24x128xf32, #tpu.memory_space<vmem>>, vector<24x128xf32>
    tpu.vector_store %arg6[%c0_67, %c0_68], %44 {strides = array<i32>} : memref<24x128xf32, #tpu.memory_space<vmem>>, vector<24x128xf32>,
    %c0_69 = arith.constant 0 : index
    %c0_70 = arith.constant 0 : index
    %c0_71 = arith.constant 0 : index
    %c5_72 = arith.constant 5 : index
    %c0_73 = arith.constant 0 : index
    %46 = vector.load %arg2[%c0_69, %c0_70, %c0_71, %c5_72, %c0_73] : memref<1x4x1x30x128xbf16, #tpu.memory_space<vmem>>, vector<1x1x1x24x128xbf16>
    %47 = vector.shape_cast %46 : vector<1x1x1x24x128xbf16> to vector<24x128xbf16>
    %c6 = arith.constant 6 : index
    %c0_74 = arith.constant 0 : index
    %c0_75 = arith.constant 0 : index
    %48 = vector.load %arg3[%c6, %c0_74, %c0_75] : memref<9x128x128xbf16, #tpu.memory_space<vmem>>, vector<1x128x128xbf16>
    %49 = vector.shape_cast %48 : vector<1x128x128xbf16> to vector<128x128xbf16>
    %cst_76 = arith.constant dense<0.000000e+00> : vector<24x128xf32>
    %50 = tpu.matmul %47, %49, %cst_76 {dimension_numbers = #tpu.dot_dimension_numbers<[1], [0], [0], [1], [0, 0, 1, 1], [], []>} : vector<24x128xbf16>, vector<128x128xbf16>, vector<24x128xf32> -> vector<24x128xf32>
    %c0_77 = arith.constant 0 : index
    %c0_78 = arith.constant 0 : index
    %51 = vector.load %arg6[%c0_77, %c0_78] : memref<24x128xf32, #tpu.memory_space<vmem>>, vector<24x128xf32>
    %52 = arith.addf %51, %50 : vector<24x128xf32>
    %c0_79 = arith.constant 0 : index
    %c0_80 = arith.constant 0 : index
    %53 = vector.load %arg6[%c0_79, %c0_80] : memref<24x128xf32, #tpu.memory_space<vmem>>, vector<24x128xf32>
    tpu.vector_store %arg6[%c0_79, %c0_80], %52 {strides = array<i32>} : memref<24x128xf32, #tpu.memory_space<vmem>>, vector<24x128xf32>,
    %c0_81 = arith.constant 0 : index
    %c1_82 = arith.constant 1 : index
    %c0_83 = arith.constant 0 : index
    %c5_84 = arith.constant 5 : index
    %c0_85 = arith.constant 0 : index
    %54 = vector.load %arg2[%c0_81, %c1_82, %c0_83, %c5_84, %c0_85] : memref<1x4x1x30x128xbf16, #tpu.memory_space<vmem>>, vector<1x1x1x24x128xbf16>
    %55 = vector.shape_cast %54 : vector<1x1x1x24x128xbf16> to vector<24x128xbf16>
    %c7 = arith.constant 7 : index
    %c0_86 = arith.constant 0 : index
    %c0_87 = arith.constant 0 : index
    %56 = vector.load %arg3[%c7, %c0_86, %c0_87] : memref<9x128x128xbf16, #tpu.memory_space<vmem>>, vector<1x128x128xbf16>
    %57 = vector.shape_cast %56 : vector<1x128x128xbf16> to vector<128x128xbf16>
    %cst_88 = arith.constant dense<0.000000e+00> : vector<24x128xf32>
    %58 = tpu.matmul %55, %57, %cst_88 {dimension_numbers = #tpu.dot_dimension_numbers<[1], [0], [0], [1], [0, 0, 1, 1], [], []>} : vector<24x128xbf16>, vector<128x128xbf16>, vector<24x128xf32> -> vector<24x128xf32>
    %c0_89 = arith.constant 0 : index
    %c0_90 = arith.constant 0 : index
    %59 = vector.load %arg6[%c0_89, %c0_90] : memref<24x128xf32, #tpu.memory_space<vmem>>, vector<24x128xf32>
    %60 = arith.addf %59, %58 : vector<24x128xf32>
    %c0_91 = arith.constant 0 : index
    %c0_92 = arith.constant 0 : index
    %61 = vector.load %arg6[%c0_91, %c0_92] : memref<24x128xf32, #tpu.memory_space<vmem>>, vector<24x128xf32>
    tpu.vector_store %arg6[%c0_91, %c0_92], %60 {strides = array<i32>} : memref<24x128xf32, #tpu.memory_space<vmem>>, vector<24x128xf32>,
    %c0_93 = arith.constant 0 : index
    %c0_94 = arith.constant 0 : index
    %c0_95 = arith.constant 0 : index
    %c6_96 = arith.constant 6 : index
    %c0_97 = arith.constant 0 : index
    %62 = vector.load %arg2[%c0_93, %c0_94, %c0_95, %c6_96, %c0_97] : memref<1x4x1x30x128xbf16, #tpu.memory_space<vmem>>, vector<1x1x1x24x128xbf16>
    %63 = vector.shape_cast %62 : vector<1x1x1x24x128xbf16> to vector<24x128xbf16>
    %c8 = arith.constant 8 : index
    %c0_98 = arith.constant 0 : index
    %c0_99 = arith.constant 0 : index
    %64 = vector.load %arg3[%c8, %c0_98, %c0_99] : memref<9x128x128xbf16, #tpu.memory_space<vmem>>, vector<1x128x128xbf16>
    %65 = vector.shape_cast %64 : vector<1x128x128xbf16> to vector<128x128xbf16>
    %cst_100 = arith.constant dense<0.000000e+00> : vector<24x128xf32>
    %66 = tpu.matmul %63, %65, %cst_100 {dimension_numbers = #tpu.dot_dimension_numbers<[1], [0], [0], [1], [0, 0, 1, 1], [], []>} : vector<24x128xbf16>, vector<128x128xbf16>, vector<24x128xf32> -> vector<24x128xf32>
    %c0_101 = arith.constant 0 : index
    %c0_102 = arith.constant 0 : index
    %67 = vector.load %arg6[%c0_101, %c0_102] : memref<24x128xf32, #tpu.memory_space<vmem>>, vector<24x128xf32>
    %68 = arith.addf %67, %66 : vector<24x128xf32>
    %c0_103 = arith.constant 0 : index
    %c0_104 = arith.constant 0 : index
    %69 = vector.load %arg6[%c0_103, %c0_104] : memref<24x128xf32, #tpu.memory_space<vmem>>, vector<24x128xf32>
    tpu.vector_store %arg6[%c0_103, %c0_104], %68 {strides = array<i32>} : memref<24x128xf32, #tpu.memory_space<vmem>>, vector<24x128xf32>,
    %c0_105 = arith.constant 0 : index
    %c0_106 = arith.constant 0 : index
    %70 = vector.load %arg6[%c0_105, %c0_106] : memref<24x128xf32, #tpu.memory_space<vmem>>, vector<24x128xf32>
    %c0_107 = arith.constant 0 : index
    %c0_108 = arith.constant 0 : index
    %71 = vector.load %arg4[%c0_107, %c0_108] : memref<1x128xf32, #tpu.memory_space<vmem>>, vector<1x128xf32>
    %72 = vector.broadcast %71 : vector<1x128xf32> to vector<24x128xf32>
    %73 = arith.addf %70, %72 : vector<24x128xf32>
    %cst_109 = arith.constant 0.000000e+00 : f32
    %74 = vector.broadcast %cst_109 : f32 to vector<24x128xf32>
    %75 = arith.maximumf %73, %74 : vector<24x128xf32>
    %76 = arith.truncf %75 : vector<24x128xf32> to vector<24x128xbf16>
    %c0_110 = arith.constant 0 : index
    %c0_111 = arith.constant 0 : index
    %c0_112 = arith.constant 0 : index
    %c0_113 = arith.constant 0 : index
    %77 = vector.load %arg5[%c0_110, %c0_111, %c0_112, %c0_113] : memref<1x1x24x128xbf16, #tpu.memory_space<vmem>>, vector<1x1x24x128xbf16>
    %78 = vector.shape_cast %77 : vector<1x1x24x128xbf16> to vector<24x128xbf16>
    %79 = vector.shape_cast %76 : vector<24x128xbf16> to vector<1x1x24x128xbf16>
    tpu.vector_store %arg5[%c0_110, %c0_111, %c0_112, %c0_113], %79 {strides = array<i32>} : memref<1x1x24x128xbf16, #tpu.memory_space<vmem>>, vector<1x1x24x128xbf16>,
    return
  }
  func.func @transform_0(%arg0: i32, %arg1: i32) -> (i32, i32, i32, i32, i32) {
    %c0_i32 = arith.constant 0 : i32
    %c0_i32_0 = arith.constant 0 : i32
    %c0_i32_1 = arith.constant 0 : i32
    %c0_i32_2 = arith.constant 0 : i32
    return %arg0, %c0_i32, %arg1, %c0_i32_0, %c0_i32_1 : i32, i32, i32, i32, i32
  }
  func.func @transform_1(%arg0: i32, %arg1: i32) -> (i32, i32, i32) {
    %c0_i32 = arith.constant 0 : i32
    %c0_i32_0 = arith.constant 0 : i32
    %c0_i32_1 = arith.constant 0 : i32
    %c0_i32_2 = arith.constant 0 : i32
    return %c0_i32, %c0_i32_0, %c0_i32_1 : i32, i32, i32
  }
  func.func @transform_2(%arg0: i32, %arg1: i32) -> (i32, i32) {
    %c0_i32 = arith.constant 0 : i32
    %c0_i32_0 = arith.constant 0 : i32
    %c0_i32_1 = arith.constant 0 : i32
    return %c0_i32, %c0_i32_0 : i32, i32
  }
  func.func @transform_3(%arg0: i32, %arg1: i32) -> (i32, i32, i32, i32) {
    %c0_i32 = arith.constant 0 : i32
    %c0_i32_0 = arith.constant 0 : i32
    %c0_i32_1 = arith.constant 0 : i32
    return %arg0, %arg1, %c0_i32, %c0_i32_0 : i32, i32, i32, i32
  }
}

module attributes {stable_mosaic.version = 11 : i64} {
  func.func @kernel(%arg0: i32, %arg1: i32, %arg2: memref<1x4x1x12x128xbf16, #tpu.memory_space<vmem>>, %arg3: memref<9x128x128xbf16, #tpu.memory_space<vmem>>, %arg4: memref<1x128xf32, #tpu.memory_space<vmem>>, %arg5: memref<1x1x8x128xbf16, #tpu.memory_space<vmem>>, %arg6: memref<8x128xf32, #tpu.memory_space<vmem>>) attributes {dimension_semantics = [#tpu.dimension_semantics<parallel>, #tpu.dimension_semantics<parallel>], iteration_bounds = array<i64: 2, 1>, scalar_prefetch = 0 : i64, scratch_operands = 1 : i64, tpu.core_type = #tpu.core_type<tc>, window_params = [{transform_indices = @transform_0, window_bounds = array<i64: 1, 4, 1, 12, 128>}, {pipeline_mode = #tpu.pipeline_mode<synchronous>, transform_indices = @transform_1, window_bounds = array<i64: 9, 128, 128>}, {pipeline_mode = #tpu.pipeline_mode<synchronous>, transform_indices = @transform_2, window_bounds = array<i64: 1, 128>}, {transform_indices = @transform_3, window_bounds = array<i64: 1, 1, 8, 128>}]} {
    %c0 = arith.constant 0 : index
    %c0_0 = arith.constant 0 : index
    %c0_1 = arith.constant 0 : index
    %c0_2 = arith.constant 0 : index
    %c0_3 = arith.constant 0 : index
    %0 = vector.load %arg2[%c0, %c0_0, %c0_1, %c0_2, %c0_3] : memref<1x4x1x12x128xbf16, #tpu.memory_space<vmem>>, vector<1x1x1x8x128xbf16>
    %1 = vector.shape_cast %0 : vector<1x1x1x8x128xbf16> to vector<8x128xbf16>
    %c0_4 = arith.constant 0 : index
    %c0_5 = arith.constant 0 : index
    %c0_6 = arith.constant 0 : index
    %2 = vector.load %arg3[%c0_4, %c0_5, %c0_6] : memref<9x128x128xbf16, #tpu.memory_space<vmem>>, vector<1x128x128xbf16>
    %3 = vector.shape_cast %2 : vector<1x128x128xbf16> to vector<128x128xbf16>
    %cst = arith.constant dense<0.000000e+00> : vector<8x128xf32>
    %4 = tpu.matmul %1, %3, %cst {dimension_numbers = #tpu.dot_dimension_numbers<[1], [0], [0], [1], [0, 0, 1, 1], [], []>} : vector<8x128xbf16>, vector<128x128xbf16>, vector<8x128xf32> -> vector<8x128xf32>
    %c0_7 = arith.constant 0 : index
    %c0_8 = arith.constant 0 : index
    %5 = vector.load %arg6[%c0_7, %c0_8] : memref<8x128xf32, #tpu.memory_space<vmem>>, vector<8x128xf32>
    tpu.vector_store %arg6[%c0_7, %c0_8], %4 {strides = array<i32>} : memref<8x128xf32, #tpu.memory_space<vmem>>, vector<8x128xf32>,
    %c0_9 = arith.constant 0 : index
    %c1 = arith.constant 1 : index
    %c0_10 = arith.constant 0 : index
    %c0_11 = arith.constant 0 : index
    %c0_12 = arith.constant 0 : index
    %6 = vector.load %arg2[%c0_9, %c1, %c0_10, %c0_11, %c0_12] : memref<1x4x1x12x128xbf16, #tpu.memory_space<vmem>>, vector<1x1x1x8x128xbf16>
    %7 = vector.shape_cast %6 : vector<1x1x1x8x128xbf16> to vector<8x128xbf16>
    %c1_13 = arith.constant 1 : index
    %c0_14 = arith.constant 0 : index
    %c0_15 = arith.constant 0 : index
    %8 = vector.load %arg3[%c1_13, %c0_14, %c0_15] : memref<9x128x128xbf16, #tpu.memory_space<vmem>>, vector<1x128x128xbf16>
    %9 = vector.shape_cast %8 : vector<1x128x128xbf16> to vector<128x128xbf16>
    %cst_16 = arith.constant dense<0.000000e+00> : vector<8x128xf32>
    %10 = tpu.matmul %7, %9, %cst_16 {dimension_numbers = #tpu.dot_dimension_numbers<[1], [0], [0], [1], [0, 0, 1, 1], [], []>} : vector<8x128xbf16>, vector<128x128xbf16>, vector<8x128xf32> -> vector<8x128xf32>
    %c0_17 = arith.constant 0 : index
    %c0_18 = arith.constant 0 : index
    %11 = vector.load %arg6[%c0_17, %c0_18] : memref<8x128xf32, #tpu.memory_space<vmem>>, vector<8x128xf32>
    %12 = arith.addf %11, %10 : vector<8x128xf32>
    %c0_19 = arith.constant 0 : index
    %c0_20 = arith.constant 0 : index
    %13 = vector.load %arg6[%c0_19, %c0_20] : memref<8x128xf32, #tpu.memory_space<vmem>>, vector<8x128xf32>
    tpu.vector_store %arg6[%c0_19, %c0_20], %12 {strides = array<i32>} : memref<8x128xf32, #tpu.memory_space<vmem>>, vector<8x128xf32>,
    %c0_21 = arith.constant 0 : index
    %c0_22 = arith.constant 0 : index
    %c0_23 = arith.constant 0 : index
    %c1_24 = arith.constant 1 : index
    %c0_25 = arith.constant 0 : index
    %14 = vector.load %arg2[%c0_21, %c0_22, %c0_23, %c1_24, %c0_25] : memref<1x4x1x12x128xbf16, #tpu.memory_space<vmem>>, vector<1x1x1x8x128xbf16>
    %15 = vector.shape_cast %14 : vector<1x1x1x8x128xbf16> to vector<8x128xbf16>
    %c2 = arith.constant 2 : index
    %c0_26 = arith.constant 0 : index
    %c0_27 = arith.constant 0 : index
    %16 = vector.load %arg3[%c2, %c0_26, %c0_27] : memref<9x128x128xbf16, #tpu.memory_space<vmem>>, vector<1x128x128xbf16>
    %17 = vector.shape_cast %16 : vector<1x128x128xbf16> to vector<128x128xbf16>
    %cst_28 = arith.constant dense<0.000000e+00> : vector<8x128xf32>
    %18 = tpu.matmul %15, %17, %cst_28 {dimension_numbers = #tpu.dot_dimension_numbers<[1], [0], [0], [1], [0, 0, 1, 1], [], []>} : vector<8x128xbf16>, vector<128x128xbf16>, vector<8x128xf32> -> vector<8x128xf32>
    %c0_29 = arith.constant 0 : index
    %c0_30 = arith.constant 0 : index
    %19 = vector.load %arg6[%c0_29, %c0_30] : memref<8x128xf32, #tpu.memory_space<vmem>>, vector<8x128xf32>
    %20 = arith.addf %19, %18 : vector<8x128xf32>
    %c0_31 = arith.constant 0 : index
    %c0_32 = arith.constant 0 : index
    %21 = vector.load %arg6[%c0_31, %c0_32] : memref<8x128xf32, #tpu.memory_space<vmem>>, vector<8x128xf32>
    tpu.vector_store %arg6[%c0_31, %c0_32], %20 {strides = array<i32>} : memref<8x128xf32, #tpu.memory_space<vmem>>, vector<8x128xf32>,
    %c0_33 = arith.constant 0 : index
    %c2_34 = arith.constant 2 : index
    %c0_35 = arith.constant 0 : index
    %c0_36 = arith.constant 0 : index
    %c0_37 = arith.constant 0 : index
    %22 = vector.load %arg2[%c0_33, %c2_34, %c0_35, %c0_36, %c0_37] : memref<1x4x1x12x128xbf16, #tpu.memory_space<vmem>>, vector<1x1x1x8x128xbf16>
    %23 = vector.shape_cast %22 : vector<1x1x1x8x128xbf16> to vector<8x128xbf16>
    %c3 = arith.constant 3 : index
    %c0_38 = arith.constant 0 : index
    %c0_39 = arith.constant 0 : index
    %24 = vector.load %arg3[%c3, %c0_38, %c0_39] : memref<9x128x128xbf16, #tpu.memory_space<vmem>>, vector<1x128x128xbf16>
    %25 = vector.shape_cast %24 : vector<1x128x128xbf16> to vector<128x128xbf16>
    %cst_40 = arith.constant dense<0.000000e+00> : vector<8x128xf32>
    %26 = tpu.matmul %23, %25, %cst_40 {dimension_numbers = #tpu.dot_dimension_numbers<[1], [0], [0], [1], [0, 0, 1, 1], [], []>} : vector<8x128xbf16>, vector<128x128xbf16>, vector<8x128xf32> -> vector<8x128xf32>
    %c0_41 = arith.constant 0 : index
    %c0_42 = arith.constant 0 : index
    %27 = vector.load %arg6[%c0_41, %c0_42] : memref<8x128xf32, #tpu.memory_space<vmem>>, vector<8x128xf32>
    %28 = arith.addf %27, %26 : vector<8x128xf32>
    %c0_43 = arith.constant 0 : index
    %c0_44 = arith.constant 0 : index
    %29 = vector.load %arg6[%c0_43, %c0_44] : memref<8x128xf32, #tpu.memory_space<vmem>>, vector<8x128xf32>
    tpu.vector_store %arg6[%c0_43, %c0_44], %28 {strides = array<i32>} : memref<8x128xf32, #tpu.memory_space<vmem>>, vector<8x128xf32>,
    %c0_45 = arith.constant 0 : index
    %c3_46 = arith.constant 3 : index
    %c0_47 = arith.constant 0 : index
    %c0_48 = arith.constant 0 : index
    %c0_49 = arith.constant 0 : index
    %30 = vector.load %arg2[%c0_45, %c3_46, %c0_47, %c0_48, %c0_49] : memref<1x4x1x12x128xbf16, #tpu.memory_space<vmem>>, vector<1x1x1x8x128xbf16>
    %31 = vector.shape_cast %30 : vector<1x1x1x8x128xbf16> to vector<8x128xbf16>
    %c4 = arith.constant 4 : index
    %c0_50 = arith.constant 0 : index
    %c0_51 = arith.constant 0 : index
    %32 = vector.load %arg3[%c4, %c0_50, %c0_51] : memref<9x128x128xbf16, #tpu.memory_space<vmem>>, vector<1x128x128xbf16>
    %33 = vector.shape_cast %32 : vector<1x128x128xbf16> to vector<128x128xbf16>
    %cst_52 = arith.constant dense<0.000000e+00> : vector<8x128xf32>
    %34 = tpu.matmul %31, %33, %cst_52 {dimension_numbers = #tpu.dot_dimension_numbers<[1], [0], [0], [1], [0, 0, 1, 1], [], []>} : vector<8x128xbf16>, vector<128x128xbf16>, vector<8x128xf32> -> vector<8x128xf32>
    %c0_53 = arith.constant 0 : index
    %c0_54 = arith.constant 0 : index
    %35 = vector.load %arg6[%c0_53, %c0_54] : memref<8x128xf32, #tpu.memory_space<vmem>>, vector<8x128xf32>
    %36 = arith.addf %35, %34 : vector<8x128xf32>
    %c0_55 = arith.constant 0 : index
    %c0_56 = arith.constant 0 : index
    %37 = vector.load %arg6[%c0_55, %c0_56] : memref<8x128xf32, #tpu.memory_space<vmem>>, vector<8x128xf32>
    tpu.vector_store %arg6[%c0_55, %c0_56], %36 {strides = array<i32>} : memref<8x128xf32, #tpu.memory_space<vmem>>, vector<8x128xf32>,
    %c0_57 = arith.constant 0 : index
    %c2_58 = arith.constant 2 : index
    %c0_59 = arith.constant 0 : index
    %c1_60 = arith.constant 1 : index
    %c0_61 = arith.constant 0 : index
    %38 = vector.load %arg2[%c0_57, %c2_58, %c0_59, %c1_60, %c0_61] : memref<1x4x1x12x128xbf16, #tpu.memory_space<vmem>>, vector<1x1x1x8x128xbf16>
    %39 = vector.shape_cast %38 : vector<1x1x1x8x128xbf16> to vector<8x128xbf16>
    %c5 = arith.constant 5 : index
    %c0_62 = arith.constant 0 : index
    %c0_63 = arith.constant 0 : index
    %40 = vector.load %arg3[%c5, %c0_62, %c0_63] : memref<9x128x128xbf16, #tpu.memory_space<vmem>>, vector<1x128x128xbf16>
    %41 = vector.shape_cast %40 : vector<1x128x128xbf16> to vector<128x128xbf16>
    %cst_64 = arith.constant dense<0.000000e+00> : vector<8x128xf32>
    %42 = tpu.matmul %39, %41, %cst_64 {dimension_numbers = #tpu.dot_dimension_numbers<[1], [0], [0], [1], [0, 0, 1, 1], [], []>} : vector<8x128xbf16>, vector<128x128xbf16>, vector<8x128xf32> -> vector<8x128xf32>
    %c0_65 = arith.constant 0 : index
    %c0_66 = arith.constant 0 : index
    %43 = vector.load %arg6[%c0_65, %c0_66] : memref<8x128xf32, #tpu.memory_space<vmem>>, vector<8x128xf32>
    %44 = arith.addf %43, %42 : vector<8x128xf32>
    %c0_67 = arith.constant 0 : index
    %c0_68 = arith.constant 0 : index
    %45 = vector.load %arg6[%c0_67, %c0_68] : memref<8x128xf32, #tpu.memory_space<vmem>>, vector<8x128xf32>
    tpu.vector_store %arg6[%c0_67, %c0_68], %44 {strides = array<i32>} : memref<8x128xf32, #tpu.memory_space<vmem>>, vector<8x128xf32>,
    %c0_69 = arith.constant 0 : index
    %c0_70 = arith.constant 0 : index
    %c0_71 = arith.constant 0 : index
    %c3_72 = arith.constant 3 : index
    %c0_73 = arith.constant 0 : index
    %46 = vector.load %arg2[%c0_69, %c0_70, %c0_71, %c3_72, %c0_73] : memref<1x4x1x12x128xbf16, #tpu.memory_space<vmem>>, vector<1x1x1x8x128xbf16>
    %47 = vector.shape_cast %46 : vector<1x1x1x8x128xbf16> to vector<8x128xbf16>
    %c6 = arith.constant 6 : index
    %c0_74 = arith.constant 0 : index
    %c0_75 = arith.constant 0 : index
    %48 = vector.load %arg3[%c6, %c0_74, %c0_75] : memref<9x128x128xbf16, #tpu.memory_space<vmem>>, vector<1x128x128xbf16>
    %49 = vector.shape_cast %48 : vector<1x128x128xbf16> to vector<128x128xbf16>
    %cst_76 = arith.constant dense<0.000000e+00> : vector<8x128xf32>
    %50 = tpu.matmul %47, %49, %cst_76 {dimension_numbers = #tpu.dot_dimension_numbers<[1], [0], [0], [1], [0, 0, 1, 1], [], []>} : vector<8x128xbf16>, vector<128x128xbf16>, vector<8x128xf32> -> vector<8x128xf32>
    %c0_77 = arith.constant 0 : index
    %c0_78 = arith.constant 0 : index
    %51 = vector.load %arg6[%c0_77, %c0_78] : memref<8x128xf32, #tpu.memory_space<vmem>>, vector<8x128xf32>
    %52 = arith.addf %51, %50 : vector<8x128xf32>
    %c0_79 = arith.constant 0 : index
    %c0_80 = arith.constant 0 : index
    %53 = vector.load %arg6[%c0_79, %c0_80] : memref<8x128xf32, #tpu.memory_space<vmem>>, vector<8x128xf32>
    tpu.vector_store %arg6[%c0_79, %c0_80], %52 {strides = array<i32>} : memref<8x128xf32, #tpu.memory_space<vmem>>, vector<8x128xf32>,
    %c0_81 = arith.constant 0 : index
    %c1_82 = arith.constant 1 : index
    %c0_83 = arith.constant 0 : index
    %c3_84 = arith.constant 3 : index
    %c0_85 = arith.constant 0 : index
    %54 = vector.load %arg2[%c0_81, %c1_82, %c0_83, %c3_84, %c0_85] : memref<1x4x1x12x128xbf16, #tpu.memory_space<vmem>>, vector<1x1x1x8x128xbf16>
    %55 = vector.shape_cast %54 : vector<1x1x1x8x128xbf16> to vector<8x128xbf16>
    %c7 = arith.constant 7 : index
    %c0_86 = arith.constant 0 : index
    %c0_87 = arith.constant 0 : index
    %56 = vector.load %arg3[%c7, %c0_86, %c0_87] : memref<9x128x128xbf16, #tpu.memory_space<vmem>>, vector<1x128x128xbf16>
    %57 = vector.shape_cast %56 : vector<1x128x128xbf16> to vector<128x128xbf16>
    %cst_88 = arith.constant dense<0.000000e+00> : vector<8x128xf32>
    %58 = tpu.matmul %55, %57, %cst_88 {dimension_numbers = #tpu.dot_dimension_numbers<[1], [0], [0], [1], [0, 0, 1, 1], [], []>} : vector<8x128xbf16>, vector<128x128xbf16>, vector<8x128xf32> -> vector<8x128xf32>
    %c0_89 = arith.constant 0 : index
    %c0_90 = arith.constant 0 : index
    %59 = vector.load %arg6[%c0_89, %c0_90] : memref<8x128xf32, #tpu.memory_space<vmem>>, vector<8x128xf32>
    %60 = arith.addf %59, %58 : vector<8x128xf32>
    %c0_91 = arith.constant 0 : index
    %c0_92 = arith.constant 0 : index
    %61 = vector.load %arg6[%c0_91, %c0_92] : memref<8x128xf32, #tpu.memory_space<vmem>>, vector<8x128xf32>
    tpu.vector_store %arg6[%c0_91, %c0_92], %60 {strides = array<i32>} : memref<8x128xf32, #tpu.memory_space<vmem>>, vector<8x128xf32>,
    %c0_93 = arith.constant 0 : index
    %c0_94 = arith.constant 0 : index
    %c0_95 = arith.constant 0 : index
    %c4_96 = arith.constant 4 : index
    %c0_97 = arith.constant 0 : index
    %62 = vector.load %arg2[%c0_93, %c0_94, %c0_95, %c4_96, %c0_97] : memref<1x4x1x12x128xbf16, #tpu.memory_space<vmem>>, vector<1x1x1x8x128xbf16>
    %63 = vector.shape_cast %62 : vector<1x1x1x8x128xbf16> to vector<8x128xbf16>
    %c8 = arith.constant 8 : index
    %c0_98 = arith.constant 0 : index
    %c0_99 = arith.constant 0 : index
    %64 = vector.load %arg3[%c8, %c0_98, %c0_99] : memref<9x128x128xbf16, #tpu.memory_space<vmem>>, vector<1x128x128xbf16>
    %65 = vector.shape_cast %64 : vector<1x128x128xbf16> to vector<128x128xbf16>
    %cst_100 = arith.constant dense<0.000000e+00> : vector<8x128xf32>
    %66 = tpu.matmul %63, %65, %cst_100 {dimension_numbers = #tpu.dot_dimension_numbers<[1], [0], [0], [1], [0, 0, 1, 1], [], []>} : vector<8x128xbf16>, vector<128x128xbf16>, vector<8x128xf32> -> vector<8x128xf32>
    %c0_101 = arith.constant 0 : index
    %c0_102 = arith.constant 0 : index
    %67 = vector.load %arg6[%c0_101, %c0_102] : memref<8x128xf32, #tpu.memory_space<vmem>>, vector<8x128xf32>
    %68 = arith.addf %67, %66 : vector<8x128xf32>
    %c0_103 = arith.constant 0 : index
    %c0_104 = arith.constant 0 : index
    %69 = vector.load %arg6[%c0_103, %c0_104] : memref<8x128xf32, #tpu.memory_space<vmem>>, vector<8x128xf32>
    tpu.vector_store %arg6[%c0_103, %c0_104], %68 {strides = array<i32>} : memref<8x128xf32, #tpu.memory_space<vmem>>, vector<8x128xf32>,
    %c0_105 = arith.constant 0 : index
    %c0_106 = arith.constant 0 : index
    %70 = vector.load %arg6[%c0_105, %c0_106] : memref<8x128xf32, #tpu.memory_space<vmem>>, vector<8x128xf32>
    %c0_107 = arith.constant 0 : index
    %c0_108 = arith.constant 0 : index
    %71 = vector.load %arg4[%c0_107, %c0_108] : memref<1x128xf32, #tpu.memory_space<vmem>>, vector<1x128xf32>
    %72 = vector.broadcast %71 : vector<1x128xf32> to vector<8x128xf32>
    %73 = arith.addf %70, %72 : vector<8x128xf32>
    %cst_109 = arith.constant 0.000000e+00 : f32
    %74 = vector.broadcast %cst_109 : f32 to vector<8x128xf32>
    %75 = arith.maximumf %73, %74 : vector<8x128xf32>
    %76 = arith.truncf %75 : vector<8x128xf32> to vector<8x128xbf16>
    %c0_110 = arith.constant 0 : index
    %c0_111 = arith.constant 0 : index
    %c0_112 = arith.constant 0 : index
    %c0_113 = arith.constant 0 : index
    %77 = vector.load %arg5[%c0_110, %c0_111, %c0_112, %c0_113] : memref<1x1x8x128xbf16, #tpu.memory_space<vmem>>, vector<1x1x8x128xbf16>
    %78 = vector.shape_cast %77 : vector<1x1x8x128xbf16> to vector<8x128xbf16>
    %79 = vector.shape_cast %76 : vector<8x128xbf16> to vector<1x1x8x128xbf16>
    tpu.vector_store %arg5[%c0_110, %c0_111, %c0_112, %c0_113], %79 {strides = array<i32>} : memref<1x1x8x128xbf16, #tpu.memory_space<vmem>>, vector<1x1x8x128xbf16>,
    return
  }
  func.func @transform_0(%arg0: i32, %arg1: i32) -> (i32, i32, i32, i32, i32) {
    %c0_i32 = arith.constant 0 : i32
    %c0_i32_0 = arith.constant 0 : i32
    %c0_i32_1 = arith.constant 0 : i32
    %c0_i32_2 = arith.constant 0 : i32
    return %arg0, %c0_i32, %arg1, %c0_i32_0, %c0_i32_1 : i32, i32, i32, i32, i32
  }
  func.func @transform_1(%arg0: i32, %arg1: i32) -> (i32, i32, i32) {
    %c0_i32 = arith.constant 0 : i32
    %c0_i32_0 = arith.constant 0 : i32
    %c0_i32_1 = arith.constant 0 : i32
    %c0_i32_2 = arith.constant 0 : i32
    return %c0_i32, %c0_i32_0, %c0_i32_1 : i32, i32, i32
  }
  func.func @transform_2(%arg0: i32, %arg1: i32) -> (i32, i32) {
    %c0_i32 = arith.constant 0 : i32
    %c0_i32_0 = arith.constant 0 : i32
    %c0_i32_1 = arith.constant 0 : i32
    return %c0_i32, %c0_i32_0 : i32, i32
  }
  func.func @transform_3(%arg0: i32, %arg1: i32) -> (i32, i32, i32, i32) {
    %c0_i32 = arith.constant 0 : i32
    %c0_i32_0 = arith.constant 0 : i32
    %c0_i32_1 = arith.constant 0 : i32
    return %arg0, %arg1, %c0_i32, %c0_i32_0 : i32, i32, i32, i32
  }
}

</mosaic_0001>

<llo_original>
// kernel: _lambda_.4
$region0: #{_lambda_.4}
  #allocation0 [shape = 'u32[]', space=smem, size = 0x4, offset = 0x4, fixed_abs, tag = 'smem constant byte address 0x4 - core index']
  #allocation1 [shape = 'u32[72,128]{1,0:T(1,128)}', space=vmem, size = 0x9000, scoped, tag = 'internal scratch']
  #allocation2 [shape = 'f32[128,128]{1,0:T(8,128)}', space=vmem, size = 0x10000, scoped, tag = 'scratch operand']
  %s0 = inlined_call_operand.vmem [shape: bf16[2,1,2,128,36], index: 0, kind: input, shape index: {}]
  %s1 = inlined_call_operand.vmem [shape: bf16[1,36,128], index: 1, kind: input, shape index: {}]
  %s2 = inlined_call_operand.vmem [shape: f32[1,128], index: 2, kind: input, shape index: {}]
  %s3 = inlined_call_operand.vmem [shape: bf16[2,2,128,128], index: 3, kind: output, shape index: {}]
  %s4 = sld [smem:[#allocation0]]
  $region45: #{_lambda_.4} parent=0
    _
  %s6 = ssub.s32 1, %s4
  %s7 = scalar_select 0, %s6, %s4
  loop: start=0, step=1, limit=6
  $region2: #{_lambda_.4} parent=0 // loop_pre_header
    _
  $region3: #{_lambda_.4} parent=0 // loop_header
    %s9 = sphi 0, %s13
    %p10 = scmp.ge.s32.totalorder %s9, 6
    %s16 = sphi 0, %s28
    %s17 = sphi 0, %s24
    %s18 = sphi 0, %s16
    %s19 = sphi 0, %s17
    %s20 = sphi 0, %s18
    %s21 = sphi 0, %s19
    %s33 = sphi 0, %s35
    %s36 = sphi 0, %s33
    %s37 = sphi 0, %s36
    %s53 = sphi 0, %s37
    %s57 = sphi 0, %s57
    %s59 = sphi 0, %s57
    %s60 = sphi 0, %s59
    %s74 = sphi 0, %s60
    %s78 = sphi 0, %s78
    %s80 = sphi 0, %s78
    %s81 = sphi 0, %s80
    %s95 = sphi 0, %s81
    %s103 = sphi 0, %s105
    %s106 = sphi 0, %s103
    %s107 = sphi 0, %s106
    %s123 = sphi 0, %s107
  $region4: #{_lambda_.4} parent=0 // loop_header_branch
    %12 = sbr.rel (%p10) target = $region8
  $region5: #{_lambda_.4} parent=0 // loop_body
    %s14 = ssub.s32 %s9, 1
    %s15 = ssub.s32 %s9, 2
    %s22 = sadd.s32 1, %s17
    %p23 = scmp.ge.s32.totalorder %s22, 2
    %s24 = scalar_select %p23, 0, %s22
    %s25 = sadd.s32 1, %s16
    %s26 = scalar_select %p23, %s25, %s16
    %p27 = scmp.ge.s32.totalorder %s26, 2
    %s28 = scalar_select %p27, 0, %s26
    %s29 = ssub.s32 %s16, %s28
    %s30 = ssub.s32 %s17, %s24
    %s31 = sor.u32 %s29, %s30
    %p32 = scmp.eq.s32.totalorder %s31, 0
    %s34 = sadd.s32 %s33, 1
    %s35 = scalar_select %p32, %s33, %s34
    %p38 = pneg %p32
    %p39 = scmp.eq.s32.totalorder %s9, 3
    %p40 = por %p38, %p39
    %p41 = scmp.ne.s32.totalorder %s33, %s36
    %p42 = scmp.eq.s32.totalorder %s9, 0
    %p43 = por %p41, %p42
    %p44 = scmp.ne.s32.totalorder %s33, %s36
    %p45 = scmp.eq.s32.totalorder %s14, 3
    %p46 = por %p44, %p45
    %p47 = scmp.ne.s32.totalorder %s36, %s37
    %p48 = scmp.eq.s32.totalorder %s14, 0
    %p49 = por %p47, %p48
    %p50 = scmp.ne.s32.totalorder %s36, %s37
    %p51 = scmp.eq.s32.totalorder %s15, 3
    %p52 = por %p50, %p51
    %p54 = scmp.ne.s32.totalorder %s37, %s53
    %p55 = scmp.eq.s32.totalorder %s15, 0
    %p56 = por %p54, %p55
    %s58 = sadd.s32 %s57, 1
    %p61 = scmp.eq.s32.totalorder %s9, 3
    %p62 = scmp.ne.s32.totalorder %s57, %s59
    %p63 = scmp.eq.s32.totalorder %s9, 0
    %p64 = por %p62, %p63
    %p65 = scmp.ne.s32.totalorder %s57, %s59
    %p66 = scmp.eq.s32.totalorder %s14, 3
    %p67 = por %p65, %p66
    %p68 = scmp.ne.s32.totalorder %s59, %s60
    %p69 = scmp.eq.s32.totalorder %s14, 0
    %p70 = por %p68, %p69
    %p71 = scmp.ne.s32.totalorder %s59, %s60
    %p72 = scmp.eq.s32.totalorder %s15, 3
    %p73 = por %p71, %p72
    %p75 = scmp.ne.s32.totalorder %s60, %s74
    %p76 = scmp.eq.s32.totalorder %s15, 0
    %p77 = por %p75, %p76
    %s79 = sadd.s32 %s78, 1
    %p82 = scmp.eq.s32.totalorder %s9, 3
    %p83 = scmp.ne.s32.totalorder %s78, %s80
    %p84 = scmp.eq.s32.totalorder %s9, 0
    %p85 = por %p83, %p84
    %p86 = scmp.ne.s32.totalorder %s78, %s80
    %p87 = scmp.eq.s32.totalorder %s14, 3
    %p88 = por %p86, %p87
    %p89 = scmp.ne.s32.totalorder %s80, %s81
    %p90 = scmp.eq.s32.totalorder %s14, 0
    %p91 = por %p89, %p90
    %p92 = scmp.ne.s32.totalorder %s80, %s81
    %p93 = scmp.eq.s32.totalorder %s15, 3
    %p94 = por %p92, %p93
    %p96 = scmp.ne.s32.totalorder %s81, %s95
    %p97 = scmp.eq.s32.totalorder %s15, 0
    %p98 = por %p96, %p97
    %s99 = ssub.s32 %s16, %s28
    %s100 = ssub.s32 %s17, %s24
    %s101 = sor.u32 %s99, %s100
    %p102 = scmp.eq.s32.totalorder %s101, 0
    %s104 = sadd.s32 %s103, 1
    %s105 = scalar_select %p102, %s103, %s104
    %p108 = pneg %p102
    %p109 = scmp.eq.s32.totalorder %s9, 3
    %p110 = por %p108, %p109
    %p111 = scmp.ne.s32.totalorder %s103, %s106
    %p112 = scmp.eq.s32.totalorder %s9, 0
    %p113 = por %p111, %p112
    %p114 = scmp.ne.s32.totalorder %s103, %s106
    %p115 = scmp.eq.s32.totalorder %s14, 3
    %p116 = por %p114, %p115
    %p117 = scmp.ne.s32.totalorder %s106, %s107
    %p118 = scmp.eq.s32.totalorder %s14, 0
    %p119 = por %p117, %p118
    %p120 = scmp.ne.s32.totalorder %s106, %s107
    %p121 = scmp.eq.s32.totalorder %s15, 3
    %p122 = por %p120, %p121
    %p124 = scmp.ne.s32.totalorder %s107, %s123
    %p125 = scmp.eq.s32.totalorder %s15, 0
    %p126 = por %p124, %p125
    %p127 = scmp.le.s32.totalorder 1, %s9
    %p128 = scmp.lt.s32.totalorder %s9, 5
    %p129 = pnand %p127, %p128
    %p130 = pneg %p129
    // Predicated region
    $region9: #{_lambda_.4} parent=5 // pred_check
      _
    $region10: #{_lambda_.4} parent=5 // pred_check_branch
      %132 = sbr.rel (%p129) target = $region12
    $region11: #{_lambda_.4} parent=5 // pred_region
      %s133 = ssub.s32 %s9, 1
      // Predicated region
      $region13: #{_lambda_.4} parent=11 // pred_check
        %p134 = pneg %p70
      $region14: #{_lambda_.4} parent=11 // pred_check_branch
        %136 = sbr.rel (%p134) target = $region16
      $region15: #{_lambda_.4} parent=11 // pred_region
        _
      $region16: #{_lambda_.4} parent=11 // pred_fallthru
        _
      // Predicated region
      $region17: #{_lambda_.4} parent=11 // pred_check
        %p137 = pneg %p91
      $region18: #{_lambda_.4} parent=11 // pred_check_branch
        %139 = sbr.rel (%p137) target = $region20
      $region19: #{_lambda_.4} parent=11 // pred_region
        _
      $region20: #{_lambda_.4} parent=11 // pred_fallthru
        _
    $region12: #{_lambda_.4} parent=5 // pred_fallthru
      _
    %p140 = scmp.lt.s32.totalorder %s9, 4
    // Predicated region
    $region21: #{_lambda_.4} parent=5 // pred_check
      %p141 = pneg %p140
    $region22: #{_lambda_.4} parent=5 // pred_check_branch
      %143 = sbr.rel (%p141) target = $region24
    $region23: #{_lambda_.4} parent=5 // pred_region
      // Predicated region
      $region25: #{_lambda_.4} parent=23 // pred_check
        %p144 = pneg %p43
      $region26: #{_lambda_.4} parent=23 // pred_check_branch
        %146 = sbr.rel (%p144) target = $region28
      $region27: #{_lambda_.4} parent=23 // pred_region
        %p147 = scmp.lt.s32.totalorder %s16, 1
        %s148 = scalar_select %p147, %s16, 1
        %p149 = scmp.lt.s32.totalorder %s17, 1
        %s150 = scalar_select %p149, %s17, 1
        %s151 = smul.addr %s150, 16
        %s152 = smul.addr %s148, 32
        %s153 = sadd.s32 %s151, %s152
        %s154 = smul.addr %s153, 4
        %s155 = scalar_lea.vmem %s0, %s154
      $region28: #{_lambda_.4} parent=23 // pred_fallthru
        _
    $region24: #{_lambda_.4} parent=5 // pred_fallthru
      _
    %p156 = scmp.le.s32.totalorder 1, %s9
    %p157 = scmp.lt.s32.totalorder %s9, 5
    %p158 = pnand %p156, %p157
    %p159 = pneg %p158
    // Predicated region
    $region29: #{_lambda_.4} parent=5 // pred_check
      _
    $region30: #{_lambda_.4} parent=5 // pred_check_branch
      %161 = sbr.rel (%p158) target = $region32
    $region31: #{_lambda_.4} parent=5 // pred_region
      %s162 = ssub.s32 %s9, 1
      %p163 = scmp.lt.s32.totalorder %s18, 1
      %s164 = scalar_select %p163, %s18, 1
      %p165 = scmp.lt.s32.totalorder %s19, 1
      %s166 = scalar_select %p165, %s19, 1
      %s167 = smul.addr %s166, 16
      %s168 = smul.addr %s164, 32
      %s169 = sadd.s32 %s167, %s168
      %s170 = smul.addr %s169, 4
      %s171 = scalar_lea.vmem %s0, %s170
      %p172 = pneg %p49
      %p173 = pneg %p46
      %p174 = pneg %p70
      %p175 = pneg %p67
      %p176 = pneg %p91
      %p177 = pneg %p88
      %p178 = pneg %p119
      %p179 = pneg %p116
      %p180 = scmp.lt.s32.totalorder %s18, 1
      %s181 = scalar_select %p180, %s18, 1
      %p182 = scmp.lt.s32.totalorder %s19, 1
      %s183 = scalar_select %p182, %s19, 1
      %s184 = smul.addr %s183, 16
      %s185 = smul.addr %s181, 32
      %s186 = sadd.s32 %s184, %s185
      %s187 = smul.addr %s186, 4
      %s188 = scalar_lea.vmem %s3, %s187
      %p189 = scmp.lt.s32.totalorder %s18, 1
      %s190 = scalar_select %p189, %s18, 1
      %p191 = scmp.lt.s32.totalorder %s19, 1
      %s192 = scalar_select %p191, %s19, 1
      %s193 = smul.addr %s192, 16
      %s194 = smul.addr %s190, 32
      %s195 = sadd.s32 %s193, %s194
      %s196 = smul.addr %s195, 4
      %s197 = scalar_lea.vmem %s0, %s196
      %p198 = scmp.lt.s32.totalorder %s18, 1
      %s199 = scalar_select %p198, %s18, 1
      %p200 = scmp.lt.s32.totalorder %s19, 1
      %s201 = scalar_select %p200, %s19, 1
      %s202 = smul.addr %s201, 16
      %s203 = smul.addr %s199, 32
      %s204 = sadd.s32 %s202, %s203
      %s205 = smul.addr %s204, 4
      %s206 = scalar_lea.vmem %s3, %s205
      %v208 = vld [vmem:[%s197] sm:$0xf]
      %v209 = vld [vmem:[%s197 + $0x4] sm:$0xf]
      %v210 = vld [vmem:[%s197 + $0x8] sm:$0xf]
      %v211 = vld [vmem:[%s197 + $0xc] sm:$0xf]
      %v212 = vld [vmem:[%s197 + $0x10] sm:$0xf]
      %v213 = vld [vmem:[%s197 + $0x14] sm:$0xf]
      %v214 = vld [vmem:[%s197 + $0x18] sm:$0xf]
      %v215 = vld [vmem:[%s197 + $0x1c] sm:$0xf]
      %v216 = vld [vmem:[%s197 + $0x20] sm:$0xf]
      %v217 = vld [vmem:[%s197 + $0x24] sm:$0xf]
      %v218 = vld [vmem:[%s197 + $0x28] sm:$0xf]
      %v219 = vld [vmem:[%s197 + $0x2c] sm:$0xf]
      %v220 = vld [vmem:[%s197 + $0x30] sm:$0xf]
      %v221 = vld [vmem:[%s197 + $0x34] sm:$0xf]
      %v222 = vld [vmem:[%s197 + $0x38] sm:$0xf]
      %v223 = vld [vmem:[%s197 + $0x3c] sm:$0xf]
      %v224 = vld [vmem:[%s1] sm:$0xf]
      %v225 = vld [vmem:[%s1 + $0x4] sm:$0xf]
      %v226 = vld [vmem:[%s1 + $0x8] sm:$0xf]
      %v227 = vld [vmem:[%s1 + $0xc] sm:$0xf]
      %v228 = vld [vmem:[%s1 + $0x10] sm:$0x3]
      %v245 = vunpack.c.l.b16 %v208
      %v246 = vunpack.c.l.b16 %v209
      %v247 = vunpack.c.l.b16 %v210
      %v248 = vunpack.c.l.b16 %v211
      %v249 = vunpack.c.l.b16 %v212
      %v250 = vunpack.c.l.b16 %v213
      %v251 = vunpack.c.l.b16 %v214
      %v252 = vunpack.c.l.b16 %v215
      %v253 = vunpack.c.l.b16 %v216
      %v254 = vunpack.c.l.b16 %v217
      %v255 = vunpack.c.l.b16 %v218
      %v256 = vunpack.c.l.b16 %v219
      %v257 = vunpack.c.l.b16 %v220
      %v258 = vunpack.c.l.b16 %v221
      %v259 = vunpack.c.l.b16 %v222
      %v260 = vunpack.c.l.b16 %v223
      %v261 = vpack.c.b16 %v246, %v245
      %v262 = vpack.c.b16 %v248, %v247
      %v263 = vpack.c.b16 %v250, %v249
      %v264 = vpack.c.b16 %v252, %v251
      %v265 = vpack.c.b16 %v254, %v253
      %v266 = vpack.c.b16 %v256, %v255
      %v267 = vpack.c.b16 %v258, %v257
      %v268 = vpack.c.b16 %v260, %v259
      %v274 = vunpack.c.l.b16 %v224
      %v275 = vunpack.c.l.b16 %v225
      %v276 = vunpack.c.l.b16 %v226
      %v277 = vunpack.c.l.b16 %v227
      %v278 = vunpack.c.l.b16 %v228
      %v279 = vpack.c.b16 %v275, %v274
      %v280 = vpack.c.b16 %v277, %v276
      %v281 = vpack.c.b16 %v278, %v278
      %vm284 = vcmask 293888
      %v286 = vsel %vm284, %v261, 0
      %v289 = vsel %vm284, %v262, 0
      %v292 = vsel %vm284, %v263, 0
      %v295 = vsel %vm284, %v264, 0
      %v298 = vsel %vm284, %v265, 0
      %v301 = vsel %vm284, %v266, 0
      %v304 = vsel %vm284, %v267, 0
      %v307 = vsel %vm284, %v268, 0
      %vm309 = vcmask 1041408
      %v311 = vsel %vm309, %v281, 0
      %313 = vmatpush.bf16.msra.mxu0 0
      %314 = vmatpush.bf16.msra.mxu0 0
      %315 = vmatpush.bf16.msra.mxu0 0
      %316 = vmatpush.bf16.msra.mxu0 0
      %317 = vmatpush.bf16.msra.mxu0 0
      %318 = vmatpush.bf16.msra.mxu0 %v311
      %319 = vmatpush.bf16.msra.mxu0 %v280
      %320 = vmatpush.bf16.msra.mxu0 %v279
      %321 = vmatmul.bf16.gmra.mxu0 %v286
      %v322 = vpop.f32.mrf.mxu0
      %v323 = vadd.f32 0.0, %v322
      %v324 = vpop.f32.mrf.mxu0
      %v325 = vadd.f32 0.0, %v324
      %326 = vmatmul.bf16.gmra.mxu0 %v289
      %v327 = vpop.f32.mrf.mxu0
      %v328 = vadd.f32 0.0, %v327
      %v329 = vpop.f32.mrf.mxu0
      %v330 = vadd.f32 0.0, %v329
      %331 = vmatmul.bf16.gmra.mxu0 %v292
      %v332 = vpop.f32.mrf.mxu0
      %v333 = vadd.f32 0.0, %v332
      %v334 = vpop.f32.mrf.mxu0
      %v335 = vadd.f32 0.0, %v334
      %336 = vmatmul.bf16.gmra.mxu0 %v295
      %v337 = vpop.f32.mrf.mxu0
      %v338 = vadd.f32 0.0, %v337
      %v339 = vpop.f32.mrf.mxu0
      %v340 = vadd.f32 0.0, %v339
      %341 = vmatmul.bf16.gmra.mxu0 %v298
      %v342 = vpop.f32.mrf.mxu0
      %v343 = vadd.f32 0.0, %v342
      %v344 = vpop.f32.mrf.mxu0
      %v345 = vadd.f32 0.0, %v344
      %346 = vmatmul.bf16.gmra.mxu0 %v301
      %v347 = vpop.f32.mrf.mxu0
      %v348 = vadd.f32 0.0, %v347
      %v349 = vpop.f32.mrf.mxu0
      %v350 = vadd.f32 0.0, %v349
      %351 = vmatmul.bf16.gmra.mxu0 %v304
      %v352 = vpop.f32.mrf.mxu0
      %v353 = vadd.f32 0.0, %v352
      %v354 = vpop.f32.mrf.mxu0
      %v355 = vadd.f32 0.0, %v354
      %356 = vmatmul.bf16.gmra.mxu0 %v307
      %v357 = vpop.f32.mrf.mxu0
      %v358 = vadd.f32 0.0, %v357
      %v359 = vpop.f32.mrf.mxu0
      %v360 = vadd.f32 0.0, %v359
      %361 = vdwg.mxu0
      %362 = vst [vmem:[#allocation2] sm:$0xff] %v323
      %363 = vst [vmem:[#allocation2 + $0x8] sm:$0xff] %v325
      %364 = vst [vmem:[#allocation2 + $0x10] sm:$0xff] %v328
      %365 = vst [vmem:[#allocation2 + $0x18] sm:$0xff] %v330
      %366 = vst [vmem:[#allocation2 + $0x20] sm:$0xff] %v333
      %367 = vst [vmem:[#allocation2 + $0x28] sm:$0xff] %v335
      %368 = vst [vmem:[#allocation2 + $0x30] sm:$0xff] %v338
      %369 = vst [vmem:[#allocation2 + $0x38] sm:$0xff] %v340
      %370 = vst [vmem:[#allocation2 + $0x40] sm:$0xff] %v343
      %371 = vst [vmem:[#allocation2 + $0x48] sm:$0xff] %v345
      %372 = vst [vmem:[#allocation2 + $0x50] sm:$0xff] %v348
      %373 = vst [vmem:[#allocation2 + $0x58] sm:$0xff] %v350
      %374 = vst [vmem:[#allocation2 + $0x60] sm:$0xff] %v353
      %375 = vst [vmem:[#allocation2 + $0x68] sm:$0xff] %v355
      %376 = vst [vmem:[#allocation2 + $0x70] sm:$0xff] %v358
      %377 = vst [vmem:[#allocation2 + $0x78] sm:$0xff] %v360
      %v378 = vld [vmem:[#allocation2] sm:$0xff]
      %v379 = vld [vmem:[#allocation2 + $0x8] sm:$0xff]
      %v380 = vld [vmem:[#allocation2 + $0x10] sm:$0xff]
      %v381 = vld [vmem:[#allocation2 + $0x18] sm:$0xff]
      %v382 = vld [vmem:[#allocation2 + $0x20] sm:$0xff]
      %v383 = vld [vmem:[#allocation2 + $0x28] sm:$0xff]
      %v384 = vld [vmem:[#allocation2 + $0x30] sm:$0xff]
      %v385 = vld [vmem:[#allocation2 + $0x38] sm:$0xff]
      %v386 = vld [vmem:[#allocation2 + $0x40] sm:$0xff]
      %v387 = vld [vmem:[#allocation2 + $0x48] sm:$0xff]
      %v388 = vld [vmem:[#allocation2 + $0x50] sm:$0xff]
      %v389 = vld [vmem:[#allocation2 + $0x58] sm:$0xff]
      %v390 = vld [vmem:[#allocation2 + $0x60] sm:$0xff]
      %v391 = vld [vmem:[#allocation2 + $0x68] sm:$0xff]
      %v392 = vld [vmem:[#allocation2 + $0x70] sm:$0xff]
      %v393 = vld [vmem:[#allocation2 + $0x78] sm:$0xff]
      %v394 = vld [vmem:[%s2] sm:$0x1]
      %v396 = vperm.slane %v394, 0
      %v398 = vadd.f32 %v378, %v396
      %v399 = vadd.f32 %v379, %v396
      %v400 = vadd.f32 %v380, %v396
      %v401 = vadd.f32 %v381, %v396
      %v402 = vadd.f32 %v382, %v396
      %v403 = vadd.f32 %v383, %v396
      %v404 = vadd.f32 %v384, %v396
      %v405 = vadd.f32 %v385, %v396
      %v406 = vadd.f32 %v386, %v396
      %v407 = vadd.f32 %v387, %v396
      %v408 = vadd.f32 %v388, %v396
      %v409 = vadd.f32 %v389, %v396
      %v410 = vadd.f32 %v390, %v396
      %v411 = vadd.f32 %v391, %v396
      %v412 = vadd.f32 %v392, %v396
      %v413 = vadd.f32 %v393, %v396
      %v414 = vmax.f32 %v398, 0.0
      %v415 = vmax.f32 %v399, 0.0
      %v416 = vmax.f32 %v400, 0.0
      %v417 = vmax.f32 %v401, 0.0
      %v418 = vmax.f32 %v402, 0.0
      %v419 = vmax.f32 %v403, 0.0
      %v420 = vmax.f32 %v404, 0.0
      %v421 = vmax.f32 %v405, 0.0
      %v422 = vmax.f32 %v406, 0.0
      %v423 = vmax.f32 %v407, 0.0
      %v424 = vmax.f32 %v408, 0.0
      %v425 = vmax.f32 %v409, 0.0
      %v426 = vmax.f32 %v410, 0.0
      %v427 = vmax.f32 %v411, 0.0
      %v428 = vmax.f32 %v412, 0.0
      %v429 = vmax.f32 %v413, 0.0
      %v430 = vpack.c.bf16 %v414, %v414
      %v431 = vpack.c.bf16 %v415, %v415
      %v432 = vpack.c.bf16 %v416, %v416
      %v433 = vpack.c.bf16 %v417, %v417
      %v434 = vpack.c.bf16 %v418, %v418
      %v435 = vpack.c.bf16 %v419, %v419
      %v436 = vpack.c.bf16 %v420, %v420
      %v437 = vpack.c.bf16 %v421, %v421
      %v438 = vpack.c.bf16 %v422, %v422
      %v439 = vpack.c.bf16 %v423, %v423
      %v440 = vpack.c.bf16 %v424, %v424
      %v441 = vpack.c.bf16 %v425, %v425
      %v442 = vpack.c.bf16 %v426, %v426
      %v443 = vpack.c.bf16 %v427, %v427
      %v444 = vpack.c.bf16 %v428, %v428
      %v445 = vpack.c.bf16 %v429, %v429
      %446 = vst [vmem:[%s206] sm:$0xf] %v430
      %447 = vst [vmem:[%s206 + $0x4] sm:$0xf] %v431
      %448 = vst [vmem:[%s206 + $0x8] sm:$0xf] %v432
      %449 = vst [vmem:[%s206 + $0xc] sm:$0xf] %v433
      %450 = vst [vmem:[%s206 + $0x10] sm:$0xf] %v434
      %451 = vst [vmem:[%s206 + $0x14] sm:$0xf] %v435
      %452 = vst [vmem:[%s206 + $0x18] sm:$0xf] %v436
      %453 = vst [vmem:[%s206 + $0x1c] sm:$0xf] %v437
      %454 = vst [vmem:[%s206 + $0x20] sm:$0xf] %v438
      %455 = vst [vmem:[%s206 + $0x24] sm:$0xf] %v439
      %456 = vst [vmem:[%s206 + $0x28] sm:$0xf] %v440
      %457 = vst [vmem:[%s206 + $0x2c] sm:$0xf] %v441
      %458 = vst [vmem:[%s206 + $0x30] sm:$0xf] %v442
      %459 = vst [vmem:[%s206 + $0x34] sm:$0xf] %v443
      %460 = vst [vmem:[%s206 + $0x38] sm:$0xf] %v444
      %461 = vst [vmem:[%s206 + $0x3c] sm:$0xf] %v445
      %p462 = scmp.lt.s32.totalorder %s18, 1
      %s463 = scalar_select %p462, %s18, 1
      %p464 = scmp.lt.s32.totalorder %s19, 1
      %s465 = scalar_select %p464, %s19, 1
      %s466 = smul.addr %s465, 16
      %s467 = smul.addr %s463, 32
      %s468 = sadd.s32 %s466, %s467
      %s469 = smul.addr %s468, 4
      %s470 = scalar_lea.vmem %s3, %s469
      // Predicated region
      $region33: #{_lambda_.4} parent=31 // pred_check
        %p471 = pneg %p116
      $region34: #{_lambda_.4} parent=31 // pred_check_branch
        %473 = sbr.rel (%p471) target = $region36
      $region35: #{_lambda_.4} parent=31 // pred_region
        _
      $region36: #{_lambda_.4} parent=31 // pred_fallthru
        _
    $region32: #{_lambda_.4} parent=5 // pred_fallthru
      _
    %p474 = scmp.le.s32.totalorder 2, %s9
    // Predicated region
    $region37: #{_lambda_.4} parent=5 // pred_check
      %p475 = pneg %p474
    $region38: #{_lambda_.4} parent=5 // pred_check_branch
      %477 = sbr.rel (%p475) target = $region40
    $region39: #{_lambda_.4} parent=5 // pred_region
      %s478 = ssub.s32 %s9, 2
      // Predicated region
      $region41: #{_lambda_.4} parent=39 // pred_check
        %p479 = pneg %p122
      $region42: #{_lambda_.4} parent=39 // pred_check_branch
        %481 = sbr.rel (%p479) target = $region44
      $region43: #{_lambda_.4} parent=39 // pred_region
        %p482 = scmp.lt.s32.totalorder %s20, 1
        %s483 = scalar_select %p482, %s20, 1
        %p484 = scmp.lt.s32.totalorder %s21, 1
        %s485 = scalar_select %p484, %s21, 1
        %s486 = smul.addr %s485, 16
        %s487 = smul.addr %s483, 32
        %s488 = sadd.s32 %s486, %s487
        %s489 = smul.addr %s488, 4
        %s490 = scalar_lea.vmem %s3, %s489
      $region44: #{_lambda_.4} parent=39 // pred_fallthru
        _
    $region40: #{_lambda_.4} parent=5 // pred_fallthru
      _
  $region6: #{_lambda_.4} parent=0 // loop_footer
    %s13 = sadd.s32 1, %s9
  $region7: #{_lambda_.4} parent=0 // loop_footer_branch
    %8 = sbr.rel target = $region3
  $region8: #{_lambda_.4} parent=0 // loop_exit
    _

// kernel: _lambda_.5
$region0: #{_lambda_.5}
  #allocation0 [shape = 'u32[]', space=smem, size = 0x4, offset = 0x4, fixed_abs, tag = 'smem constant byte address 0x4 - core index']
  #allocation1 [shape = 'u32[72,128]{1,0:T(1,128)}', space=vmem, size = 0x9000, scoped, tag = 'internal scratch']
  #allocation2 [shape = 'f32[72,128]{1,0:T(8,128)}', space=vmem, size = 0x9000, scoped, tag = 'scratch operand']
  %s0 = inlined_call_operand.vmem [shape: bf16[2,4,1,82,128], index: 0, kind: input, shape index: {}]
  %s1 = inlined_call_operand.vmem [shape: bf16[9,128,128], index: 1, kind: input, shape index: {}]
  %s2 = inlined_call_operand.vmem [shape: f32[1,128], index: 2, kind: input, shape index: {}]
  %s3 = inlined_call_operand.vmem [shape: bf16[2,1,72,128], index: 3, kind: output, shape index: {}]
  %s4 = sld [smem:[#allocation0]]
  $region45: #{_lambda_.5} parent=0
    _
  %s6 = ssub.s32 1, %s4
  %s7 = scalar_select 0, %s6, %s4
  loop: start=0, step=1, limit=4
  $region2: #{_lambda_.5} parent=0 // loop_pre_header
    _
  $region3: #{_lambda_.5} parent=0 // loop_header
    %s9 = sphi 0, %s13
    %p10 = scmp.ge.s32.totalorder %s9, 4
    %s16 = sphi 0, %s28
    %s17 = sphi 0, %s24
    %s18 = sphi 0, %s16
    %s19 = sphi 0, %s17
    %s20 = sphi 0, %s18
    %s21 = sphi 0, %s19
    %s33 = sphi 0, %s35
    %s36 = sphi 0, %s33
    %s37 = sphi 0, %s36
    %s53 = sphi 0, %s37
    %s57 = sphi 0, %s57
    %s59 = sphi 0, %s57
    %s60 = sphi 0, %s59
    %s74 = sphi 0, %s60
    %s78 = sphi 0, %s78
    %s80 = sphi 0, %s78
    %s81 = sphi 0, %s80
    %s95 = sphi 0, %s81
    %s103 = sphi 0, %s105
    %s106 = sphi 0, %s103
    %s107 = sphi 0, %s106
    %s123 = sphi 0, %s107
  $region4: #{_lambda_.5} parent=0 // loop_header_branch
    %12 = sbr.rel (%p10) target = $region8
  $region5: #{_lambda_.5} parent=0 // loop_body
    %s14 = ssub.s32 %s9, 1
    %s15 = ssub.s32 %s9, 2
    %s22 = sadd.s32 1, %s17
    %p23 = scmp.ge.s32.totalorder %s22, 1
    %s24 = scalar_select %p23, 0, %s22
    %s25 = sadd.s32 1, %s16
    %s26 = scalar_select %p23, %s25, %s16
    %p27 = scmp.ge.s32.totalorder %s26, 2
    %s28 = scalar_select %p27, 0, %s26
    %s29 = ssub.s32 %s16, %s28
    %s30 = ssub.s32 %s17, %s24
    %s31 = sor.u32 %s29, %s30
    %p32 = scmp.eq.s32.totalorder %s31, 0
    %s34 = sadd.s32 %s33, 1
    %s35 = scalar_select %p32, %s33, %s34
    %p38 = pneg %p32
    %p39 = scmp.eq.s32.totalorder %s9, 1
    %p40 = por %p38, %p39
    %p41 = scmp.ne.s32.totalorder %s33, %s36
    %p42 = scmp.eq.s32.totalorder %s9, 0
    %p43 = por %p41, %p42
    %p44 = scmp.ne.s32.totalorder %s33, %s36
    %p45 = scmp.eq.s32.totalorder %s14, 1
    %p46 = por %p44, %p45
    %p47 = scmp.ne.s32.totalorder %s36, %s37
    %p48 = scmp.eq.s32.totalorder %s14, 0
    %p49 = por %p47, %p48
    %p50 = scmp.ne.s32.totalorder %s36, %s37
    %p51 = scmp.eq.s32.totalorder %s15, 1
    %p52 = por %p50, %p51
    %p54 = scmp.ne.s32.totalorder %s37, %s53
    %p55 = scmp.eq.s32.totalorder %s15, 0
    %p56 = por %p54, %p55
    %s58 = sadd.s32 %s57, 1
    %p61 = scmp.eq.s32.totalorder %s9, 1
    %p62 = scmp.ne.s32.totalorder %s57, %s59
    %p63 = scmp.eq.s32.totalorder %s9, 0
    %p64 = por %p62, %p63
    %p65 = scmp.ne.s32.totalorder %s57, %s59
    %p66 = scmp.eq.s32.totalorder %s14, 1
    %p67 = por %p65, %p66
    %p68 = scmp.ne.s32.totalorder %s59, %s60
    %p69 = scmp.eq.s32.totalorder %s14, 0
    %p70 = por %p68, %p69
    %p71 = scmp.ne.s32.totalorder %s59, %s60
    %p72 = scmp.eq.s32.totalorder %s15, 1
    %p73 = por %p71, %p72
    %p75 = scmp.ne.s32.totalorder %s60, %s74
    %p76 = scmp.eq.s32.totalorder %s15, 0
    %p77 = por %p75, %p76
    %s79 = sadd.s32 %s78, 1
    %p82 = scmp.eq.s32.totalorder %s9, 1
    %p83 = scmp.ne.s32.totalorder %s78, %s80
    %p84 = scmp.eq.s32.totalorder %s9, 0
    %p85 = por %p83, %p84
    %p86 = scmp.ne.s32.totalorder %s78, %s80
    %p87 = scmp.eq.s32.totalorder %s14, 1
    %p88 = por %p86, %p87
    %p89 = scmp.ne.s32.totalorder %s80, %s81
    %p90 = scmp.eq.s32.totalorder %s14, 0
    %p91 = por %p89, %p90
    %p92 = scmp.ne.s32.totalorder %s80, %s81
    %p93 = scmp.eq.s32.totalorder %s15, 1
    %p94 = por %p92, %p93
    %p96 = scmp.ne.s32.totalorder %s81, %s95
    %p97 = scmp.eq.s32.totalorder %s15, 0
    %p98 = por %p96, %p97
    %s99 = ssub.s32 %s16, %s28
    %s100 = ssub.s32 %s17, %s24
    %s101 = sor.u32 %s99, %s100
    %p102 = scmp.eq.s32.totalorder %s101, 0
    %s104 = sadd.s32 %s103, 1
    %s105 = scalar_select %p102, %s103, %s104
    %p108 = pneg %p102
    %p109 = scmp.eq.s32.totalorder %s9, 1
    %p110 = por %p108, %p109
    %p111 = scmp.ne.s32.totalorder %s103, %s106
    %p112 = scmp.eq.s32.totalorder %s9, 0
    %p113 = por %p111, %p112
    %p114 = scmp.ne.s32.totalorder %s103, %s106
    %p115 = scmp.eq.s32.totalorder %s14, 1
    %p116 = por %p114, %p115
    %p117 = scmp.ne.s32.totalorder %s106, %s107
    %p118 = scmp.eq.s32.totalorder %s14, 0
    %p119 = por %p117, %p118
    %p120 = scmp.ne.s32.totalorder %s106, %s107
    %p121 = scmp.eq.s32.totalorder %s15, 1
    %p122 = por %p120, %p121
    %p124 = scmp.ne.s32.totalorder %s107, %s123
    %p125 = scmp.eq.s32.totalorder %s15, 0
    %p126 = por %p124, %p125
    %p127 = scmp.le.s32.totalorder 1, %s9
    %p128 = scmp.lt.s32.totalorder %s9, 3
    %p129 = pnand %p127, %p128
    %p130 = pneg %p129
    // Predicated region
    $region9: #{_lambda_.5} parent=5 // pred_check
      _
    $region10: #{_lambda_.5} parent=5 // pred_check_branch
      %132 = sbr.rel (%p129) target = $region12
    $region11: #{_lambda_.5} parent=5 // pred_region
      %s133 = ssub.s32 %s9, 1
      // Predicated region
      $region13: #{_lambda_.5} parent=11 // pred_check
        %p134 = pneg %p70
      $region14: #{_lambda_.5} parent=11 // pred_check_branch
        %136 = sbr.rel (%p134) target = $region16
      $region15: #{_lambda_.5} parent=11 // pred_region
        _
      $region16: #{_lambda_.5} parent=11 // pred_fallthru
        _
      // Predicated region
      $region17: #{_lambda_.5} parent=11 // pred_check
        %p137 = pneg %p91
      $region18: #{_lambda_.5} parent=11 // pred_check_branch
        %139 = sbr.rel (%p137) target = $region20
      $region19: #{_lambda_.5} parent=11 // pred_region
        _
      $region20: #{_lambda_.5} parent=11 // pred_fallthru
        _
    $region12: #{_lambda_.5} parent=5 // pred_fallthru
      _
    %p140 = scmp.lt.s32.totalorder %s9, 2
    // Predicated region
    $region21: #{_lambda_.5} parent=5 // pred_check
      %p141 = pneg %p140
    $region22: #{_lambda_.5} parent=5 // pred_check_branch
      %143 = sbr.rel (%p141) target = $region24
    $region23: #{_lambda_.5} parent=5 // pred_region
      // Predicated region
      $region25: #{_lambda_.5} parent=23 // pred_check
        %p144 = pneg %p43
      $region26: #{_lambda_.5} parent=23 // pred_check_branch
        %146 = sbr.rel (%p144) target = $region28
      $region27: #{_lambda_.5} parent=23 // pred_region
        %p147 = scmp.lt.s32.totalorder %s16, 1
        %s148 = scalar_select %p147, %s16, 1
        %p149 = scmp.lt.s32.totalorder %s17, 0
        %s150 = scalar_select %p149, %s17, 0
        %s151 = smul.addr %s150, 11
        %s152 = smul.addr %s148, 44
        %s153 = sadd.s32 %s151, %s152
        %s154 = smul.addr %s153, 4
        %s155 = scalar_lea.vmem %s0, %s154
      $region28: #{_lambda_.5} parent=23 // pred_fallthru
        _
    $region24: #{_lambda_.5} parent=5 // pred_fallthru
      _
    %p156 = scmp.le.s32.totalorder 1, %s9
    %p157 = scmp.lt.s32.totalorder %s9, 3
    %p158 = pnand %p156, %p157
    %p159 = pneg %p158
    // Predicated region
    $region29: #{_lambda_.5} parent=5 // pred_check
      _
    $region30: #{_lambda_.5} parent=5 // pred_check_branch
      %161 = sbr.rel (%p158) target = $region32
    $region31: #{_lambda_.5} parent=5 // pred_region
      %s162 = ssub.s32 %s9, 1
      %p163 = scmp.lt.s32.totalorder %s18, 1
      %s164 = scalar_select %p163, %s18, 1
      %p165 = scmp.lt.s32.totalorder %s19, 0
      %s166 = scalar_select %p165, %s19, 0
      %s167 = smul.addr %s166, 11
      %s168 = smul.addr %s164, 44
      %s169 = sadd.s32 %s167, %s168
      %s170 = smul.addr %s169, 4
      %s171 = scalar_lea.vmem %s0, %s170
      %p172 = pneg %p49
      %p173 = pneg %p46
      %p174 = pneg %p70
      %p175 = pneg %p67
      %p176 = pneg %p91
      %p177 = pneg %p88
      %p178 = pneg %p119
      %p179 = pneg %p116
      %p180 = scmp.lt.s32.totalorder %s18, 1
      %s181 = scalar_select %p180, %s18, 1
      %p182 = scmp.lt.s32.totalorder %s19, 0
      %s183 = scalar_select %p182, %s19, 0
      %s184 = smul.addr %s183, 9
      %s185 = smul.addr %s181, 9
      %s186 = sadd.s32 %s184, %s185
      %s187 = smul.addr %s186, 4
      %s188 = scalar_lea.vmem %s3, %s187
      %p189 = scmp.lt.s32.totalorder %s18, 1
      %s190 = scalar_select %p189, %s18, 1
      %p191 = scmp.lt.s32.totalorder %s19, 0
      %s192 = scalar_select %p191, %s19, 0
      %s193 = smul.addr %s192, 11
      %s194 = smul.addr %s190, 44
      %s195 = sadd.s32 %s193, %s194
      %s196 = smul.addr %s195, 4
      %s197 = scalar_lea.vmem %s0, %s196
      %p198 = scmp.lt.s32.totalorder %s18, 1
      %s199 = scalar_select %p198, %s18, 1
      %p200 = scmp.lt.s32.totalorder %s19, 0
      %s201 = scalar_select %p200, %s19, 0
      %s202 = smul.addr %s201, 9
      %s203 = smul.addr %s199, 9
      %s204 = sadd.s32 %s202, %s203
      %s205 = smul.addr %s204, 4
      %s206 = scalar_lea.vmem %s3, %s205
      %v207 = vld [vmem:[%s197] sm:$0xf]
      %v208 = vld [vmem:[%s197 + $0x4] sm:$0xf]
      %v209 = vld [vmem:[%s197 + $0x8] sm:$0xf]
      %v210 = vld [vmem:[%s197 + $0xc] sm:$0xf]
      %v211 = vld [vmem:[%s197 + $0x10] sm:$0xf]
      %v212 = vld [vmem:[%s197 + $0x14] sm:$0xf]
      %v213 = vld [vmem:[%s197 + $0x18] sm:$0xf]
      %v214 = vld [vmem:[%s197 + $0x1c] sm:$0xf]
      %v215 = vld [vmem:[%s197 + $0x20] sm:$0xf]
      %v216 = vld [vmem:[%s1] sm:$0xf]
      %v217 = vld [vmem:[%s1 + $0x4] sm:$0xf]
      %v218 = vld [vmem:[%s1 + $0x8] sm:$0xf]
      %v219 = vld [vmem:[%s1 + $0xc] sm:$0xf]
      %v220 = vld [vmem:[%s1 + $0x10] sm:$0xf]
      %v221 = vld [vmem:[%s1 + $0x14] sm:$0xf]
      %v222 = vld [vmem:[%s1 + $0x18] sm:$0xf]
      %v223 = vld [vmem:[%s1 + $0x1c] sm:$0xf]
      %v224 = vld [vmem:[%s1 + $0x20] sm:$0xf]
      %v225 = vld [vmem:[%s1 + $0x24] sm:$0xf]
      %v226 = vld [vmem:[%s1 + $0x28] sm:$0xf]
      %v227 = vld [vmem:[%s1 + $0x2c] sm:$0xf]
      %v228 = vld [vmem:[%s1 + $0x30] sm:$0xf]
      %v229 = vld [vmem:[%s1 + $0x34] sm:$0xf]
      %v230 = vld [vmem:[%s1 + $0x38] sm:$0xf]
      %v231 = vld [vmem:[%s1 + $0x3c] sm:$0xf]
      %v241 = vunpack.c.l.b16 %v207
      %v242 = vunpack.c.l.b16 %v208
      %v243 = vunpack.c.l.b16 %v209
      %v244 = vunpack.c.l.b16 %v210
      %v245 = vunpack.c.l.b16 %v211
      %v246 = vunpack.c.l.b16 %v212
      %v247 = vunpack.c.l.b16 %v213
      %v248 = vunpack.c.l.b16 %v214
      %v249 = vunpack.c.l.b16 %v215
      %v250 = vpack.c.b16 %v242, %v241
      %v251 = vpack.c.b16 %v244, %v243
      %v252 = vpack.c.b16 %v246, %v245
      %v253 = vpack.c.b16 %v248, %v247
      %v254 = vpack.c.b16 %v249, %v249
      %v276 = vunpack.c.l.b16 %v216
      %v277 = vunpack.c.l.b16 %v217
      %v278 = vunpack.c.l.b16 %v218
      %v279 = vunpack.c.l.b16 %v219
      %v280 = vunpack.c.l.b16 %v220
      %v281 = vunpack.c.l.b16 %v221
      %v282 = vunpack.c.l.b16 %v222
      %v283 = vunpack.c.l.b16 %v223
      %v284 = vunpack.c.l.b16 %v224
      %v285 = vunpack.c.l.b16 %v225
      %v286 = vunpack.c.l.b16 %v226
      %v287 = vunpack.c.l.b16 %v227
      %v288 = vunpack.c.l.b16 %v228
      %v289 = vunpack.c.l.b16 %v229
      %v290 = vunpack.c.l.b16 %v230
      %v291 = vunpack.c.l.b16 %v231
      %v292 = vpack.c.b16 %v277, %v276
      %v293 = vpack.c.b16 %v279, %v278
      %v294 = vpack.c.b16 %v281, %v280
      %v295 = vpack.c.b16 %v283, %v282
      %v296 = vpack.c.b16 %v285, %v284
      %v297 = vpack.c.b16 %v287, %v286
      %v298 = vpack.c.b16 %v289, %v288
      %v299 = vpack.c.b16 %v291, %v290
      %308 = vmatpush.bf16.msra.mxu0 %v299
      %309 = vmatpush.bf16.msra.mxu0 %v298
      %310 = vmatpush.bf16.msra.mxu0 %v297
      %311 = vmatpush.bf16.msra.mxu0 %v296
      %312 = vmatpush.bf16.msra.mxu0 %v295
      %313 = vmatpush.bf16.msra.mxu0 %v294
      %314 = vmatpush.bf16.msra.mxu0 %v293
      %315 = vmatpush.bf16.msra.mxu0 %v292
      %316 = vmatmul.bf16.gmra.mxu0 %v250
      %v317 = vpop.f32.mrf.mxu0
      %v318 = vadd.f32 0.0, %v317
      %v319 = vpop.f32.mrf.mxu0
      %v320 = vadd.f32 0.0, %v319
      %321 = vmatmul.bf16.gmra.mxu0 %v251
      %v322 = vpop.f32.mrf.mxu0
      %v323 = vadd.f32 0.0, %v322
      %v324 = vpop.f32.mrf.mxu0
      %v325 = vadd.f32 0.0, %v324
      %326 = vmatmul.bf16.gmra.mxu0 %v252
      %v327 = vpop.f32.mrf.mxu0
      %v328 = vadd.f32 0.0, %v327
      %v329 = vpop.f32.mrf.mxu0
      %v330 = vadd.f32 0.0, %v329
      %331 = vmatmul.bf16.gmra.mxu0 %v253
      %v332 = vpop.f32.mrf.mxu0
      %v333 = vadd.f32 0.0, %v332
      %v334 = vpop.f32.mrf.mxu0
      %v335 = vadd.f32 0.0, %v334
      %336 = vmatmul.bf16.gmra.mxu0 %v254
      %v337 = vpop.f32.mrf.mxu0
      %v338 = vadd.f32 0.0, %v337
      %v339 = vpop.f32.mrf.mxu0
      %340 = vdwg.mxu0
      %341 = vst [vmem:[#allocation2] sm:$0xff] %v318
      %342 = vst [vmem:[#allocation2 + $0x8] sm:$0xff] %v320
      %343 = vst [vmem:[#allocation2 + $0x10] sm:$0xff] %v323
      %344 = vst [vmem:[#allocation2 + $0x18] sm:$0xff] %v325
      %345 = vst [vmem:[#allocation2 + $0x20] sm:$0xff] %v328
      %346 = vst [vmem:[#allocation2 + $0x28] sm:$0xff] %v330
      %347 = vst [vmem:[#allocation2 + $0x30] sm:$0xff] %v333
      %348 = vst [vmem:[#allocation2 + $0x38] sm:$0xff] %v335
      %349 = vst [vmem:[#allocation2 + $0x40] sm:$0xff] %v338
      %s350 = scalar_lea.vmem %s197, 44
      %v351 = vld [vmem:[%s350] sm:$0xf]
      %v352 = vld [vmem:[%s350 + $0x4] sm:$0xf]
      %v353 = vld [vmem:[%s350 + $0x8] sm:$0xf]
      %v354 = vld [vmem:[%s350 + $0xc] sm:$0xf]
      %v355 = vld [vmem:[%s350 + $0x10] sm:$0xf]
      %v356 = vld [vmem:[%s350 + $0x14] sm:$0xf]
      %v357 = vld [vmem:[%s350 + $0x18] sm:$0xf]
      %v358 = vld [vmem:[%s350 + $0x1c] sm:$0xf]
      %v359 = vld [vmem:[%s350 + $0x20] sm:$0xf]
      %s360 = scalar_lea.vmem %s1, 64
      %v361 = vld [vmem:[%s360] sm:$0xf]
      %v362 = vld [vmem:[%s360 + $0x4] sm:$0xf]
      %v363 = vld [vmem:[%s360 + $0x8] sm:$0xf]
      %v364 = vld [vmem:[%s360 + $0xc] sm:$0xf]
      %v365 = vld [vmem:[%s360 + $0x10] sm:$0xf]
      %v366 = vld [vmem:[%s360 + $0x14] sm:$0xf]
      %v367 = vld [vmem:[%s360 + $0x18] sm:$0xf]
      %v368 = vld [vmem:[%s360 + $0x1c] sm:$0xf]
      %v369 = vld [vmem:[%s360 + $0x20] sm:$0xf]
      %v370 = vld [vmem:[%s360 + $0x24] sm:$0xf]
      %v371 = vld [vmem:[%s360 + $0x28] sm:$0xf]
      %v372 = vld [vmem:[%s360 + $0x2c] sm:$0xf]
      %v373 = vld [vmem:[%s360 + $0x30] sm:$0xf]
      %v374 = vld [vmem:[%s360 + $0x34] sm:$0xf]
      %v375 = vld [vmem:[%s360 + $0x38] sm:$0xf]
      %v376 = vld [vmem:[%s360 + $0x3c] sm:$0xf]
      %v386 = vunpack.c.l.b16 %v351
      %v387 = vunpack.c.l.b16 %v352
      %v388 = vunpack.c.l.b16 %v353
      %v389 = vunpack.c.l.b16 %v354
      %v390 = vunpack.c.l.b16 %v355
      %v391 = vunpack.c.l.b16 %v356
      %v392 = vunpack.c.l.b16 %v357
      %v393 = vunpack.c.l.b16 %v358
      %v394 = vunpack.c.l.b16 %v359
      %v395 = vpack.c.b16 %v387, %v386
      %v396 = vpack.c.b16 %v389, %v388
      %v397 = vpack.c.b16 %v391, %v390
      %v398 = vpack.c.b16 %v393, %v392
      %v399 = vpack.c.b16 %v394, %v394
      %v421 = vunpack.c.l.b16 %v361
      %v422 = vunpack.c.l.b16 %v362
      %v423 = vunpack.c.l.b16 %v363
      %v424 = vunpack.c.l.b16 %v364
      %v425 = vunpack.c.l.b16 %v365
      %v426 = vunpack.c.l.b16 %v366
      %v427 = vunpack.c.l.b16 %v367
      %v428 = vunpack.c.l.b16 %v368
      %v429 = vunpack.c.l.b16 %v369
      %v430 = vunpack.c.l.b16 %v370
      %v431 = vunpack.c.l.b16 %v371
      %v432 = vunpack.c.l.b16 %v372
      %v433 = vunpack.c.l.b16 %v373
      %v434 = vunpack.c.l.b16 %v374
      %v435 = vunpack.c.l.b16 %v375
      %v436 = vunpack.c.l.b16 %v376
      %v437 = vpack.c.b16 %v422, %v421
      %v438 = vpack.c.b16 %v424, %v423
      %v439 = vpack.c.b16 %v426, %v425
      %v440 = vpack.c.b16 %v428, %v427
      %v441 = vpack.c.b16 %v430, %v429
      %v442 = vpack.c.b16 %v432, %v431
      %v443 = vpack.c.b16 %v434, %v433
      %v444 = vpack.c.b16 %v436, %v435
      %453 = vmatpush.bf16.msra.mxu0 %v444
      %454 = vmatpush.bf16.msra.mxu0 %v443
      %455 = vmatpush.bf16.msra.mxu0 %v442
      %456 = vmatpush.bf16.msra.mxu0 %v441
      %457 = vmatpush.bf16.msra.mxu0 %v440
      %458 = vmatpush.bf16.msra.mxu0 %v439
      %459 = vmatpush.bf16.msra.mxu0 %v438
      %460 = vmatpush.bf16.msra.mxu0 %v437
      %461 = vmatmul.bf16.gmra.mxu0 %v395
      %v462 = vpop.f32.mrf.mxu0
      %v463 = vadd.f32 0.0, %v462
      %v464 = vpop.f32.mrf.mxu0
      %v465 = vadd.f32 0.0, %v464
      %466 = vmatmul.bf16.gmra.mxu0 %v396
      %v467 = vpop.f32.mrf.mxu0
      %v468 = vadd.f32 0.0, %v467
      %v469 = vpop.f32.mrf.mxu0
      %v470 = vadd.f32 0.0, %v469
      %471 = vmatmul.bf16.gmra.mxu0 %v397
      %v472 = vpop.f32.mrf.mxu0
      %v473 = vadd.f32 0.0, %v472
      %v474 = vpop.f32.mrf.mxu0
      %v475 = vadd.f32 0.0, %v474
      %476 = vmatmul.bf16.gmra.mxu0 %v398
      %v477 = vpop.f32.mrf.mxu0
      %v478 = vadd.f32 0.0, %v477
      %v479 = vpop.f32.mrf.mxu0
      %v480 = vadd.f32 0.0, %v479
      %481 = vmatmul.bf16.gmra.mxu0 %v399
      %v482 = vpop.f32.mrf.mxu0
      %v483 = vadd.f32 0.0, %v482
      %v484 = vpop.f32.mrf.mxu0
      %485 = vdwg.mxu0
      %v486 = vld [vmem:[#allocation2] sm:$0xff]
      %v487 = vld [vmem:[#allocation2 + $0x8] sm:$0xff]
      %v488 = vld [vmem:[#allocation2 + $0x10] sm:$0xff]
      %v489 = vld [vmem:[#allocation2 + $0x18] sm:$0xff]
      %v490 = vld [vmem:[#allocation2 + $0x20] sm:$0xff]
      %v491 = vld [vmem:[#allocation2 + $0x28] sm:$0xff]
      %v492 = vld [vmem:[#allocation2 + $0x30] sm:$0xff]
      %v493 = vld [vmem:[#allocation2 + $0x38] sm:$0xff]
      %v494 = vld [vmem:[#allocation2 + $0x40] sm:$0xff]
      %v495 = vadd.f32 %v486, %v463
      %v496 = vadd.f32 %v487, %v465
      %v497 = vadd.f32 %v488, %v468
      %v498 = vadd.f32 %v489, %v470
      %v499 = vadd.f32 %v490, %v473
      %v500 = vadd.f32 %v491, %v475
      %v501 = vadd.f32 %v492, %v478
      %v502 = vadd.f32 %v493, %v480
      %v503 = vadd.f32 %v494, %v483
      %504 = vst [vmem:[#allocation2] sm:$0xff] %v495
      %505 = vst [vmem:[#allocation2 + $0x8] sm:$0xff] %v496
      %506 = vst [vmem:[#allocation2 + $0x10] sm:$0xff] %v497
      %507 = vst [vmem:[#allocation2 + $0x18] sm:$0xff] %v498
      %508 = vst [vmem:[#allocation2 + $0x20] sm:$0xff] %v499
      %509 = vst [vmem:[#allocation2 + $0x28] sm:$0xff] %v500
      %510 = vst [vmem:[#allocation2 + $0x30] sm:$0xff] %v501
      %511 = vst [vmem:[#allocation2 + $0x38] sm:$0xff] %v502
      %512 = vst [vmem:[#allocation2 + $0x40] sm:$0xff] %v503
      %v513 = vld [vmem:[%s197] sm:$0xf]
      %v514 = vld [vmem:[%s197 + $0x4] sm:$0xf]
      %v515 = vld [vmem:[%s197 + $0x8] sm:$0xf]
      %v516 = vld [vmem:[%s197 + $0xc] sm:$0xf]
      %v517 = vld [vmem:[%s197 + $0x10] sm:$0xf]
      %v518 = vld [vmem:[%s197 + $0x14] sm:$0xf]
      %v519 = vld [vmem:[%s197 + $0x18] sm:$0xf]
      %v520 = vld [vmem:[%s197 + $0x1c] sm:$0xf]
      %v521 = vld [vmem:[%s197 + $0x20] sm:$0xf]
      %v522 = vld [vmem:[%s197 + $0x24] sm:$0x1]
      %s523 = scalar_lea.vmem %s1, 128
      %v524 = vld [vmem:[%s523] sm:$0xf]
      %v525 = vld [vmem:[%s523 + $0x4] sm:$0xf]
      %v526 = vld [vmem:[%s523 + $0x8] sm:$0xf]
      %v527 = vld [vmem:[%s523 + $0xc] sm:$0xf]
      %v528 = vld [vmem:[%s523 + $0x10] sm:$0xf]
      %v529 = vld [vmem:[%s523 + $0x14] sm:$0xf]
      %v530 = vld [vmem:[%s523 + $0x18] sm:$0xf]
      %v531 = vld [vmem:[%s523 + $0x1c] sm:$0xf]
      %v532 = vld [vmem:[%s523 + $0x20] sm:$0xf]
      %v533 = vld [vmem:[%s523 + $0x24] sm:$0xf]
      %v534 = vld [vmem:[%s523 + $0x28] sm:$0xf]
      %v535 = vld [vmem:[%s523 + $0x2c] sm:$0xf]
      %v536 = vld [vmem:[%s523 + $0x30] sm:$0xf]
      %v537 = vld [vmem:[%s523 + $0x34] sm:$0xf]
      %v538 = vld [vmem:[%s523 + $0x38] sm:$0xf]
      %v539 = vld [vmem:[%s523 + $0x3c] sm:$0xf]
      %v550 = vunpack.c.l.b16 %v513
      %v551 = vunpack.c.l.b16 %v514
      %v552 = vunpack.c.l.b16 %v515
      %v553 = vunpack.c.l.b16 %v516
      %v554 = vunpack.c.l.b16 %v517
      %v555 = vunpack.c.l.b16 %v518
      %v556 = vunpack.c.l.b16 %v519
      %v557 = vunpack.c.l.b16 %v520
      %v558 = vunpack.c.l.b16 %v521
      %v559 = vunpack.c.l.b16 %v522
      %v560 = vpack.c.b16 %v551, %v550
      %v561 = vpack.c.b16 %v553, %v552
      %v562 = vpack.c.b16 %v555, %v554
      %v563 = vpack.c.b16 %v557, %v556
      %v564 = vpack.c.b16 %v559, %v558
      %vm565 = vsmask.f32 7424
      %v567 = vshrl.u32 %v560, 16
      %v569 = vshll.u32 %v560, 16
      %v571 = vrot.slane %v569, 1
      %v572 = vor.u32 %v567, %v571
      %v574 = vshll.u32 %v561, 16
      %v576 = vrot.slane %v574, 1
      %v577 = vsel %vm565, %v572, %v576
      %v578 = vshrl.u32 %v561, 16
      %v580 = vor.u32 %v578, %v576
      %v582 = vshll.u32 %v562, 16
      %v584 = vrot.slane %v582, 1
      %v585 = vsel %vm565, %v580, %v584
      %v586 = vshrl.u32 %v562, 16
      %v588 = vor.u32 %v586, %v584
      %v590 = vshll.u32 %v563, 16
      %v592 = vrot.slane %v590, 1
      %v593 = vsel %vm565, %v588, %v592
      %v594 = vshrl.u32 %v563, 16
      %v596 = vor.u32 %v594, %v592
      %v598 = vshll.u32 %v564, 16
      %v600 = vrot.slane %v598, 1
      %v601 = vsel %vm565, %v596, %v600
      %v602 = vshrl.u32 %v564, 16
      %v604 = vor.u32 %v602, %v600
      %v626 = vunpack.c.l.b16 %v524
      %v627 = vunpack.c.l.b16 %v525
      %v628 = vunpack.c.l.b16 %v526
      %v629 = vunpack.c.l.b16 %v527
      %v630 = vunpack.c.l.b16 %v528
      %v631 = vunpack.c.l.b16 %v529
      %v632 = vunpack.c.l.b16 %v530
      %v633 = vunpack.c.l.b16 %v531
      %v634 = vunpack.c.l.b16 %v532
      %v635 = vunpack.c.l.b16 %v533
      %v636 = vunpack.c.l.b16 %v534
      %v637 = vunpack.c.l.b16 %v535
      %v638 = vunpack.c.l.b16 %v536
      %v639 = vunpack.c.l.b16 %v537
      %v640 = vunpack.c.l.b16 %v538
      %v641 = vunpack.c.l.b16 %v539
      %v642 = vpack.c.b16 %v627, %v626
      %v643 = vpack.c.b16 %v629, %v628
      %v644 = vpack.c.b16 %v631, %v630
      %v645 = vpack.c.b16 %v633, %v632
      %v646 = vpack.c.b16 %v635, %v634
      %v647 = vpack.c.b16 %v637, %v636
      %v648 = vpack.c.b16 %v639, %v638
      %v649 = vpack.c.b16 %v641, %v640
      %658 = vmatpush.bf16.msra.mxu0 %v649
      %659 = vmatpush.bf16.msra.mxu0 %v648
      %660 = vmatpush.bf16.msra.mxu0 %v647
      %661 = vmatpush.bf16.msra.mxu0 %v646
      %662 = vmatpush.bf16.msra.mxu0 %v645
      %663 = vmatpush.bf16.msra.mxu0 %v644
      %664 = vmatpush.bf16.msra.mxu0 %v643
      %665 = vmatpush.bf16.msra.mxu0 %v642
      %666 = vmatmul.bf16.gmra.mxu0 %v577
      %v667 = vpop.f32.mrf.mxu0
      %v668 = vadd.f32 0.0, %v667
      %v669 = vpop.f32.mrf.mxu0
      %v670 = vadd.f32 0.0, %v669
      %671 = vmatmul.bf16.gmra.mxu0 %v585
      %v672 = vpop.f32.mrf.mxu0
      %v673 = vadd.f32 0.0, %v672
      %v674 = vpop.f32.mrf.mxu0
      %v675 = vadd.f32 0.0, %v674
      %676 = vmatmul.bf16.gmra.mxu0 %v593
      %v677 = vpop.f32.mrf.mxu0
      %v678 = vadd.f32 0.0, %v677
      %v679 = vpop.f32.mrf.mxu0
      %v680 = vadd.f32 0.0, %v679
      %681 = vmatmul.bf16.gmra.mxu0 %v601
      %v682 = vpop.f32.mrf.mxu0
      %v683 = vadd.f32 0.0, %v682
      %v684 = vpop.f32.mrf.mxu0
      %v685 = vadd.f32 0.0, %v684
      %686 = vmatmul.bf16.gmra.mxu0 %v604
      %v687 = vpop.f32.mrf.mxu0
      %v688 = vadd.f32 0.0, %v687
      %v689 = vpop.f32.mrf.mxu0
      %690 = vdwg.mxu0
      %v691 = vld [vmem:[#allocation2] sm:$0xff]
      %v692 = vld [vmem:[#allocation2 + $0x8] sm:$0xff]
      %v693 = vld [vmem:[#allocation2 + $0x10] sm:$0xff]
      %v694 = vld [vmem:[#allocation2 + $0x18] sm:$0xff]
      %v695 = vld [vmem:[#allocation2 + $0x20] sm:$0xff]
      %v696 = vld [vmem:[#allocation2 + $0x28] sm:$0xff]
      %v697 = vld [vmem:[#allocation2 + $0x30] sm:$0xff]
      %v698 = vld [vmem:[#allocation2 + $0x38] sm:$0xff]
      %v699 = vld [vmem:[#allocation2 + $0x40] sm:$0xff]
      %v700 = vadd.f32 %v691, %v668
      %v701 = vadd.f32 %v692, %v670
      %v702 = vadd.f32 %v693, %v673
      %v703 = vadd.f32 %v694, %v675
      %v704 = vadd.f32 %v695, %v678
      %v705 = vadd.f32 %v696, %v680
      %v706 = vadd.f32 %v697, %v683
      %v707 = vadd.f32 %v698, %v685
      %v708 = vadd.f32 %v699, %v688
      %709 = vst [vmem:[#allocation2] sm:$0xff] %v700
      %710 = vst [vmem:[#allocation2 + $0x8] sm:$0xff] %v701
      %711 = vst [vmem:[#allocation2 + $0x10] sm:$0xff] %v702
      %712 = vst [vmem:[#allocation2 + $0x18] sm:$0xff] %v703
      %713 = vst [vmem:[#allocation2 + $0x20] sm:$0xff] %v704
      %714 = vst [vmem:[#allocation2 + $0x28] sm:$0xff] %v705
      %715 = vst [vmem:[#allocation2 + $0x30] sm:$0xff] %v706
      %716 = vst [vmem:[#allocation2 + $0x38] sm:$0xff] %v707
      %717 = vst [vmem:[#allocation2 + $0x40] sm:$0xff] %v708
      %s718 = scalar_lea.vmem %s197, 88
      %v719 = vld [vmem:[%s718] sm:$0xf]
      %v720 = vld [vmem:[%s718 + $0x4] sm:$0xf]
      %v721 = vld [vmem:[%s718 + $0x8] sm:$0xf]
      %v722 = vld [vmem:[%s718 + $0xc] sm:$0xf]
      %v723 = vld [vmem:[%s718 + $0x10] sm:$0xf]
      %v724 = vld [vmem:[%s718 + $0x14] sm:$0xf]
      %v725 = vld [vmem:[%s718 + $0x18] sm:$0xf]
      %v726 = vld [vmem:[%s718 + $0x1c] sm:$0xf]
      %v727 = vld [vmem:[%s718 + $0x20] sm:$0xf]
      %s728 = scalar_lea.vmem %s1, 192
      %v729 = vld [vmem:[%s728] sm:$0xf]
      %v730 = vld [vmem:[%s728 + $0x4] sm:$0xf]
      %v731 = vld [vmem:[%s728 + $0x8] sm:$0xf]
      %v732 = vld [vmem:[%s728 + $0xc] sm:$0xf]
      %v733 = vld [vmem:[%s728 + $0x10] sm:$0xf]
      %v734 = vld [vmem:[%s728 + $0x14] sm:$0xf]
      %v735 = vld [vmem:[%s728 + $0x18] sm:$0xf]
      %v736 = vld [vmem:[%s728 + $0x1c] sm:$0xf]
      %v737 = vld [vmem:[%s728 + $0x20] sm:$0xf]
      %v738 = vld [vmem:[%s728 + $0x24] sm:$0xf]
      %v739 = vld [vmem:[%s728 + $0x28] sm:$0xf]
      %v740 = vld [vmem:[%s728 + $0x2c] sm:$0xf]
      %v741 = vld [vmem:[%s728 + $0x30] sm:$0xf]
      %v742 = vld [vmem:[%s728 + $0x34] sm:$0xf]
      %v743 = vld [vmem:[%s728 + $0x38] sm:$0xf]
      %v744 = vld [vmem:[%s728 + $0x3c] sm:$0xf]
      %v754 = vunpack.c.l.b16 %v719
      %v755 = vunpack.c.l.b16 %v720
      %v756 = vunpack.c.l.b16 %v721
      %v757 = vunpack.c.l.b16 %v722
      %v758 = vunpack.c.l.b16 %v723
      %v759 = vunpack.c.l.b16 %v724
      %v760 = vunpack.c.l.b16 %v725
      %v761 = vunpack.c.l.b16 %v726
      %v762 = vunpack.c.l.b16 %v727
      %v763 = vpack.c.b16 %v755, %v754
      %v764 = vpack.c.b16 %v757, %v756
      %v765 = vpack.c.b16 %v759, %v758
      %v766 = vpack.c.b16 %v761, %v760
      %v767 = vpack.c.b16 %v762, %v762
      %v789 = vunpack.c.l.b16 %v729
      %v790 = vunpack.c.l.b16 %v730
      %v791 = vunpack.c.l.b16 %v731
      %v792 = vunpack.c.l.b16 %v732
      %v793 = vunpack.c.l.b16 %v733
      %v794 = vunpack.c.l.b16 %v734
      %v795 = vunpack.c.l.b16 %v735
      %v796 = vunpack.c.l.b16 %v736
      %v797 = vunpack.c.l.b16 %v737
      %v798 = vunpack.c.l.b16 %v738
      %v799 = vunpack.c.l.b16 %v739
      %v800 = vunpack.c.l.b16 %v740
      %v801 = vunpack.c.l.b16 %v741
      %v802 = vunpack.c.l.b16 %v742
      %v803 = vunpack.c.l.b16 %v743
      %v804 = vunpack.c.l.b16 %v744
      %v805 = vpack.c.b16 %v790, %v789
      %v806 = vpack.c.b16 %v792, %v791
      %v807 = vpack.c.b16 %v794, %v793
      %v808 = vpack.c.b16 %v796, %v795
      %v809 = vpack.c.b16 %v798, %v797
      %v810 = vpack.c.b16 %v800, %v799
      %v811 = vpack.c.b16 %v802, %v801
      %v812 = vpack.c.b16 %v804, %v803
      %821 = vmatpush.bf16.msra.mxu0 %v812
      %822 = vmatpush.bf16.msra.mxu0 %v811
      %823 = vmatpush.bf16.msra.mxu0 %v810
      %824 = vmatpush.bf16.msra.mxu0 %v809
      %825 = vmatpush.bf16.msra.mxu0 %v808
      %826 = vmatpush.bf16.msra.mxu0 %v807
      %827 = vmatpush.bf16.msra.mxu0 %v806
      %828 = vmatpush.bf16.msra.mxu0 %v805
      %829 = vmatmul.bf16.gmra.mxu0 %v763
      %v830 = vpop.f32.mrf.mxu0
      %v831 = vadd.f32 0.0, %v830
      %v832 = vpop.f32.mrf.mxu0
      %v833 = vadd.f32 0.0, %v832
      %834 = vmatmul.bf16.gmra.mxu0 %v764
      %v835 = vpop.f32.mrf.mxu0
      %v836 = vadd.f32 0.0, %v835
      %v837 = vpop.f32.mrf.mxu0
      %v838 = vadd.f32 0.0, %v837
      %839 = vmatmul.bf16.gmra.mxu0 %v765
      %v840 = vpop.f32.mrf.mxu0
      %v841 = vadd.f32 0.0, %v840
      %v842 = vpop.f32.mrf.mxu0
      %v843 = vadd.f32 0.0, %v842
      %844 = vmatmul.bf16.gmra.mxu0 %v766
      %v845 = vpop.f32.mrf.mxu0
      %v846 = vadd.f32 0.0, %v845
      %v847 = vpop.f32.mrf.mxu0
      %v848 = vadd.f32 0.0, %v847
      %849 = vmatmul.bf16.gmra.mxu0 %v767
      %v850 = vpop.f32.mrf.mxu0
      %v851 = vadd.f32 0.0, %v850
      %v852 = vpop.f32.mrf.mxu0
      %853 = vdwg.mxu0
      %v854 = vld [vmem:[#allocation2] sm:$0xff]
      %v855 = vld [vmem:[#allocation2 + $0x8] sm:$0xff]
      %v856 = vld [vmem:[#allocation2 + $0x10] sm:$0xff]
      %v857 = vld [vmem:[#allocation2 + $0x18] sm:$0xff]
      %v858 = vld [vmem:[#allocation2 + $0x20] sm:$0xff]
      %v859 = vld [vmem:[#allocation2 + $0x28] sm:$0xff]
      %v860 = vld [vmem:[#allocation2 + $0x30] sm:$0xff]
      %v861 = vld [vmem:[#allocation2 + $0x38] sm:$0xff]
      %v862 = vld [vmem:[#allocation2 + $0x40] sm:$0xff]
      %v863 = vadd.f32 %v854, %v831
      %v864 = vadd.f32 %v855, %v833
      %v865 = vadd.f32 %v856, %v836
      %v866 = vadd.f32 %v857, %v838
      %v867 = vadd.f32 %v858, %v841
      %v868 = vadd.f32 %v859, %v843
      %v869 = vadd.f32 %v860, %v846
      %v870 = vadd.f32 %v861, %v848
      %v871 = vadd.f32 %v862, %v851
      %872 = vst [vmem:[#allocation2] sm:$0xff] %v863
      %873 = vst [vmem:[#allocation2 + $0x8] sm:$0xff] %v864
      %874 = vst [vmem:[#allocation2 + $0x10] sm:$0xff] %v865
      %875 = vst [vmem:[#allocation2 + $0x18] sm:$0xff] %v866
      %876 = vst [vmem:[#allocation2 + $0x20] sm:$0xff] %v867
      %877 = vst [vmem:[#allocation2 + $0x28] sm:$0xff] %v868
      %878 = vst [vmem:[#allocation2 + $0x30] sm:$0xff] %v869
      %879 = vst [vmem:[#allocation2 + $0x38] sm:$0xff] %v870
      %880 = vst [vmem:[#allocation2 + $0x40] sm:$0xff] %v871
      %s881 = scalar_lea.vmem %s197, 132
      %v882 = vld [vmem:[%s881] sm:$0xf]
      %v883 = vld [vmem:[%s881 + $0x4] sm:$0xf]
      %v884 = vld [vmem:[%s881 + $0x8] sm:$0xf]
      %v885 = vld [vmem:[%s881 + $0xc] sm:$0xf]
      %v886 = vld [vmem:[%s881 + $0x10] sm:$0xf]
      %v887 = vld [vmem:[%s881 + $0x14] sm:$0xf]
      %v888 = vld [vmem:[%s881 + $0x18] sm:$0xf]
      %v889 = vld [vmem:[%s881 + $0x1c] sm:$0xf]
      %v890 = vld [vmem:[%s881 + $0x20] sm:$0xf]
      %s891 = scalar_lea.vmem %s1, 256
      %v892 = vld [vmem:[%s891] sm:$0xf]
      %v893 = vld [vmem:[%s891 + $0x4] sm:$0xf]
      %v894 = vld [vmem:[%s891 + $0x8] sm:$0xf]
      %v895 = vld [vmem:[%s891 + $0xc] sm:$0xf]
      %v896 = vld [vmem:[%s891 + $0x10] sm:$0xf]
      %v897 = vld [vmem:[%s891 + $0x14] sm:$0xf]
      %v898 = vld [vmem:[%s891 + $0x18] sm:$0xf]
      %v899 = vld [vmem:[%s891 + $0x1c] sm:$0xf]
      %v900 = vld [vmem:[%s891 + $0x20] sm:$0xf]
      %v901 = vld [vmem:[%s891 + $0x24] sm:$0xf]
      %v902 = vld [vmem:[%s891 + $0x28] sm:$0xf]
      %v903 = vld [vmem:[%s891 + $0x2c] sm:$0xf]
      %v904 = vld [vmem:[%s891 + $0x30] sm:$0xf]
      %v905 = vld [vmem:[%s891 + $0x34] sm:$0xf]
      %v906 = vld [vmem:[%s891 + $0x38] sm:$0xf]
      %v907 = vld [vmem:[%s891 + $0x3c] sm:$0xf]
      %v917 = vunpack.c.l.b16 %v882
      %v918 = vunpack.c.l.b16 %v883
      %v919 = vunpack.c.l.b16 %v884
      %v920 = vunpack.c.l.b16 %v885
      %v921 = vunpack.c.l.b16 %v886
      %v922 = vunpack.c.l.b16 %v887
      %v923 = vunpack.c.l.b16 %v888
      %v924 = vunpack.c.l.b16 %v889
      %v925 = vunpack.c.l.b16 %v890
      %v926 = vpack.c.b16 %v918, %v917
      %v927 = vpack.c.b16 %v920, %v919
      %v928 = vpack.c.b16 %v922, %v921
      %v929 = vpack.c.b16 %v924, %v923
      %v930 = vpack.c.b16 %v925, %v925
      %v952 = vunpack.c.l.b16 %v892
      %v953 = vunpack.c.l.b16 %v893
      %v954 = vunpack.c.l.b16 %v894
      %v955 = vunpack.c.l.b16 %v895
      %v956 = vunpack.c.l.b16 %v896
      %v957 = vunpack.c.l.b16 %v897
      %v958 = vunpack.c.l.b16 %v898
      %v959 = vunpack.c.l.b16 %v899
      %v960 = vunpack.c.l.b16 %v900
      %v961 = vunpack.c.l.b16 %v901
      %v962 = vunpack.c.l.b16 %v902
      %v963 = vunpack.c.l.b16 %v903
      %v964 = vunpack.c.l.b16 %v904
      %v965 = vunpack.c.l.b16 %v905
      %v966 = vunpack.c.l.b16 %v906
      %v967 = vunpack.c.l.b16 %v907
      %v968 = vpack.c.b16 %v953, %v952
      %v969 = vpack.c.b16 %v955, %v954
      %v970 = vpack.c.b16 %v957, %v956
      %v971 = vpack.c.b16 %v959, %v958
      %v972 = vpack.c.b16 %v961, %v960
      %v973 = vpack.c.b16 %v963, %v962
      %v974 = vpack.c.b16 %v965, %v964
      %v975 = vpack.c.b16 %v967, %v966
      %984 = vmatpush.bf16.msra.mxu0 %v975
      %985 = vmatpush.bf16.msra.mxu0 %v974
      %986 = vmatpush.bf16.msra.mxu0 %v973
      %987 = vmatpush.bf16.msra.mxu0 %v972
      %988 = vmatpush.bf16.msra.mxu0 %v971
      %989 = vmatpush.bf16.msra.mxu0 %v970
      %990 = vmatpush.bf16.msra.mxu0 %v969
      %991 = vmatpush.bf16.msra.mxu0 %v968
      %992 = vmatmul.bf16.gmra.mxu0 %v926
      %v993 = vpop.f32.mrf.mxu0
      %v994 = vadd.f32 0.0, %v993
      %v995 = vpop.f32.mrf.mxu0
      %v996 = vadd.f32 0.0, %v995
      %997 = vmatmul.bf16.gmra.mxu0 %v927
      %v998 = vpop.f32.mrf.mxu0
      %v999 = vadd.f32 0.0, %v998
      %v1000 = vpop.f32.mrf.mxu0
      %v1001 = vadd.f32 0.0, %v1000
      %1002 = vmatmul.bf16.gmra.mxu0 %v928
      %v1003 = vpop.f32.mrf.mxu0
      %v1004 = vadd.f32 0.0, %v1003
      %v1005 = vpop.f32.mrf.mxu0
      %v1006 = vadd.f32 0.0, %v1005
      %1007 = vmatmul.bf16.gmra.mxu0 %v929
      %v1008 = vpop.f32.mrf.mxu0
      %v1009 = vadd.f32 0.0, %v1008
      %v1010 = vpop.f32.mrf.mxu0
      %v1011 = vadd.f32 0.0, %v1010
      %1012 = vmatmul.bf16.gmra.mxu0 %v930
      %v1013 = vpop.f32.mrf.mxu0
      %v1014 = vadd.f32 0.0, %v1013
      %v1015 = vpop.f32.mrf.mxu0
      %1016 = vdwg.mxu0
      %v1017 = vld [vmem:[#allocation2] sm:$0xff]
      %v1018 = vld [vmem:[#allocation2 + $0x8] sm:$0xff]
      %v1019 = vld [vmem:[#allocation2 + $0x10] sm:$0xff]
      %v1020 = vld [vmem:[#allocation2 + $0x18] sm:$0xff]
      %v1021 = vld [vmem:[#allocation2 + $0x20] sm:$0xff]
      %v1022 = vld [vmem:[#allocation2 + $0x28] sm:$0xff]
      %v1023 = vld [vmem:[#allocation2 + $0x30] sm:$0xff]
      %v1024 = vld [vmem:[#allocation2 + $0x38] sm:$0xff]
      %v1025 = vld [vmem:[#allocation2 + $0x40] sm:$0xff]
      %v1026 = vadd.f32 %v1017, %v994
      %v1027 = vadd.f32 %v1018, %v996
      %v1028 = vadd.f32 %v1019, %v999
      %v1029 = vadd.f32 %v1020, %v1001
      %v1030 = vadd.f32 %v1021, %v1004
      %v1031 = vadd.f32 %v1022, %v1006
      %v1032 = vadd.f32 %v1023, %v1009
      %v1033 = vadd.f32 %v1024, %v1011
      %v1034 = vadd.f32 %v1025, %v1014
      %1035 = vst [vmem:[#allocation2] sm:$0xff] %v1026
      %1036 = vst [vmem:[#allocation2 + $0x8] sm:$0xff] %v1027
      %1037 = vst [vmem:[#allocation2 + $0x10] sm:$0xff] %v1028
      %1038 = vst [vmem:[#allocation2 + $0x18] sm:$0xff] %v1029
      %1039 = vst [vmem:[#allocation2 + $0x20] sm:$0xff] %v1030
      %1040 = vst [vmem:[#allocation2 + $0x28] sm:$0xff] %v1031
      %1041 = vst [vmem:[#allocation2 + $0x30] sm:$0xff] %v1032
      %1042 = vst [vmem:[#allocation2 + $0x38] sm:$0xff] %v1033
      %1043 = vst [vmem:[#allocation2 + $0x40] sm:$0xff] %v1034
      %v1044 = vld [vmem:[%s718] sm:$0xf]
      %v1045 = vld [vmem:[%s718 + $0x4] sm:$0xf]
      %v1046 = vld [vmem:[%s718 + $0x8] sm:$0xf]
      %v1047 = vld [vmem:[%s718 + $0xc] sm:$0xf]
      %v1048 = vld [vmem:[%s718 + $0x10] sm:$0xf]
      %v1049 = vld [vmem:[%s718 + $0x14] sm:$0xf]
      %v1050 = vld [vmem:[%s718 + $0x18] sm:$0xf]
      %v1051 = vld [vmem:[%s718 + $0x1c] sm:$0xf]
      %v1052 = vld [vmem:[%s718 + $0x20] sm:$0xf]
      %v1053 = vld [vmem:[%s718 + $0x24] sm:$0x1]
      %s1054 = scalar_lea.vmem %s1, 320
      %v1055 = vld [vmem:[%s1054] sm:$0xf]
      %v1056 = vld [vmem:[%s1054 + $0x4] sm:$0xf]
      %v1057 = vld [vmem:[%s1054 + $0x8] sm:$0xf]
      %v1058 = vld [vmem:[%s1054 + $0xc] sm:$0xf]
      %v1059 = vld [vmem:[%s1054 + $0x10] sm:$0xf]
      %v1060 = vld [vmem:[%s1054 + $0x14] sm:$0xf]
      %v1061 = vld [vmem:[%s1054 + $0x18] sm:$0xf]
      %v1062 = vld [vmem:[%s1054 + $0x1c] sm:$0xf]
      %v1063 = vld [vmem:[%s1054 + $0x20] sm:$0xf]
      %v1064 = vld [vmem:[%s1054 + $0x24] sm:$0xf]
      %v1065 = vld [vmem:[%s1054 + $0x28] sm:$0xf]
      %v1066 = vld [vmem:[%s1054 + $0x2c] sm:$0xf]
      %v1067 = vld [vmem:[%s1054 + $0x30] sm:$0xf]
      %v1068 = vld [vmem:[%s1054 + $0x34] sm:$0xf]
      %v1069 = vld [vmem:[%s1054 + $0x38] sm:$0xf]
      %v1070 = vld [vmem:[%s1054 + $0x3c] sm:$0xf]
      %v1081 = vunpack.c.l.b16 %v1044
      %v1082 = vunpack.c.l.b16 %v1045
      %v1083 = vunpack.c.l.b16 %v1046
      %v1084 = vunpack.c.l.b16 %v1047
      %v1085 = vunpack.c.l.b16 %v1048
      %v1086 = vunpack.c.l.b16 %v1049
      %v1087 = vunpack.c.l.b16 %v1050
      %v1088 = vunpack.c.l.b16 %v1051
      %v1089 = vunpack.c.l.b16 %v1052
      %v1090 = vunpack.c.l.b16 %v1053
      %v1091 = vpack.c.b16 %v1082, %v1081
      %v1092 = vpack.c.b16 %v1084, %v1083
      %v1093 = vpack.c.b16 %v1086, %v1085
      %v1094 = vpack.c.b16 %v1088, %v1087
      %v1095 = vpack.c.b16 %v1090, %v1089
      %v1097 = vshrl.u32 %v1091, 16
      %v1099 = vshll.u32 %v1091, 16
      %v1101 = vrot.slane %v1099, 1
      %v1102 = vor.u32 %v1097, %v1101
      %v1104 = vshll.u32 %v1092, 16
      %v1106 = vrot.slane %v1104, 1
      %v1107 = vsel %vm565, %v1102, %v1106
      %v1108 = vshrl.u32 %v1092, 16
      %v1110 = vor.u32 %v1108, %v1106
      %v1112 = vshll.u32 %v1093, 16
      %v1114 = vrot.slane %v1112, 1
      %v1115 = vsel %vm565, %v1110, %v1114
      %v1116 = vshrl.u32 %v1093, 16
      %v1118 = vor.u32 %v1116, %v1114
      %v1120 = vshll.u32 %v1094, 16
      %v1122 = vrot.slane %v1120, 1
      %v1123 = vsel %vm565, %v1118, %v1122
      %v1124 = vshrl.u32 %v1094, 16
      %v1126 = vor.u32 %v1124, %v1122
      %v1128 = vshll.u32 %v1095, 16
      %v1130 = vrot.slane %v1128, 1
      %v1131 = vsel %vm565, %v1126, %v1130
      %v1132 = vshrl.u32 %v1095, 16
      %v1134 = vor.u32 %v1132, %v1130
      %v1156 = vunpack.c.l.b16 %v1055
      %v1157 = vunpack.c.l.b16 %v1056
      %v1158 = vunpack.c.l.b16 %v1057
      %v1159 = vunpack.c.l.b16 %v1058
      %v1160 = vunpack.c.l.b16 %v1059
      %v1161 = vunpack.c.l.b16 %v1060
      %v1162 = vunpack.c.l.b16 %v1061
      %v1163 = vunpack.c.l.b16 %v1062
      %v1164 = vunpack.c.l.b16 %v1063
      %v1165 = vunpack.c.l.b16 %v1064
      %v1166 = vunpack.c.l.b16 %v1065
      %v1167 = vunpack.c.l.b16 %v1066
      %v1168 = vunpack.c.l.b16 %v1067
      %v1169 = vunpack.c.l.b16 %v1068
      %v1170 = vunpack.c.l.b16 %v1069
      %v1171 = vunpack.c.l.b16 %v1070
      %v1172 = vpack.c.b16 %v1157, %v1156
      %v1173 = vpack.c.b16 %v1159, %v1158
      %v1174 = vpack.c.b16 %v1161, %v1160
      %v1175 = vpack.c.b16 %v1163, %v1162
      %v1176 = vpack.c.b16 %v1165, %v1164
      %v1177 = vpack.c.b16 %v1167, %v1166
      %v1178 = vpack.c.b16 %v1169, %v1168
      %v1179 = vpack.c.b16 %v1171, %v1170
      %1188 = vmatpush.bf16.msra.mxu0 %v1179
      %1189 = vmatpush.bf16.msra.mxu0 %v1178
      %1190 = vmatpush.bf16.msra.mxu0 %v1177
      %1191 = vmatpush.bf16.msra.mxu0 %v1176
      %1192 = vmatpush.bf16.msra.mxu0 %v1175
      %1193 = vmatpush.bf16.msra.mxu0 %v1174
      %1194 = vmatpush.bf16.msra.mxu0 %v1173
      %1195 = vmatpush.bf16.msra.mxu0 %v1172
      %1196 = vmatmul.bf16.gmra.mxu0 %v1107
      %v1197 = vpop.f32.mrf.mxu0
      %v1198 = vadd.f32 0.0, %v1197
      %v1199 = vpop.f32.mrf.mxu0
      %v1200 = vadd.f32 0.0, %v1199
      %1201 = vmatmul.bf16.gmra.mxu0 %v1115
      %v1202 = vpop.f32.mrf.mxu0
      %v1203 = vadd.f32 0.0, %v1202
      %v1204 = vpop.f32.mrf.mxu0
      %v1205 = vadd.f32 0.0, %v1204
      %1206 = vmatmul.bf16.gmra.mxu0 %v1123
      %v1207 = vpop.f32.mrf.mxu0
      %v1208 = vadd.f32 0.0, %v1207
      %v1209 = vpop.f32.mrf.mxu0
      %v1210 = vadd.f32 0.0, %v1209
      %1211 = vmatmul.bf16.gmra.mxu0 %v1131
      %v1212 = vpop.f32.mrf.mxu0
      %v1213 = vadd.f32 0.0, %v1212
      %v1214 = vpop.f32.mrf.mxu0
      %v1215 = vadd.f32 0.0, %v1214
      %1216 = vmatmul.bf16.gmra.mxu0 %v1134
      %v1217 = vpop.f32.mrf.mxu0
      %v1218 = vadd.f32 0.0, %v1217
      %v1219 = vpop.f32.mrf.mxu0
      %1220 = vdwg.mxu0
      %v1221 = vld [vmem:[#allocation2] sm:$0xff]
      %v1222 = vld [vmem:[#allocation2 + $0x8] sm:$0xff]
      %v1223 = vld [vmem:[#allocation2 + $0x10] sm:$0xff]
      %v1224 = vld [vmem:[#allocation2 + $0x18] sm:$0xff]
      %v1225 = vld [vmem:[#allocation2 + $0x20] sm:$0xff]
      %v1226 = vld [vmem:[#allocation2 + $0x28] sm:$0xff]
      %v1227 = vld [vmem:[#allocation2 + $0x30] sm:$0xff]
      %v1228 = vld [vmem:[#allocation2 + $0x38] sm:$0xff]
      %v1229 = vld [vmem:[#allocation2 + $0x40] sm:$0xff]
      %v1230 = vadd.f32 %v1221, %v1198
      %v1231 = vadd.f32 %v1222, %v1200
      %v1232 = vadd.f32 %v1223, %v1203
      %v1233 = vadd.f32 %v1224, %v1205
      %v1234 = vadd.f32 %v1225, %v1208
      %v1235 = vadd.f32 %v1226, %v1210
      %v1236 = vadd.f32 %v1227, %v1213
      %v1237 = vadd.f32 %v1228, %v1215
      %v1238 = vadd.f32 %v1229, %v1218
      %1239 = vst [vmem:[#allocation2] sm:$0xff] %v1230
      %1240 = vst [vmem:[#allocation2 + $0x8] sm:$0xff] %v1231
      %1241 = vst [vmem:[#allocation2 + $0x10] sm:$0xff] %v1232
      %1242 = vst [vmem:[#allocation2 + $0x18] sm:$0xff] %v1233
      %1243 = vst [vmem:[#allocation2 + $0x20] sm:$0xff] %v1234
      %1244 = vst [vmem:[#allocation2 + $0x28] sm:$0xff] %v1235
      %1245 = vst [vmem:[#allocation2 + $0x30] sm:$0xff] %v1236
      %1246 = vst [vmem:[#allocation2 + $0x38] sm:$0xff] %v1237
      %1247 = vst [vmem:[#allocation2 + $0x40] sm:$0xff] %v1238
      %v1248 = vld [vmem:[%s197 + $0x4] sm:$0xf]
      %v1249 = vld [vmem:[%s197 + $0x8] sm:$0xf]
      %v1250 = vld [vmem:[%s197 + $0xc] sm:$0xf]
      %v1251 = vld [vmem:[%s197 + $0x10] sm:$0xf]
      %v1252 = vld [vmem:[%s197 + $0x14] sm:$0xf]
      %v1253 = vld [vmem:[%s197 + $0x18] sm:$0xf]
      %v1254 = vld [vmem:[%s197 + $0x1c] sm:$0xf]
      %v1255 = vld [vmem:[%s197 + $0x20] sm:$0xf]
      %v1256 = vld [vmem:[%s197 + $0x24] sm:$0xf]
      %v1257 = vld [vmem:[%s197 + $0x28] sm:$0x1]
      %s1258 = scalar_lea.vmem %s1, 384
      %v1259 = vld [vmem:[%s1258] sm:$0xf]
      %v1260 = vld [vmem:[%s1258 + $0x4] sm:$0xf]
      %v1261 = vld [vmem:[%s1258 + $0x8] sm:$0xf]
      %v1262 = vld [vmem:[%s1258 + $0xc] sm:$0xf]
      %v1263 = vld [vmem:[%s1258 + $0x10] sm:$0xf]
      %v1264 = vld [vmem:[%s1258 + $0x14] sm:$0xf]
      %v1265 = vld [vmem:[%s1258 + $0x18] sm:$0xf]
      %v1266 = vld [vmem:[%s1258 + $0x1c] sm:$0xf]
      %v1267 = vld [vmem:[%s1258 + $0x20] sm:$0xf]
      %v1268 = vld [vmem:[%s1258 + $0x24] sm:$0xf]
      %v1269 = vld [vmem:[%s1258 + $0x28] sm:$0xf]
      %v1270 = vld [vmem:[%s1258 + $0x2c] sm:$0xf]
      %v1271 = vld [vmem:[%s1258 + $0x30] sm:$0xf]
      %v1272 = vld [vmem:[%s1258 + $0x34] sm:$0xf]
      %v1273 = vld [vmem:[%s1258 + $0x38] sm:$0xf]
      %v1274 = vld [vmem:[%s1258 + $0x3c] sm:$0xf]
      %v1285 = vunpack.c.l.b16 %v1248
      %v1286 = vunpack.c.l.b16 %v1249
      %v1287 = vunpack.c.l.b16 %v1250
      %v1288 = vunpack.c.l.b16 %v1251
      %v1289 = vunpack.c.l.b16 %v1252
      %v1290 = vunpack.c.l.b16 %v1253
      %v1291 = vunpack.c.l.b16 %v1254
      %v1292 = vunpack.c.l.b16 %v1255
      %v1293 = vunpack.c.l.b16 %v1256
      %v1294 = vunpack.c.l.b16 %v1257
      %v1295 = vpack.c.b16 %v1286, %v1285
      %v1296 = vpack.c.b16 %v1288, %v1287
      %v1297 = vpack.c.b16 %v1290, %v1289
      %v1298 = vpack.c.b16 %v1292, %v1291
      %v1299 = vpack.c.b16 %v1294, %v1293
      %v1301 = vshrl.u32 %v1295, 16
      %v1303 = vshll.u32 %v1295, 16
      %v1305 = vrot.slane %v1303, 1
      %v1306 = vor.u32 %v1301, %v1305
      %v1308 = vshll.u32 %v1296, 16
      %v1310 = vrot.slane %v1308, 1
      %v1311 = vsel %vm565, %v1306, %v1310
      %v1312 = vshrl.u32 %v1296, 16
      %v1314 = vor.u32 %v1312, %v1310
      %v1316 = vshll.u32 %v1297, 16
      %v1318 = vrot.slane %v1316, 1
      %v1319 = vsel %vm565, %v1314, %v1318
      %v1320 = vshrl.u32 %v1297, 16
      %v1322 = vor.u32 %v1320, %v1318
      %v1324 = vshll.u32 %v1298, 16
      %v1326 = vrot.slane %v1324, 1
      %v1327 = vsel %vm565, %v1322, %v1326
      %v1328 = vshrl.u32 %v1298, 16
      %v1330 = vor.u32 %v1328, %v1326
      %v1332 = vshll.u32 %v1299, 16
      %v1334 = vrot.slane %v1332, 1
      %v1335 = vsel %vm565, %v1330, %v1334
      %v1336 = vshrl.u32 %v1299, 16
      %v1338 = vor.u32 %v1336, %v1334
      %v1360 = vunpack.c.l.b16 %v1259
      %v1361 = vunpack.c.l.b16 %v1260
      %v1362 = vunpack.c.l.b16 %v1261
      %v1363 = vunpack.c.l.b16 %v1262
      %v1364 = vunpack.c.l.b16 %v1263
      %v1365 = vunpack.c.l.b16 %v1264
      %v1366 = vunpack.c.l.b16 %v1265
      %v1367 = vunpack.c.l.b16 %v1266
      %v1368 = vunpack.c.l.b16 %v1267
      %v1369 = vunpack.c.l.b16 %v1268
      %v1370 = vunpack.c.l.b16 %v1269
      %v1371 = vunpack.c.l.b16 %v1270
      %v1372 = vunpack.c.l.b16 %v1271
      %v1373 = vunpack.c.l.b16 %v1272
      %v1374 = vunpack.c.l.b16 %v1273
      %v1375 = vunpack.c.l.b16 %v1274
      %v1376 = vpack.c.b16 %v1361, %v1360
      %v1377 = vpack.c.b16 %v1363, %v1362
      %v1378 = vpack.c.b16 %v1365, %v1364
      %v1379 = vpack.c.b16 %v1367, %v1366
      %v1380 = vpack.c.b16 %v1369, %v1368
      %v1381 = vpack.c.b16 %v1371, %v1370
      %v1382 = vpack.c.b16 %v1373, %v1372
      %v1383 = vpack.c.b16 %v1375, %v1374
      %1392 = vmatpush.bf16.msra.mxu0 %v1383
      %1393 = vmatpush.bf16.msra.mxu0 %v1382
      %1394 = vmatpush.bf16.msra.mxu0 %v1381
      %1395 = vmatpush.bf16.msra.mxu0 %v1380
      %1396 = vmatpush.bf16.msra.mxu0 %v1379
      %1397 = vmatpush.bf16.msra.mxu0 %v1378
      %1398 = vmatpush.bf16.msra.mxu0 %v1377
      %1399 = vmatpush.bf16.msra.mxu0 %v1376
      %1400 = vmatmul.bf16.gmra.mxu0 %v1311
      %v1401 = vpop.f32.mrf.mxu0
      %v1402 = vadd.f32 0.0, %v1401
      %v1403 = vpop.f32.mrf.mxu0
      %v1404 = vadd.f32 0.0, %v1403
      %1405 = vmatmul.bf16.gmra.mxu0 %v1319
      %v1406 = vpop.f32.mrf.mxu0
      %v1407 = vadd.f32 0.0, %v1406
      %v1408 = vpop.f32.mrf.mxu0
      %v1409 = vadd.f32 0.0, %v1408
      %1410 = vmatmul.bf16.gmra.mxu0 %v1327
      %v1411 = vpop.f32.mrf.mxu0
      %v1412 = vadd.f32 0.0, %v1411
      %v1413 = vpop.f32.mrf.mxu0
      %v1414 = vadd.f32 0.0, %v1413
      %1415 = vmatmul.bf16.gmra.mxu0 %v1335
      %v1416 = vpop.f32.mrf.mxu0
      %v1417 = vadd.f32 0.0, %v1416
      %v1418 = vpop.f32.mrf.mxu0
      %v1419 = vadd.f32 0.0, %v1418
      %1420 = vmatmul.bf16.gmra.mxu0 %v1338
      %v1421 = vpop.f32.mrf.mxu0
      %v1422 = vadd.f32 0.0, %v1421
      %v1423 = vpop.f32.mrf.mxu0
      %1424 = vdwg.mxu0
      %v1425 = vld [vmem:[#allocation2] sm:$0xff]
      %v1426 = vld [vmem:[#allocation2 + $0x8] sm:$0xff]
      %v1427 = vld [vmem:[#allocation2 + $0x10] sm:$0xff]
      %v1428 = vld [vmem:[#allocation2 + $0x18] sm:$0xff]
      %v1429 = vld [vmem:[#allocation2 + $0x20] sm:$0xff]
      %v1430 = vld [vmem:[#allocation2 + $0x28] sm:$0xff]
      %v1431 = vld [vmem:[#allocation2 + $0x30] sm:$0xff]
      %v1432 = vld [vmem:[#allocation2 + $0x38] sm:$0xff]
      %v1433 = vld [vmem:[#allocation2 + $0x40] sm:$0xff]
      %v1434 = vadd.f32 %v1425, %v1402
      %v1435 = vadd.f32 %v1426, %v1404
      %v1436 = vadd.f32 %v1427, %v1407
      %v1437 = vadd.f32 %v1428, %v1409
      %v1438 = vadd.f32 %v1429, %v1412
      %v1439 = vadd.f32 %v1430, %v1414
      %v1440 = vadd.f32 %v1431, %v1417
      %v1441 = vadd.f32 %v1432, %v1419
      %v1442 = vadd.f32 %v1433, %v1422
      %1443 = vst [vmem:[#allocation2] sm:$0xff] %v1434
      %1444 = vst [vmem:[#allocation2 + $0x8] sm:$0xff] %v1435
      %1445 = vst [vmem:[#allocation2 + $0x10] sm:$0xff] %v1436
      %1446 = vst [vmem:[#allocation2 + $0x18] sm:$0xff] %v1437
      %1447 = vst [vmem:[#allocation2 + $0x20] sm:$0xff] %v1438
      %1448 = vst [vmem:[#allocation2 + $0x28] sm:$0xff] %v1439
      %1449 = vst [vmem:[#allocation2 + $0x30] sm:$0xff] %v1440
      %1450 = vst [vmem:[#allocation2 + $0x38] sm:$0xff] %v1441
      %1451 = vst [vmem:[#allocation2 + $0x40] sm:$0xff] %v1442
      %v1452 = vld [vmem:[%s350 + $0x4] sm:$0xf]
      %v1453 = vld [vmem:[%s350 + $0x8] sm:$0xf]
      %v1454 = vld [vmem:[%s350 + $0xc] sm:$0xf]
      %v1455 = vld [vmem:[%s350 + $0x10] sm:$0xf]
      %v1456 = vld [vmem:[%s350 + $0x14] sm:$0xf]
      %v1457 = vld [vmem:[%s350 + $0x18] sm:$0xf]
      %v1458 = vld [vmem:[%s350 + $0x1c] sm:$0xf]
      %v1459 = vld [vmem:[%s350 + $0x20] sm:$0xf]
      %v1460 = vld [vmem:[%s350 + $0x24] sm:$0xf]
      %v1461 = vld [vmem:[%s350 + $0x28] sm:$0x1]
      %s1462 = scalar_lea.vmem %s1, 448
      %v1463 = vld [vmem:[%s1462] sm:$0xf]
      %v1464 = vld [vmem:[%s1462 + $0x4] sm:$0xf]
      %v1465 = vld [vmem:[%s1462 + $0x8] sm:$0xf]
      %v1466 = vld [vmem:[%s1462 + $0xc] sm:$0xf]
      %v1467 = vld [vmem:[%s1462 + $0x10] sm:$0xf]
      %v1468 = vld [vmem:[%s1462 + $0x14] sm:$0xf]
      %v1469 = vld [vmem:[%s1462 + $0x18] sm:$0xf]
      %v1470 = vld [vmem:[%s1462 + $0x1c] sm:$0xf]
      %v1471 = vld [vmem:[%s1462 + $0x20] sm:$0xf]
      %v1472 = vld [vmem:[%s1462 + $0x24] sm:$0xf]
      %v1473 = vld [vmem:[%s1462 + $0x28] sm:$0xf]
      %v1474 = vld [vmem:[%s1462 + $0x2c] sm:$0xf]
      %v1475 = vld [vmem:[%s1462 + $0x30] sm:$0xf]
      %v1476 = vld [vmem:[%s1462 + $0x34] sm:$0xf]
      %v1477 = vld [vmem:[%s1462 + $0x38] sm:$0xf]
      %v1478 = vld [vmem:[%s1462 + $0x3c] sm:$0xf]
      %v1489 = vunpack.c.l.b16 %v1452
      %v1490 = vunpack.c.l.b16 %v1453
      %v1491 = vunpack.c.l.b16 %v1454
      %v1492 = vunpack.c.l.b16 %v1455
      %v1493 = vunpack.c.l.b16 %v1456
      %v1494 = vunpack.c.l.b16 %v1457
      %v1495 = vunpack.c.l.b16 %v1458
      %v1496 = vunpack.c.l.b16 %v1459
      %v1497 = vunpack.c.l.b16 %v1460
      %v1498 = vunpack.c.l.b16 %v1461
      %v1499 = vpack.c.b16 %v1490, %v1489
      %v1500 = vpack.c.b16 %v1492, %v1491
      %v1501 = vpack.c.b16 %v1494, %v1493
      %v1502 = vpack.c.b16 %v1496, %v1495
      %v1503 = vpack.c.b16 %v1498, %v1497
      %v1505 = vshrl.u32 %v1499, 16
      %v1507 = vshll.u32 %v1499, 16
      %v1509 = vrot.slane %v1507, 1
      %v1510 = vor.u32 %v1505, %v1509
      %v1512 = vshll.u32 %v1500, 16
      %v1514 = vrot.slane %v1512, 1
      %v1515 = vsel %vm565, %v1510, %v1514
      %v1516 = vshrl.u32 %v1500, 16
      %v1518 = vor.u32 %v1516, %v1514
      %v1520 = vshll.u32 %v1501, 16
      %v1522 = vrot.slane %v1520, 1
      %v1523 = vsel %vm565, %v1518, %v1522
      %v1524 = vshrl.u32 %v1501, 16
      %v1526 = vor.u32 %v1524, %v1522
      %v1528 = vshll.u32 %v1502, 16
      %v1530 = vrot.slane %v1528, 1
      %v1531 = vsel %vm565, %v1526, %v1530
      %v1532 = vshrl.u32 %v1502, 16
      %v1534 = vor.u32 %v1532, %v1530
      %v1536 = vshll.u32 %v1503, 16
      %v1538 = vrot.slane %v1536, 1
      %v1539 = vsel %vm565, %v1534, %v1538
      %v1540 = vshrl.u32 %v1503, 16
      %v1542 = vor.u32 %v1540, %v1538
      %v1564 = vunpack.c.l.b16 %v1463
      %v1565 = vunpack.c.l.b16 %v1464
      %v1566 = vunpack.c.l.b16 %v1465
      %v1567 = vunpack.c.l.b16 %v1466
      %v1568 = vunpack.c.l.b16 %v1467
      %v1569 = vunpack.c.l.b16 %v1468
      %v1570 = vunpack.c.l.b16 %v1469
      %v1571 = vunpack.c.l.b16 %v1470
      %v1572 = vunpack.c.l.b16 %v1471
      %v1573 = vunpack.c.l.b16 %v1472
      %v1574 = vunpack.c.l.b16 %v1473
      %v1575 = vunpack.c.l.b16 %v1474
      %v1576 = vunpack.c.l.b16 %v1475
      %v1577 = vunpack.c.l.b16 %v1476
      %v1578 = vunpack.c.l.b16 %v1477
      %v1579 = vunpack.c.l.b16 %v1478
      %v1580 = vpack.c.b16 %v1565, %v1564
      %v1581 = vpack.c.b16 %v1567, %v1566
      %v1582 = vpack.c.b16 %v1569, %v1568
      %v1583 = vpack.c.b16 %v1571, %v1570
      %v1584 = vpack.c.b16 %v1573, %v1572
      %v1585 = vpack.c.b16 %v1575, %v1574
      %v1586 = vpack.c.b16 %v1577, %v1576
      %v1587 = vpack.c.b16 %v1579, %v1578
      %1596 = vmatpush.bf16.msra.mxu0 %v1587
      %1597 = vmatpush.bf16.msra.mxu0 %v1586
      %1598 = vmatpush.bf16.msra.mxu0 %v1585
      %1599 = vmatpush.bf16.msra.mxu0 %v1584
      %1600 = vmatpush.bf16.msra.mxu0 %v1583
      %1601 = vmatpush.bf16.msra.mxu0 %v1582
      %1602 = vmatpush.bf16.msra.mxu0 %v1581
      %1603 = vmatpush.bf16.msra.mxu0 %v1580
      %1604 = vmatmul.bf16.gmra.mxu0 %v1515
      %v1605 = vpop.f32.mrf.mxu0
      %v1606 = vadd.f32 0.0, %v1605
      %v1607 = vpop.f32.mrf.mxu0
      %v1608 = vadd.f32 0.0, %v1607
      %1609 = vmatmul.bf16.gmra.mxu0 %v1523
      %v1610 = vpop.f32.mrf.mxu0
      %v1611 = vadd.f32 0.0, %v1610
      %v1612 = vpop.f32.mrf.mxu0
      %v1613 = vadd.f32 0.0, %v1612
      %1614 = vmatmul.bf16.gmra.mxu0 %v1531
      %v1615 = vpop.f32.mrf.mxu0
      %v1616 = vadd.f32 0.0, %v1615
      %v1617 = vpop.f32.mrf.mxu0
      %v1618 = vadd.f32 0.0, %v1617
      %1619 = vmatmul.bf16.gmra.mxu0 %v1539
      %v1620 = vpop.f32.mrf.mxu0
      %v1621 = vadd.f32 0.0, %v1620
      %v1622 = vpop.f32.mrf.mxu0
      %v1623 = vadd.f32 0.0, %v1622
      %1624 = vmatmul.bf16.gmra.mxu0 %v1542
      %v1625 = vpop.f32.mrf.mxu0
      %v1626 = vadd.f32 0.0, %v1625
      %v1627 = vpop.f32.mrf.mxu0
      %1628 = vdwg.mxu0
      %v1629 = vld [vmem:[#allocation2] sm:$0xff]
      %v1630 = vld [vmem:[#allocation2 + $0x8] sm:$0xff]
      %v1631 = vld [vmem:[#allocation2 + $0x10] sm:$0xff]
      %v1632 = vld [vmem:[#allocation2 + $0x18] sm:$0xff]
      %v1633 = vld [vmem:[#allocation2 + $0x20] sm:$0xff]
      %v1634 = vld [vmem:[#allocation2 + $0x28] sm:$0xff]
      %v1635 = vld [vmem:[#allocation2 + $0x30] sm:$0xff]
      %v1636 = vld [vmem:[#allocation2 + $0x38] sm:$0xff]
      %v1637 = vld [vmem:[#allocation2 + $0x40] sm:$0xff]
      %v1638 = vadd.f32 %v1629, %v1606
      %v1639 = vadd.f32 %v1630, %v1608
      %v1640 = vadd.f32 %v1631, %v1611
      %v1641 = vadd.f32 %v1632, %v1613
      %v1642 = vadd.f32 %v1633, %v1616
      %v1643 = vadd.f32 %v1634, %v1618
      %v1644 = vadd.f32 %v1635, %v1621
      %v1645 = vadd.f32 %v1636, %v1623
      %v1646 = vadd.f32 %v1637, %v1626
      %1647 = vst [vmem:[#allocation2] sm:$0xff] %v1638
      %1648 = vst [vmem:[#allocation2 + $0x8] sm:$0xff] %v1639
      %1649 = vst [vmem:[#allocation2 + $0x10] sm:$0xff] %v1640
      %1650 = vst [vmem:[#allocation2 + $0x18] sm:$0xff] %v1641
      %1651 = vst [vmem:[#allocation2 + $0x20] sm:$0xff] %v1642
      %1652 = vst [vmem:[#allocation2 + $0x28] sm:$0xff] %v1643
      %1653 = vst [vmem:[#allocation2 + $0x30] sm:$0xff] %v1644
      %1654 = vst [vmem:[#allocation2 + $0x38] sm:$0xff] %v1645
      %1655 = vst [vmem:[#allocation2 + $0x40] sm:$0xff] %v1646
      %v1656 = vld [vmem:[%s197 + $0x4] sm:$0xe]
      %v1657 = vld [vmem:[%s197 + $0x8] sm:$0xf]
      %v1658 = vld [vmem:[%s197 + $0xc] sm:$0xf]
      %v1659 = vld [vmem:[%s197 + $0x10] sm:$0xf]
      %v1660 = vld [vmem:[%s197 + $0x14] sm:$0xf]
      %v1661 = vld [vmem:[%s197 + $0x18] sm:$0xf]
      %v1662 = vld [vmem:[%s197 + $0x1c] sm:$0xf]
      %v1663 = vld [vmem:[%s197 + $0x20] sm:$0xf]
      %v1664 = vld [vmem:[%s197 + $0x24] sm:$0xf]
      %v1665 = vld [vmem:[%s197 + $0x28] sm:$0x1]
      %s1666 = scalar_lea.vmem %s1, 512
      %v1667 = vld [vmem:[%s1666] sm:$0xf]
      %v1668 = vld [vmem:[%s1666 + $0x4] sm:$0xf]
      %v1669 = vld [vmem:[%s1666 + $0x8] sm:$0xf]
      %v1670 = vld [vmem:[%s1666 + $0xc] sm:$0xf]
      %v1671 = vld [vmem:[%s1666 + $0x10] sm:$0xf]
      %v1672 = vld [vmem:[%s1666 + $0x14] sm:$0xf]
      %v1673 = vld [vmem:[%s1666 + $0x18] sm:$0xf]
      %v1674 = vld [vmem:[%s1666 + $0x1c] sm:$0xf]
      %v1675 = vld [vmem:[%s1666 + $0x20] sm:$0xf]
      %v1676 = vld [vmem:[%s1666 + $0x24] sm:$0xf]
      %v1677 = vld [vmem:[%s1666 + $0x28] sm:$0xf]
      %v1678 = vld [vmem:[%s1666 + $0x2c] sm:$0xf]
      %v1679 = vld [vmem:[%s1666 + $0x30] sm:$0xf]
      %v1680 = vld [vmem:[%s1666 + $0x34] sm:$0xf]
      %v1681 = vld [vmem:[%s1666 + $0x38] sm:$0xf]
      %v1682 = vld [vmem:[%s1666 + $0x3c] sm:$0xf]
      %v1693 = vunpack.c.l.b16 %v1656
      %v1694 = vunpack.c.l.b16 %v1657
      %v1695 = vunpack.c.l.b16 %v1658
      %v1696 = vunpack.c.l.b16 %v1659
      %v1697 = vunpack.c.l.b16 %v1660
      %v1698 = vunpack.c.l.b16 %v1661
      %v1699 = vunpack.c.l.b16 %v1662
      %v1700 = vunpack.c.l.b16 %v1663
      %v1701 = vunpack.c.l.b16 %v1664
      %v1702 = vunpack.c.l.b16 %v1665
      %v1703 = vpack.c.b16 %v1694, %v1693
      %v1704 = vpack.c.b16 %v1696, %v1695
      %v1705 = vpack.c.b16 %v1698, %v1697
      %v1706 = vpack.c.b16 %v1700, %v1699
      %v1707 = vpack.c.b16 %v1702, %v1701
      %vm1708 = vcmask 1046528
      %v1709 = vrot.slane %v1703, 1
      %v1710 = vrot.slane %v1704, 1
      %v1711 = vsel %vm1708, %v1709, %v1710
      %v1712 = vrot.slane %v1705, 1
      %v1713 = vsel %vm1708, %v1710, %v1712
      %v1714 = vrot.slane %v1706, 1
      %v1715 = vsel %vm1708, %v1712, %v1714
      %v1716 = vrot.slane %v1707, 1
      %v1717 = vsel %vm1708, %v1714, %v1716
      %v1739 = vunpack.c.l.b16 %v1667
      %v1740 = vunpack.c.l.b16 %v1668
      %v1741 = vunpack.c.l.b16 %v1669
      %v1742 = vunpack.c.l.b16 %v1670
      %v1743 = vunpack.c.l.b16 %v1671
      %v1744 = vunpack.c.l.b16 %v1672
      %v1745 = vunpack.c.l.b16 %v1673
      %v1746 = vunpack.c.l.b16 %v1674
      %v1747 = vunpack.c.l.b16 %v1675
      %v1748 = vunpack.c.l.b16 %v1676
      %v1749 = vunpack.c.l.b16 %v1677
      %v1750 = vunpack.c.l.b16 %v1678
      %v1751 = vunpack.c.l.b16 %v1679
      %v1752 = vunpack.c.l.b16 %v1680
      %v1753 = vunpack.c.l.b16 %v1681
      %v1754 = vunpack.c.l.b16 %v1682
      %v1755 = vpack.c.b16 %v1740, %v1739
      %v1756 = vpack.c.b16 %v1742, %v1741
      %v1757 = vpack.c.b16 %v1744, %v1743
      %v1758 = vpack.c.b16 %v1746, %v1745
      %v1759 = vpack.c.b16 %v1748, %v1747
      %v1760 = vpack.c.b16 %v1750, %v1749
      %v1761 = vpack.c.b16 %v1752, %v1751
      %v1762 = vpack.c.b16 %v1754, %v1753
      %1771 = vmatpush.bf16.msra.mxu0 %v1762
      %1772 = vmatpush.bf16.msra.mxu0 %v1761
      %1773 = vmatpush.bf16.msra.mxu0 %v1760
      %1774 = vmatpush.bf16.msra.mxu0 %v1759
      %1775 = vmatpush.bf16.msra.mxu0 %v1758
      %1776 = vmatpush.bf16.msra.mxu0 %v1757
      %1777 = vmatpush.bf16.msra.mxu0 %v1756
      %1778 = vmatpush.bf16.msra.mxu0 %v1755
      %1779 = vmatmul.bf16.gmra.mxu0 %v1711
      %v1780 = vpop.f32.mrf.mxu0
      %v1781 = vadd.f32 0.0, %v1780
      %v1782 = vpop.f32.mrf.mxu0
      %v1783 = vadd.f32 0.0, %v1782
      %1784 = vmatmul.bf16.gmra.mxu0 %v1713
      %v1785 = vpop.f32.mrf.mxu0
      %v1786 = vadd.f32 0.0, %v1785
      %v1787 = vpop.f32.mrf.mxu0
      %v1788 = vadd.f32 0.0, %v1787
      %1789 = vmatmul.bf16.gmra.mxu0 %v1715
      %v1790 = vpop.f32.mrf.mxu0
      %v1791 = vadd.f32 0.0, %v1790
      %v1792 = vpop.f32.mrf.mxu0
      %v1793 = vadd.f32 0.0, %v1792
      %1794 = vmatmul.bf16.gmra.mxu0 %v1717
      %v1795 = vpop.f32.mrf.mxu0
      %v1796 = vadd.f32 0.0, %v1795
      %v1797 = vpop.f32.mrf.mxu0
      %v1798 = vadd.f32 0.0, %v1797
      %1799 = vmatmul.bf16.gmra.mxu0 %v1716
      %v1800 = vpop.f32.mrf.mxu0
      %v1801 = vadd.f32 0.0, %v1800
      %v1802 = vpop.f32.mrf.mxu0
      %1803 = vdwg.mxu0
      %v1804 = vld [vmem:[#allocation2] sm:$0xff]
      %v1805 = vld [vmem:[#allocation2 + $0x8] sm:$0xff]
      %v1806 = vld [vmem:[#allocation2 + $0x10] sm:$0xff]
      %v1807 = vld [vmem:[#allocation2 + $0x18] sm:$0xff]
      %v1808 = vld [vmem:[#allocation2 + $0x20] sm:$0xff]
      %v1809 = vld [vmem:[#allocation2 + $0x28] sm:$0xff]
      %v1810 = vld [vmem:[#allocation2 + $0x30] sm:$0xff]
      %v1811 = vld [vmem:[#allocation2 + $0x38] sm:$0xff]
      %v1812 = vld [vmem:[#allocation2 + $0x40] sm:$0xff]
      %v1813 = vadd.f32 %v1804, %v1781
      %v1814 = vadd.f32 %v1805, %v1783
      %v1815 = vadd.f32 %v1806, %v1786
      %v1816 = vadd.f32 %v1807, %v1788
      %v1817 = vadd.f32 %v1808, %v1791
      %v1818 = vadd.f32 %v1809, %v1793
      %v1819 = vadd.f32 %v1810, %v1796
      %v1820 = vadd.f32 %v1811, %v1798
      %v1821 = vadd.f32 %v1812, %v1801
      %1822 = vst [vmem:[#allocation2] sm:$0xff] %v1813
      %1823 = vst [vmem:[#allocation2 + $0x8] sm:$0xff] %v1814
      %1824 = vst [vmem:[#allocation2 + $0x10] sm:$0xff] %v1815
      %1825 = vst [vmem:[#allocation2 + $0x18] sm:$0xff] %v1816
      %1826 = vst [vmem:[#allocation2 + $0x20] sm:$0xff] %v1817
      %1827 = vst [vmem:[#allocation2 + $0x28] sm:$0xff] %v1818
      %1828 = vst [vmem:[#allocation2 + $0x30] sm:$0xff] %v1819
      %1829 = vst [vmem:[#allocation2 + $0x38] sm:$0xff] %v1820
      %1830 = vst [vmem:[#allocation2 + $0x40] sm:$0xff] %v1821
      %v1831 = vld [vmem:[#allocation2] sm:$0xff]
      %v1832 = vld [vmem:[#allocation2 + $0x8] sm:$0xff]
      %v1833 = vld [vmem:[#allocation2 + $0x10] sm:$0xff]
      %v1834 = vld [vmem:[#allocation2 + $0x18] sm:$0xff]
      %v1835 = vld [vmem:[#allocation2 + $0x20] sm:$0xff]
      %v1836 = vld [vmem:[#allocation2 + $0x28] sm:$0xff]
      %v1837 = vld [vmem:[#allocation2 + $0x30] sm:$0xff]
      %v1838 = vld [vmem:[#allocation2 + $0x38] sm:$0xff]
      %v1839 = vld [vmem:[#allocation2 + $0x40] sm:$0xff]
      %v1840 = vld [vmem:[%s2] sm:$0x1]
      %v1842 = vperm.slane %v1840, 0
      %v1844 = vadd.f32 %v1831, %v1842
      %v1845 = vadd.f32 %v1832, %v1842
      %v1846 = vadd.f32 %v1833, %v1842
      %v1847 = vadd.f32 %v1834, %v1842
      %v1848 = vadd.f32 %v1835, %v1842
      %v1849 = vadd.f32 %v1836, %v1842
      %v1850 = vadd.f32 %v1837, %v1842
      %v1851 = vadd.f32 %v1838, %v1842
      %v1852 = vadd.f32 %v1839, %v1842
      %v1853 = vmax.f32 %v1844, 0.0
      %v1854 = vmax.f32 %v1845, 0.0
      %v1855 = vmax.f32 %v1846, 0.0
      %v1856 = vmax.f32 %v1847, 0.0
      %v1857 = vmax.f32 %v1848, 0.0
      %v1858 = vmax.f32 %v1849, 0.0
      %v1859 = vmax.f32 %v1850, 0.0
      %v1860 = vmax.f32 %v1851, 0.0
      %v1861 = vmax.f32 %v1852, 0.0
      %v1862 = vpack.c.bf16 %v1853, %v1853
      %v1863 = vpack.c.bf16 %v1854, %v1854
      %v1864 = vpack.c.bf16 %v1855, %v1855
      %v1865 = vpack.c.bf16 %v1856, %v1856
      %v1866 = vpack.c.bf16 %v1857, %v1857
      %v1867 = vpack.c.bf16 %v1858, %v1858
      %v1868 = vpack.c.bf16 %v1859, %v1859
      %v1869 = vpack.c.bf16 %v1860, %v1860
      %v1870 = vpack.c.bf16 %v1861, %v1861
      %1871 = vst [vmem:[%s206] sm:$0xf] %v1862
      %1872 = vst [vmem:[%s206 + $0x4] sm:$0xf] %v1863
      %1873 = vst [vmem:[%s206 + $0x8] sm:$0xf] %v1864
      %1874 = vst [vmem:[%s206 + $0xc] sm:$0xf] %v1865
      %1875 = vst [vmem:[%s206 + $0x10] sm:$0xf] %v1866
      %1876 = vst [vmem:[%s206 + $0x14] sm:$0xf] %v1867
      %1877 = vst [vmem:[%s206 + $0x18] sm:$0xf] %v1868
      %1878 = vst [vmem:[%s206 + $0x1c] sm:$0xf] %v1869
      %1879 = vst [vmem:[%s206 + $0x20] sm:$0xf] %v1870
      %p1880 = scmp.lt.s32.totalorder %s18, 1
      %s1881 = scalar_select %p1880, %s18, 1
      %p1882 = scmp.lt.s32.totalorder %s19, 0
      %s1883 = scalar_select %p1882, %s19, 0
      %s1884 = smul.addr %s1883, 9
      %s1885 = smul.addr %s1881, 9
      %s1886 = sadd.s32 %s1884, %s1885
      %s1887 = smul.addr %s1886, 4
      %s1888 = scalar_lea.vmem %s3, %s1887
      // Predicated region
      $region33: #{_lambda_.5} parent=31 // pred_check
        %p1889 = pneg %p116
      $region34: #{_lambda_.5} parent=31 // pred_check_branch
        %1891 = sbr.rel (%p1889) target = $region36
      $region35: #{_lambda_.5} parent=31 // pred_region
        _
      $region36: #{_lambda_.5} parent=31 // pred_fallthru
        _
    $region32: #{_lambda_.5} parent=5 // pred_fallthru
      _
    %p1892 = scmp.le.s32.totalorder 2, %s9
    // Predicated region
    $region37: #{_lambda_.5} parent=5 // pred_check
      %p1893 = pneg %p1892
    $region38: #{_lambda_.5} parent=5 // pred_check_branch
      %1895 = sbr.rel (%p1893) target = $region40
    $region39: #{_lambda_.5} parent=5 // pred_region
      %s1896 = ssub.s32 %s9, 2
      // Predicated region
      $region41: #{_lambda_.5} parent=39 // pred_check
        %p1897 = pneg %p122
      $region42: #{_lambda_.5} parent=39 // pred_check_branch
        %1899 = sbr.rel (%p1897) target = $region44
      $region43: #{_lambda_.5} parent=39 // pred_region
        %p1900 = scmp.lt.s32.totalorder %s20, 1
        %s1901 = scalar_select %p1900, %s20, 1
        %p1902 = scmp.lt.s32.totalorder %s21, 0
        %s1903 = scalar_select %p1902, %s21, 0
        %s1904 = smul.addr %s1903, 9
        %s1905 = smul.addr %s1901, 9
        %s1906 = sadd.s32 %s1904, %s1905
        %s1907 = smul.addr %s1906, 4
        %s1908 = scalar_lea.vmem %s3, %s1907
      $region44: #{_lambda_.5} parent=39 // pred_fallthru
        _
    $region40: #{_lambda_.5} parent=5 // pred_fallthru
      _
  $region6: #{_lambda_.5} parent=0 // loop_footer
    %s13 = sadd.s32 1, %s9
  $region7: #{_lambda_.5} parent=0 // loop_footer_branch
    %8 = sbr.rel target = $region3
  $region8: #{_lambda_.5} parent=0 // loop_exit
    _

// kernel: _lambda_.6
$region0: #{_lambda_.6}
  #allocation0 [shape = 'u32[]', space=smem, size = 0x4, offset = 0x4, fixed_abs, tag = 'smem constant byte address 0x4 - core index']
  #allocation1 [shape = 'u32[72,128]{1,0:T(1,128)}', space=vmem, size = 0x9000, scoped, tag = 'internal scratch']
  #allocation2 [shape = 'f32[24,128]{1,0:T(8,128)}', space=vmem, size = 0x3000, scoped, tag = 'scratch operand']
  %s0 = inlined_call_operand.vmem [shape: bf16[2,4,1,30,128], index: 0, kind: input, shape index: {}]
  %s1 = inlined_call_operand.vmem [shape: bf16[9,128,128], index: 1, kind: input, shape index: {}]
  %s2 = inlined_call_operand.vmem [shape: f32[1,128], index: 2, kind: input, shape index: {}]
  %s3 = inlined_call_operand.vmem [shape: bf16[2,1,24,128], index: 3, kind: output, shape index: {}]
  %s4 = sld [smem:[#allocation0]]
  $region45: #{_lambda_.6} parent=0
    _
  %s6 = ssub.s32 1, %s4
  %s7 = scalar_select 0, %s6, %s4
  loop: start=0, step=1, limit=4
  $region2: #{_lambda_.6} parent=0 // loop_pre_header
    _
  $region3: #{_lambda_.6} parent=0 // loop_header
    %s9 = sphi 0, %s13
    %p10 = scmp.ge.s32.totalorder %s9, 4
    %s16 = sphi 0, %s28
    %s17 = sphi 0, %s24
    %s18 = sphi 0, %s16
    %s19 = sphi 0, %s17
    %s20 = sphi 0, %s18
    %s21 = sphi 0, %s19
    %s33 = sphi 0, %s35
    %s36 = sphi 0, %s33
    %s37 = sphi 0, %s36
    %s53 = sphi 0, %s37
    %s57 = sphi 0, %s57
    %s59 = sphi 0, %s57
    %s60 = sphi 0, %s59
    %s74 = sphi 0, %s60
    %s78 = sphi 0, %s78
    %s80 = sphi 0, %s78
    %s81 = sphi 0, %s80
    %s95 = sphi 0, %s81
    %s103 = sphi 0, %s105
    %s106 = sphi 0, %s103
    %s107 = sphi 0, %s106
    %s123 = sphi 0, %s107
  $region4: #{_lambda_.6} parent=0 // loop_header_branch
    %12 = sbr.rel (%p10) target = $region8
  $region5: #{_lambda_.6} parent=0 // loop_body
    %s14 = ssub.s32 %s9, 1
    %s15 = ssub.s32 %s9, 2
    %s22 = sadd.s32 1, %s17
    %p23 = scmp.ge.s32.totalorder %s22, 1
    %s24 = scalar_select %p23, 0, %s22
    %s25 = sadd.s32 1, %s16
    %s26 = scalar_select %p23, %s25, %s16
    %p27 = scmp.ge.s32.totalorder %s26, 2
    %s28 = scalar_select %p27, 0, %s26
    %s29 = ssub.s32 %s16, %s28
    %s30 = ssub.s32 %s17, %s24
    %s31 = sor.u32 %s29, %s30
    %p32 = scmp.eq.s32.totalorder %s31, 0
    %s34 = sadd.s32 %s33, 1
    %s35 = scalar_select %p32, %s33, %s34
    %p38 = pneg %p32
    %p39 = scmp.eq.s32.totalorder %s9, 1
    %p40 = por %p38, %p39
    %p41 = scmp.ne.s32.totalorder %s33, %s36
    %p42 = scmp.eq.s32.totalorder %s9, 0
    %p43 = por %p41, %p42
    %p44 = scmp.ne.s32.totalorder %s33, %s36
    %p45 = scmp.eq.s32.totalorder %s14, 1
    %p46 = por %p44, %p45
    %p47 = scmp.ne.s32.totalorder %s36, %s37
    %p48 = scmp.eq.s32.totalorder %s14, 0
    %p49 = por %p47, %p48
    %p50 = scmp.ne.s32.totalorder %s36, %s37
    %p51 = scmp.eq.s32.totalorder %s15, 1
    %p52 = por %p50, %p51
    %p54 = scmp.ne.s32.totalorder %s37, %s53
    %p55 = scmp.eq.s32.totalorder %s15, 0
    %p56 = por %p54, %p55
    %s58 = sadd.s32 %s57, 1
    %p61 = scmp.eq.s32.totalorder %s9, 1
    %p62 = scmp.ne.s32.totalorder %s57, %s59
    %p63 = scmp.eq.s32.totalorder %s9, 0
    %p64 = por %p62, %p63
    %p65 = scmp.ne.s32.totalorder %s57, %s59
    %p66 = scmp.eq.s32.totalorder %s14, 1
    %p67 = por %p65, %p66
    %p68 = scmp.ne.s32.totalorder %s59, %s60
    %p69 = scmp.eq.s32.totalorder %s14, 0
    %p70 = por %p68, %p69
    %p71 = scmp.ne.s32.totalorder %s59, %s60
    %p72 = scmp.eq.s32.totalorder %s15, 1
    %p73 = por %p71, %p72
    %p75 = scmp.ne.s32.totalorder %s60, %s74
    %p76 = scmp.eq.s32.totalorder %s15, 0
    %p77 = por %p75, %p76
    %s79 = sadd.s32 %s78, 1
    %p82 = scmp.eq.s32.totalorder %s9, 1
    %p83 = scmp.ne.s32.totalorder %s78, %s80
    %p84 = scmp.eq.s32.totalorder %s9, 0
    %p85 = por %p83, %p84
    %p86 = scmp.ne.s32.totalorder %s78, %s80
    %p87 = scmp.eq.s32.totalorder %s14, 1
    %p88 = por %p86, %p87
    %p89 = scmp.ne.s32.totalorder %s80, %s81
    %p90 = scmp.eq.s32.totalorder %s14, 0
    %p91 = por %p89, %p90
    %p92 = scmp.ne.s32.totalorder %s80, %s81
    %p93 = scmp.eq.s32.totalorder %s15, 1
    %p94 = por %p92, %p93
    %p96 = scmp.ne.s32.totalorder %s81, %s95
    %p97 = scmp.eq.s32.totalorder %s15, 0
    %p98 = por %p96, %p97
    %s99 = ssub.s32 %s16, %s28
    %s100 = ssub.s32 %s17, %s24
    %s101 = sor.u32 %s99, %s100
    %p102 = scmp.eq.s32.totalorder %s101, 0
    %s104 = sadd.s32 %s103, 1
    %s105 = scalar_select %p102, %s103, %s104
    %p108 = pneg %p102
    %p109 = scmp.eq.s32.totalorder %s9, 1
    %p110 = por %p108, %p109
    %p111 = scmp.ne.s32.totalorder %s103, %s106
    %p112 = scmp.eq.s32.totalorder %s9, 0
    %p113 = por %p111, %p112
    %p114 = scmp.ne.s32.totalorder %s103, %s106
    %p115 = scmp.eq.s32.totalorder %s14, 1
    %p116 = por %p114, %p115
    %p117 = scmp.ne.s32.totalorder %s106, %s107
    %p118 = scmp.eq.s32.totalorder %s14, 0
    %p119 = por %p117, %p118
    %p120 = scmp.ne.s32.totalorder %s106, %s107
    %p121 = scmp.eq.s32.totalorder %s15, 1
    %p122 = por %p120, %p121
    %p124 = scmp.ne.s32.totalorder %s107, %s123
    %p125 = scmp.eq.s32.totalorder %s15, 0
    %p126 = por %p124, %p125
    %p127 = scmp.le.s32.totalorder 1, %s9
    %p128 = scmp.lt.s32.totalorder %s9, 3
    %p129 = pnand %p127, %p128
    %p130 = pneg %p129
    // Predicated region
    $region9: #{_lambda_.6} parent=5 // pred_check
      _
    $region10: #{_lambda_.6} parent=5 // pred_check_branch
      %132 = sbr.rel (%p129) target = $region12
    $region11: #{_lambda_.6} parent=5 // pred_region
      %s133 = ssub.s32 %s9, 1
      // Predicated region
      $region13: #{_lambda_.6} parent=11 // pred_check
        %p134 = pneg %p70
      $region14: #{_lambda_.6} parent=11 // pred_check_branch
        %136 = sbr.rel (%p134) target = $region16
      $region15: #{_lambda_.6} parent=11 // pred_region
        _
      $region16: #{_lambda_.6} parent=11 // pred_fallthru
        _
      // Predicated region
      $region17: #{_lambda_.6} parent=11 // pred_check
        %p137 = pneg %p91
      $region18: #{_lambda_.6} parent=11 // pred_check_branch
        %139 = sbr.rel (%p137) target = $region20
      $region19: #{_lambda_.6} parent=11 // pred_region
        _
      $region20: #{_lambda_.6} parent=11 // pred_fallthru
        _
    $region12: #{_lambda_.6} parent=5 // pred_fallthru
      _
    %p140 = scmp.lt.s32.totalorder %s9, 2
    // Predicated region
    $region21: #{_lambda_.6} parent=5 // pred_check
      %p141 = pneg %p140
    $region22: #{_lambda_.6} parent=5 // pred_check_branch
      %143 = sbr.rel (%p141) target = $region24
    $region23: #{_lambda_.6} parent=5 // pred_region
      // Predicated region
      $region25: #{_lambda_.6} parent=23 // pred_check
        %p144 = pneg %p43
      $region26: #{_lambda_.6} parent=23 // pred_check_branch
        %146 = sbr.rel (%p144) target = $region28
      $region27: #{_lambda_.6} parent=23 // pred_region
        %p147 = scmp.lt.s32.totalorder %s16, 1
        %s148 = scalar_select %p147, %s16, 1
        %p149 = scmp.lt.s32.totalorder %s17, 0
        %s150 = scalar_select %p149, %s17, 0
        %s151 = smul.addr %s150, 4
        %s152 = smul.addr %s148, 16
        %s153 = sadd.s32 %s151, %s152
        %s154 = smul.addr %s153, 4
        %s155 = scalar_lea.vmem %s0, %s154
      $region28: #{_lambda_.6} parent=23 // pred_fallthru
        _
    $region24: #{_lambda_.6} parent=5 // pred_fallthru
      _
    %p156 = scmp.le.s32.totalorder 1, %s9
    %p157 = scmp.lt.s32.totalorder %s9, 3
    %p158 = pnand %p156, %p157
    %p159 = pneg %p158
    // Predicated region
    $region29: #{_lambda_.6} parent=5 // pred_check
      _
    $region30: #{_lambda_.6} parent=5 // pred_check_branch
      %161 = sbr.rel (%p158) target = $region32
    $region31: #{_lambda_.6} parent=5 // pred_region
      %s162 = ssub.s32 %s9, 1
      %p163 = scmp.lt.s32.totalorder %s18, 1
      %s164 = scalar_select %p163, %s18, 1
      %p165 = scmp.lt.s32.totalorder %s19, 0
      %s166 = scalar_select %p165, %s19, 0
      %s167 = smul.addr %s166, 4
      %s168 = smul.addr %s164, 16
      %s169 = sadd.s32 %s167, %s168
      %s170 = smul.addr %s169, 4
      %s171 = scalar_lea.vmem %s0, %s170
      %p172 = pneg %p49
      %p173 = pneg %p46
      %p174 = pneg %p70
      %p175 = pneg %p67
      %p176 = pneg %p91
      %p177 = pneg %p88
      %p178 = pneg %p119
      %p179 = pneg %p116
      %p180 = scmp.lt.s32.totalorder %s18, 1
      %s181 = scalar_select %p180, %s18, 1
      %p182 = scmp.lt.s32.totalorder %s19, 0
      %s183 = scalar_select %p182, %s19, 0
      %s184 = smul.addr %s183, 3
      %s185 = smul.addr %s181, 3
      %s186 = sadd.s32 %s184, %s185
      %s187 = smul.addr %s186, 4
      %s188 = scalar_lea.vmem %s3, %s187
      %p189 = scmp.lt.s32.totalorder %s18, 1
      %s190 = scalar_select %p189, %s18, 1
      %p191 = scmp.lt.s32.totalorder %s19, 0
      %s192 = scalar_select %p191, %s19, 0
      %s193 = smul.addr %s192, 4
      %s194 = smul.addr %s190, 16
      %s195 = sadd.s32 %s193, %s194
      %s196 = smul.addr %s195, 4
      %s197 = scalar_lea.vmem %s0, %s196
      %p198 = scmp.lt.s32.totalorder %s18, 1
      %s199 = scalar_select %p198, %s18, 1
      %p200 = scmp.lt.s32.totalorder %s19, 0
      %s201 = scalar_select %p200, %s19, 0
      %s202 = smul.addr %s201, 3
      %s203 = smul.addr %s199, 3
      %s204 = sadd.s32 %s202, %s203
      %s205 = smul.addr %s204, 4
      %s206 = scalar_lea.vmem %s3, %s205
      %v207 = vld [vmem:[%s197] sm:$0xf]
      %v208 = vld [vmem:[%s197 + $0x4] sm:$0xf]
      %v209 = vld [vmem:[%s197 + $0x8] sm:$0xf]
      %v210 = vld [vmem:[%s1] sm:$0xf]
      %v211 = vld [vmem:[%s1 + $0x4] sm:$0xf]
      %v212 = vld [vmem:[%s1 + $0x8] sm:$0xf]
      %v213 = vld [vmem:[%s1 + $0xc] sm:$0xf]
      %v214 = vld [vmem:[%s1 + $0x10] sm:$0xf]
      %v215 = vld [vmem:[%s1 + $0x14] sm:$0xf]
      %v216 = vld [vmem:[%s1 + $0x18] sm:$0xf]
      %v217 = vld [vmem:[%s1 + $0x1c] sm:$0xf]
      %v218 = vld [vmem:[%s1 + $0x20] sm:$0xf]
      %v219 = vld [vmem:[%s1 + $0x24] sm:$0xf]
      %v220 = vld [vmem:[%s1 + $0x28] sm:$0xf]
      %v221 = vld [vmem:[%s1 + $0x2c] sm:$0xf]
      %v222 = vld [vmem:[%s1 + $0x30] sm:$0xf]
      %v223 = vld [vmem:[%s1 + $0x34] sm:$0xf]
      %v224 = vld [vmem:[%s1 + $0x38] sm:$0xf]
      %v225 = vld [vmem:[%s1 + $0x3c] sm:$0xf]
      %v229 = vunpack.c.l.b16 %v207
      %v230 = vunpack.c.l.b16 %v208
      %v231 = vunpack.c.l.b16 %v209
      %v232 = vpack.c.b16 %v230, %v229
      %v233 = vpack.c.b16 %v231, %v231
      %v252 = vunpack.c.l.b16 %v210
      %v253 = vunpack.c.l.b16 %v211
      %v254 = vunpack.c.l.b16 %v212
      %v255 = vunpack.c.l.b16 %v213
      %v256 = vunpack.c.l.b16 %v214
      %v257 = vunpack.c.l.b16 %v215
      %v258 = vunpack.c.l.b16 %v216
      %v259 = vunpack.c.l.b16 %v217
      %v260 = vunpack.c.l.b16 %v218
      %v261 = vunpack.c.l.b16 %v219
      %v262 = vunpack.c.l.b16 %v220
      %v263 = vunpack.c.l.b16 %v221
      %v264 = vunpack.c.l.b16 %v222
      %v265 = vunpack.c.l.b16 %v223
      %v266 = vunpack.c.l.b16 %v224
      %v267 = vunpack.c.l.b16 %v225
      %v268 = vpack.c.b16 %v253, %v252
      %v269 = vpack.c.b16 %v255, %v254
      %v270 = vpack.c.b16 %v257, %v256
      %v271 = vpack.c.b16 %v259, %v258
      %v272 = vpack.c.b16 %v261, %v260
      %v273 = vpack.c.b16 %v263, %v262
      %v274 = vpack.c.b16 %v265, %v264
      %v275 = vpack.c.b16 %v267, %v266
      %284 = vmatpush.bf16.msra.mxu0 %v275
      %285 = vmatpush.bf16.msra.mxu0 %v274
      %286 = vmatpush.bf16.msra.mxu0 %v273
      %287 = vmatpush.bf16.msra.mxu0 %v272
      %288 = vmatpush.bf16.msra.mxu0 %v271
      %289 = vmatpush.bf16.msra.mxu0 %v270
      %290 = vmatpush.bf16.msra.mxu0 %v269
      %291 = vmatpush.bf16.msra.mxu0 %v268
      %292 = vmatmul.bf16.gmra.mxu0 %v232
      %v293 = vpop.f32.mrf.mxu0
      %v294 = vadd.f32 0.0, %v293
      %v295 = vpop.f32.mrf.mxu0
      %v296 = vadd.f32 0.0, %v295
      %297 = vmatmul.bf16.gmra.mxu0 %v233
      %v298 = vpop.f32.mrf.mxu0
      %v299 = vadd.f32 0.0, %v298
      %v300 = vpop.f32.mrf.mxu0
      %301 = vdwg.mxu0
      %302 = vst [vmem:[#allocation2] sm:$0xff] %v294
      %303 = vst [vmem:[#allocation2 + $0x8] sm:$0xff] %v296
      %304 = vst [vmem:[#allocation2 + $0x10] sm:$0xff] %v299
      %s305 = scalar_lea.vmem %s197, 16
      %v306 = vld [vmem:[%s305] sm:$0xf]
      %v307 = vld [vmem:[%s305 + $0x4] sm:$0xf]
      %v308 = vld [vmem:[%s305 + $0x8] sm:$0xf]
      %s309 = scalar_lea.vmem %s1, 64
      %v310 = vld [vmem:[%s309] sm:$0xf]
      %v311 = vld [vmem:[%s309 + $0x4] sm:$0xf]
      %v312 = vld [vmem:[%s309 + $0x8] sm:$0xf]
      %v313 = vld [vmem:[%s309 + $0xc] sm:$0xf]
      %v314 = vld [vmem:[%s309 + $0x10] sm:$0xf]
      %v315 = vld [vmem:[%s309 + $0x14] sm:$0xf]
      %v316 = vld [vmem:[%s309 + $0x18] sm:$0xf]
      %v317 = vld [vmem:[%s309 + $0x1c] sm:$0xf]
      %v318 = vld [vmem:[%s309 + $0x20] sm:$0xf]
      %v319 = vld [vmem:[%s309 + $0x24] sm:$0xf]
      %v320 = vld [vmem:[%s309 + $0x28] sm:$0xf]
      %v321 = vld [vmem:[%s309 + $0x2c] sm:$0xf]
      %v322 = vld [vmem:[%s309 + $0x30] sm:$0xf]
      %v323 = vld [vmem:[%s309 + $0x34] sm:$0xf]
      %v324 = vld [vmem:[%s309 + $0x38] sm:$0xf]
      %v325 = vld [vmem:[%s309 + $0x3c] sm:$0xf]
      %v329 = vunpack.c.l.b16 %v306
      %v330 = vunpack.c.l.b16 %v307
      %v331 = vunpack.c.l.b16 %v308
      %v332 = vpack.c.b16 %v330, %v329
      %v333 = vpack.c.b16 %v331, %v331
      %v352 = vunpack.c.l.b16 %v310
      %v353 = vunpack.c.l.b16 %v311
      %v354 = vunpack.c.l.b16 %v312
      %v355 = vunpack.c.l.b16 %v313
      %v356 = vunpack.c.l.b16 %v314
      %v357 = vunpack.c.l.b16 %v315
      %v358 = vunpack.c.l.b16 %v316
      %v359 = vunpack.c.l.b16 %v317
      %v360 = vunpack.c.l.b16 %v318
      %v361 = vunpack.c.l.b16 %v319
      %v362 = vunpack.c.l.b16 %v320
      %v363 = vunpack.c.l.b16 %v321
      %v364 = vunpack.c.l.b16 %v322
      %v365 = vunpack.c.l.b16 %v323
      %v366 = vunpack.c.l.b16 %v324
      %v367 = vunpack.c.l.b16 %v325
      %v368 = vpack.c.b16 %v353, %v352
      %v369 = vpack.c.b16 %v355, %v354
      %v370 = vpack.c.b16 %v357, %v356
      %v371 = vpack.c.b16 %v359, %v358
      %v372 = vpack.c.b16 %v361, %v360
      %v373 = vpack.c.b16 %v363, %v362
      %v374 = vpack.c.b16 %v365, %v364
      %v375 = vpack.c.b16 %v367, %v366
      %384 = vmatpush.bf16.msra.mxu0 %v375
      %385 = vmatpush.bf16.msra.mxu0 %v374
      %386 = vmatpush.bf16.msra.mxu0 %v373
      %387 = vmatpush.bf16.msra.mxu0 %v372
      %388 = vmatpush.bf16.msra.mxu0 %v371
      %389 = vmatpush.bf16.msra.mxu0 %v370
      %390 = vmatpush.bf16.msra.mxu0 %v369
      %391 = vmatpush.bf16.msra.mxu0 %v368
      %392 = vmatmul.bf16.gmra.mxu0 %v332
      %v393 = vpop.f32.mrf.mxu0
      %v394 = vadd.f32 0.0, %v393
      %v395 = vpop.f32.mrf.mxu0
      %v396 = vadd.f32 0.0, %v395
      %397 = vmatmul.bf16.gmra.mxu0 %v333
      %v398 = vpop.f32.mrf.mxu0
      %v399 = vadd.f32 0.0, %v398
      %v400 = vpop.f32.mrf.mxu0
      %401 = vdwg.mxu0
      %v402 = vld [vmem:[#allocation2] sm:$0xff]
      %v403 = vld [vmem:[#allocation2 + $0x8] sm:$0xff]
      %v404 = vld [vmem:[#allocation2 + $0x10] sm:$0xff]
      %v405 = vadd.f32 %v402, %v394
      %v406 = vadd.f32 %v403, %v396
      %v407 = vadd.f32 %v404, %v399
      %408 = vst [vmem:[#allocation2] sm:$0xff] %v405
      %409 = vst [vmem:[#allocation2 + $0x8] sm:$0xff] %v406
      %410 = vst [vmem:[#allocation2 + $0x10] sm:$0xff] %v407
      %v411 = vld [vmem:[%s197] sm:$0xf]
      %v412 = vld [vmem:[%s197 + $0x4] sm:$0xf]
      %v413 = vld [vmem:[%s197 + $0x8] sm:$0xf]
      %v414 = vld [vmem:[%s197 + $0xc] sm:$0x1]
      %s415 = scalar_lea.vmem %s1, 128
      %v416 = vld [vmem:[%s415] sm:$0xf]
      %v417 = vld [vmem:[%s415 + $0x4] sm:$0xf]
      %v418 = vld [vmem:[%s415 + $0x8] sm:$0xf]
      %v419 = vld [vmem:[%s415 + $0xc] sm:$0xf]
      %v420 = vld [vmem:[%s415 + $0x10] sm:$0xf]
      %v421 = vld [vmem:[%s415 + $0x14] sm:$0xf]
      %v422 = vld [vmem:[%s415 + $0x18] sm:$0xf]
      %v423 = vld [vmem:[%s415 + $0x1c] sm:$0xf]
      %v424 = vld [vmem:[%s415 + $0x20] sm:$0xf]
      %v425 = vld [vmem:[%s415 + $0x24] sm:$0xf]
      %v426 = vld [vmem:[%s415 + $0x28] sm:$0xf]
      %v427 = vld [vmem:[%s415 + $0x2c] sm:$0xf]
      %v428 = vld [vmem:[%s415 + $0x30] sm:$0xf]
      %v429 = vld [vmem:[%s415 + $0x34] sm:$0xf]
      %v430 = vld [vmem:[%s415 + $0x38] sm:$0xf]
      %v431 = vld [vmem:[%s415 + $0x3c] sm:$0xf]
      %v436 = vunpack.c.l.b16 %v411
      %v437 = vunpack.c.l.b16 %v412
      %v438 = vunpack.c.l.b16 %v413
      %v439 = vunpack.c.l.b16 %v414
      %v440 = vpack.c.b16 %v437, %v436
      %v441 = vpack.c.b16 %v439, %v438
      %vm442 = vsmask.f32 7424
      %v444 = vshrl.u32 %v440, 16
      %v446 = vshll.u32 %v440, 16
      %v448 = vrot.slane %v446, 1
      %v449 = vor.u32 %v444, %v448
      %v451 = vshll.u32 %v441, 16
      %v453 = vrot.slane %v451, 1
      %v454 = vsel %vm442, %v449, %v453
      %v455 = vshrl.u32 %v441, 16
      %v457 = vor.u32 %v455, %v453
      %v476 = vunpack.c.l.b16 %v416
      %v477 = vunpack.c.l.b16 %v417
      %v478 = vunpack.c.l.b16 %v418
      %v479 = vunpack.c.l.b16 %v419
      %v480 = vunpack.c.l.b16 %v420
      %v481 = vunpack.c.l.b16 %v421
      %v482 = vunpack.c.l.b16 %v422
      %v483 = vunpack.c.l.b16 %v423
      %v484 = vunpack.c.l.b16 %v424
      %v485 = vunpack.c.l.b16 %v425
      %v486 = vunpack.c.l.b16 %v426
      %v487 = vunpack.c.l.b16 %v427
      %v488 = vunpack.c.l.b16 %v428
      %v489 = vunpack.c.l.b16 %v429
      %v490 = vunpack.c.l.b16 %v430
      %v491 = vunpack.c.l.b16 %v431
      %v492 = vpack.c.b16 %v477, %v476
      %v493 = vpack.c.b16 %v479, %v478
      %v494 = vpack.c.b16 %v481, %v480
      %v495 = vpack.c.b16 %v483, %v482
      %v496 = vpack.c.b16 %v485, %v484
      %v497 = vpack.c.b16 %v487, %v486
      %v498 = vpack.c.b16 %v489, %v488
      %v499 = vpack.c.b16 %v491, %v490
      %508 = vmatpush.bf16.msra.mxu0 %v499
      %509 = vmatpush.bf16.msra.mxu0 %v498
      %510 = vmatpush.bf16.msra.mxu0 %v497
      %511 = vmatpush.bf16.msra.mxu0 %v496
      %512 = vmatpush.bf16.msra.mxu0 %v495
      %513 = vmatpush.bf16.msra.mxu0 %v494
      %514 = vmatpush.bf16.msra.mxu0 %v493
      %515 = vmatpush.bf16.msra.mxu0 %v492
      %516 = vmatmul.bf16.gmra.mxu0 %v454
      %v517 = vpop.f32.mrf.mxu0
      %v518 = vadd.f32 0.0, %v517
      %v519 = vpop.f32.mrf.mxu0
      %v520 = vadd.f32 0.0, %v519
      %521 = vmatmul.bf16.gmra.mxu0 %v457
      %v522 = vpop.f32.mrf.mxu0
      %v523 = vadd.f32 0.0, %v522
      %v524 = vpop.f32.mrf.mxu0
      %525 = vdwg.mxu0
      %v526 = vld [vmem:[#allocation2] sm:$0xff]
      %v527 = vld [vmem:[#allocation2 + $0x8] sm:$0xff]
      %v528 = vld [vmem:[#allocation2 + $0x10] sm:$0xff]
      %v529 = vadd.f32 %v526, %v518
      %v530 = vadd.f32 %v527, %v520
      %v531 = vadd.f32 %v528, %v523
      %532 = vst [vmem:[#allocation2] sm:$0xff] %v529
      %533 = vst [vmem:[#allocation2 + $0x8] sm:$0xff] %v530
      %534 = vst [vmem:[#allocation2 + $0x10] sm:$0xff] %v531
      %s535 = scalar_lea.vmem %s197, 32
      %v536 = vld [vmem:[%s535] sm:$0xf]
      %v537 = vld [vmem:[%s535 + $0x4] sm:$0xf]
      %v538 = vld [vmem:[%s535 + $0x8] sm:$0xf]
      %s539 = scalar_lea.vmem %s1, 192
      %v540 = vld [vmem:[%s539] sm:$0xf]
      %v541 = vld [vmem:[%s539 + $0x4] sm:$0xf]
      %v542 = vld [vmem:[%s539 + $0x8] sm:$0xf]
      %v543 = vld [vmem:[%s539 + $0xc] sm:$0xf]
      %v544 = vld [vmem:[%s539 + $0x10] sm:$0xf]
      %v545 = vld [vmem:[%s539 + $0x14] sm:$0xf]
      %v546 = vld [vmem:[%s539 + $0x18] sm:$0xf]
      %v547 = vld [vmem:[%s539 + $0x1c] sm:$0xf]
      %v548 = vld [vmem:[%s539 + $0x20] sm:$0xf]
      %v549 = vld [vmem:[%s539 + $0x24] sm:$0xf]
      %v550 = vld [vmem:[%s539 + $0x28] sm:$0xf]
      %v551 = vld [vmem:[%s539 + $0x2c] sm:$0xf]
      %v552 = vld [vmem:[%s539 + $0x30] sm:$0xf]
      %v553 = vld [vmem:[%s539 + $0x34] sm:$0xf]
      %v554 = vld [vmem:[%s539 + $0x38] sm:$0xf]
      %v555 = vld [vmem:[%s539 + $0x3c] sm:$0xf]
      %v559 = vunpack.c.l.b16 %v536
      %v560 = vunpack.c.l.b16 %v537
      %v561 = vunpack.c.l.b16 %v538
      %v562 = vpack.c.b16 %v560, %v559
      %v563 = vpack.c.b16 %v561, %v561
      %v582 = vunpack.c.l.b16 %v540
      %v583 = vunpack.c.l.b16 %v541
      %v584 = vunpack.c.l.b16 %v542
      %v585 = vunpack.c.l.b16 %v543
      %v586 = vunpack.c.l.b16 %v544
      %v587 = vunpack.c.l.b16 %v545
      %v588 = vunpack.c.l.b16 %v546
      %v589 = vunpack.c.l.b16 %v547
      %v590 = vunpack.c.l.b16 %v548
      %v591 = vunpack.c.l.b16 %v549
      %v592 = vunpack.c.l.b16 %v550
      %v593 = vunpack.c.l.b16 %v551
      %v594 = vunpack.c.l.b16 %v552
      %v595 = vunpack.c.l.b16 %v553
      %v596 = vunpack.c.l.b16 %v554
      %v597 = vunpack.c.l.b16 %v555
      %v598 = vpack.c.b16 %v583, %v582
      %v599 = vpack.c.b16 %v585, %v584
      %v600 = vpack.c.b16 %v587, %v586
      %v601 = vpack.c.b16 %v589, %v588
      %v602 = vpack.c.b16 %v591, %v590
      %v603 = vpack.c.b16 %v593, %v592
      %v604 = vpack.c.b16 %v595, %v594
      %v605 = vpack.c.b16 %v597, %v596
      %614 = vmatpush.bf16.msra.mxu0 %v605
      %615 = vmatpush.bf16.msra.mxu0 %v604
      %616 = vmatpush.bf16.msra.mxu0 %v603
      %617 = vmatpush.bf16.msra.mxu0 %v602
      %618 = vmatpush.bf16.msra.mxu0 %v601
      %619 = vmatpush.bf16.msra.mxu0 %v600
      %620 = vmatpush.bf16.msra.mxu0 %v599
      %621 = vmatpush.bf16.msra.mxu0 %v598
      %622 = vmatmul.bf16.gmra.mxu0 %v562
      %v623 = vpop.f32.mrf.mxu0
      %v624 = vadd.f32 0.0, %v623
      %v625 = vpop.f32.mrf.mxu0
      %v626 = vadd.f32 0.0, %v625
      %627 = vmatmul.bf16.gmra.mxu0 %v563
      %v628 = vpop.f32.mrf.mxu0
      %v629 = vadd.f32 0.0, %v628
      %v630 = vpop.f32.mrf.mxu0
      %631 = vdwg.mxu0
      %v632 = vld [vmem:[#allocation2] sm:$0xff]
      %v633 = vld [vmem:[#allocation2 + $0x8] sm:$0xff]
      %v634 = vld [vmem:[#allocation2 + $0x10] sm:$0xff]
      %v635 = vadd.f32 %v632, %v624
      %v636 = vadd.f32 %v633, %v626
      %v637 = vadd.f32 %v634, %v629
      %638 = vst [vmem:[#allocation2] sm:$0xff] %v635
      %639 = vst [vmem:[#allocation2 + $0x8] sm:$0xff] %v636
      %640 = vst [vmem:[#allocation2 + $0x10] sm:$0xff] %v637
      %s641 = scalar_lea.vmem %s197, 48
      %v642 = vld [vmem:[%s641] sm:$0xf]
      %v643 = vld [vmem:[%s641 + $0x4] sm:$0xf]
      %v644 = vld [vmem:[%s641 + $0x8] sm:$0xf]
      %s645 = scalar_lea.vmem %s1, 256
      %v646 = vld [vmem:[%s645] sm:$0xf]
      %v647 = vld [vmem:[%s645 + $0x4] sm:$0xf]
      %v648 = vld [vmem:[%s645 + $0x8] sm:$0xf]
      %v649 = vld [vmem:[%s645 + $0xc] sm:$0xf]
      %v650 = vld [vmem:[%s645 + $0x10] sm:$0xf]
      %v651 = vld [vmem:[%s645 + $0x14] sm:$0xf]
      %v652 = vld [vmem:[%s645 + $0x18] sm:$0xf]
      %v653 = vld [vmem:[%s645 + $0x1c] sm:$0xf]
      %v654 = vld [vmem:[%s645 + $0x20] sm:$0xf]
      %v655 = vld [vmem:[%s645 + $0x24] sm:$0xf]
      %v656 = vld [vmem:[%s645 + $0x28] sm:$0xf]
      %v657 = vld [vmem:[%s645 + $0x2c] sm:$0xf]
      %v658 = vld [vmem:[%s645 + $0x30] sm:$0xf]
      %v659 = vld [vmem:[%s645 + $0x34] sm:$0xf]
      %v660 = vld [vmem:[%s645 + $0x38] sm:$0xf]
      %v661 = vld [vmem:[%s645 + $0x3c] sm:$0xf]
      %v665 = vunpack.c.l.b16 %v642
      %v666 = vunpack.c.l.b16 %v643
      %v667 = vunpack.c.l.b16 %v644
      %v668 = vpack.c.b16 %v666, %v665
      %v669 = vpack.c.b16 %v667, %v667
      %v688 = vunpack.c.l.b16 %v646
      %v689 = vunpack.c.l.b16 %v647
      %v690 = vunpack.c.l.b16 %v648
      %v691 = vunpack.c.l.b16 %v649
      %v692 = vunpack.c.l.b16 %v650
      %v693 = vunpack.c.l.b16 %v651
      %v694 = vunpack.c.l.b16 %v652
      %v695 = vunpack.c.l.b16 %v653
      %v696 = vunpack.c.l.b16 %v654
      %v697 = vunpack.c.l.b16 %v655
      %v698 = vunpack.c.l.b16 %v656
      %v699 = vunpack.c.l.b16 %v657
      %v700 = vunpack.c.l.b16 %v658
      %v701 = vunpack.c.l.b16 %v659
      %v702 = vunpack.c.l.b16 %v660
      %v703 = vunpack.c.l.b16 %v661
      %v704 = vpack.c.b16 %v689, %v688
      %v705 = vpack.c.b16 %v691, %v690
      %v706 = vpack.c.b16 %v693, %v692
      %v707 = vpack.c.b16 %v695, %v694
      %v708 = vpack.c.b16 %v697, %v696
      %v709 = vpack.c.b16 %v699, %v698
      %v710 = vpack.c.b16 %v701, %v700
      %v711 = vpack.c.b16 %v703, %v702
      %720 = vmatpush.bf16.msra.mxu0 %v711
      %721 = vmatpush.bf16.msra.mxu0 %v710
      %722 = vmatpush.bf16.msra.mxu0 %v709
      %723 = vmatpush.bf16.msra.mxu0 %v708
      %724 = vmatpush.bf16.msra.mxu0 %v707
      %725 = vmatpush.bf16.msra.mxu0 %v706
      %726 = vmatpush.bf16.msra.mxu0 %v705
      %727 = vmatpush.bf16.msra.mxu0 %v704
      %728 = vmatmul.bf16.gmra.mxu0 %v668
      %v729 = vpop.f32.mrf.mxu0
      %v730 = vadd.f32 0.0, %v729
      %v731 = vpop.f32.mrf.mxu0
      %v732 = vadd.f32 0.0, %v731
      %733 = vmatmul.bf16.gmra.mxu0 %v669
      %v734 = vpop.f32.mrf.mxu0
      %v735 = vadd.f32 0.0, %v734
      %v736 = vpop.f32.mrf.mxu0
      %737 = vdwg.mxu0
      %v738 = vld [vmem:[#allocation2] sm:$0xff]
      %v739 = vld [vmem:[#allocation2 + $0x8] sm:$0xff]
      %v740 = vld [vmem:[#allocation2 + $0x10] sm:$0xff]
      %v741 = vadd.f32 %v738, %v730
      %v742 = vadd.f32 %v739, %v732
      %v743 = vadd.f32 %v740, %v735
      %744 = vst [vmem:[#allocation2] sm:$0xff] %v741
      %745 = vst [vmem:[#allocation2 + $0x8] sm:$0xff] %v742
      %746 = vst [vmem:[#allocation2 + $0x10] sm:$0xff] %v743
      %v747 = vld [vmem:[%s535] sm:$0xf]
      %v748 = vld [vmem:[%s535 + $0x4] sm:$0xf]
      %v749 = vld [vmem:[%s535 + $0x8] sm:$0xf]
      %v750 = vld [vmem:[%s535 + $0xc] sm:$0x1]
      %s751 = scalar_lea.vmem %s1, 320
      %v752 = vld [vmem:[%s751] sm:$0xf]
      %v753 = vld [vmem:[%s751 + $0x4] sm:$0xf]
      %v754 = vld [vmem:[%s751 + $0x8] sm:$0xf]
      %v755 = vld [vmem:[%s751 + $0xc] sm:$0xf]
      %v756 = vld [vmem:[%s751 + $0x10] sm:$0xf]
      %v757 = vld [vmem:[%s751 + $0x14] sm:$0xf]
      %v758 = vld [vmem:[%s751 + $0x18] sm:$0xf]
      %v759 = vld [vmem:[%s751 + $0x1c] sm:$0xf]
      %v760 = vld [vmem:[%s751 + $0x20] sm:$0xf]
      %v761 = vld [vmem:[%s751 + $0x24] sm:$0xf]
      %v762 = vld [vmem:[%s751 + $0x28] sm:$0xf]
      %v763 = vld [vmem:[%s751 + $0x2c] sm:$0xf]
      %v764 = vld [vmem:[%s751 + $0x30] sm:$0xf]
      %v765 = vld [vmem:[%s751 + $0x34] sm:$0xf]
      %v766 = vld [vmem:[%s751 + $0x38] sm:$0xf]
      %v767 = vld [vmem:[%s751 + $0x3c] sm:$0xf]
      %v772 = vunpack.c.l.b16 %v747
      %v773 = vunpack.c.l.b16 %v748
      %v774 = vunpack.c.l.b16 %v749
      %v775 = vunpack.c.l.b16 %v750
      %v776 = vpack.c.b16 %v773, %v772
      %v777 = vpack.c.b16 %v775, %v774
      %v779 = vshrl.u32 %v776, 16
      %v781 = vshll.u32 %v776, 16
      %v783 = vrot.slane %v781, 1
      %v784 = vor.u32 %v779, %v783
      %v786 = vshll.u32 %v777, 16
      %v788 = vrot.slane %v786, 1
      %v789 = vsel %vm442, %v784, %v788
      %v790 = vshrl.u32 %v777, 16
      %v792 = vor.u32 %v790, %v788
      %v811 = vunpack.c.l.b16 %v752
      %v812 = vunpack.c.l.b16 %v753
      %v813 = vunpack.c.l.b16 %v754
      %v814 = vunpack.c.l.b16 %v755
      %v815 = vunpack.c.l.b16 %v756
      %v816 = vunpack.c.l.b16 %v757
      %v817 = vunpack.c.l.b16 %v758
      %v818 = vunpack.c.l.b16 %v759
      %v819 = vunpack.c.l.b16 %v760
      %v820 = vunpack.c.l.b16 %v761
      %v821 = vunpack.c.l.b16 %v762
      %v822 = vunpack.c.l.b16 %v763
      %v823 = vunpack.c.l.b16 %v764
      %v824 = vunpack.c.l.b16 %v765
      %v825 = vunpack.c.l.b16 %v766
      %v826 = vunpack.c.l.b16 %v767
      %v827 = vpack.c.b16 %v812, %v811
      %v828 = vpack.c.b16 %v814, %v813
      %v829 = vpack.c.b16 %v816, %v815
      %v830 = vpack.c.b16 %v818, %v817
      %v831 = vpack.c.b16 %v820, %v819
      %v832 = vpack.c.b16 %v822, %v821
      %v833 = vpack.c.b16 %v824, %v823
      %v834 = vpack.c.b16 %v826, %v825
      %843 = vmatpush.bf16.msra.mxu0 %v834
      %844 = vmatpush.bf16.msra.mxu0 %v833
      %845 = vmatpush.bf16.msra.mxu0 %v832
      %846 = vmatpush.bf16.msra.mxu0 %v831
      %847 = vmatpush.bf16.msra.mxu0 %v830
      %848 = vmatpush.bf16.msra.mxu0 %v829
      %849 = vmatpush.bf16.msra.mxu0 %v828
      %850 = vmatpush.bf16.msra.mxu0 %v827
      %851 = vmatmul.bf16.gmra.mxu0 %v789
      %v852 = vpop.f32.mrf.mxu0
      %v853 = vadd.f32 0.0, %v852
      %v854 = vpop.f32.mrf.mxu0
      %v855 = vadd.f32 0.0, %v854
      %856 = vmatmul.bf16.gmra.mxu0 %v792
      %v857 = vpop.f32.mrf.mxu0
      %v858 = vadd.f32 0.0, %v857
      %v859 = vpop.f32.mrf.mxu0
      %860 = vdwg.mxu0
      %v861 = vld [vmem:[#allocation2] sm:$0xff]
      %v862 = vld [vmem:[#allocation2 + $0x8] sm:$0xff]
      %v863 = vld [vmem:[#allocation2 + $0x10] sm:$0xff]
      %v864 = vadd.f32 %v861, %v853
      %v865 = vadd.f32 %v862, %v855
      %v866 = vadd.f32 %v863, %v858
      %867 = vst [vmem:[#allocation2] sm:$0xff] %v864
      %868 = vst [vmem:[#allocation2 + $0x8] sm:$0xff] %v865
      %869 = vst [vmem:[#allocation2 + $0x10] sm:$0xff] %v866
      %v870 = vld [vmem:[%s197] sm:$0xc]
      %v871 = vld [vmem:[%s197 + $0x4] sm:$0xf]
      %v872 = vld [vmem:[%s197 + $0x8] sm:$0xf]
      %v873 = vld [vmem:[%s197 + $0xc] sm:$0x7]
      %s874 = scalar_lea.vmem %s1, 384
      %v875 = vld [vmem:[%s874] sm:$0xf]
      %v876 = vld [vmem:[%s874 + $0x4] sm:$0xf]
      %v877 = vld [vmem:[%s874 + $0x8] sm:$0xf]
      %v878 = vld [vmem:[%s874 + $0xc] sm:$0xf]
      %v879 = vld [vmem:[%s874 + $0x10] sm:$0xf]
      %v880 = vld [vmem:[%s874 + $0x14] sm:$0xf]
      %v881 = vld [vmem:[%s874 + $0x18] sm:$0xf]
      %v882 = vld [vmem:[%s874 + $0x1c] sm:$0xf]
      %v883 = vld [vmem:[%s874 + $0x20] sm:$0xf]
      %v884 = vld [vmem:[%s874 + $0x24] sm:$0xf]
      %v885 = vld [vmem:[%s874 + $0x28] sm:$0xf]
      %v886 = vld [vmem:[%s874 + $0x2c] sm:$0xf]
      %v887 = vld [vmem:[%s874 + $0x30] sm:$0xf]
      %v888 = vld [vmem:[%s874 + $0x34] sm:$0xf]
      %v889 = vld [vmem:[%s874 + $0x38] sm:$0xf]
      %v890 = vld [vmem:[%s874 + $0x3c] sm:$0xf]
      %v895 = vunpack.c.l.b16 %v870
      %v896 = vunpack.c.l.b16 %v871
      %v897 = vunpack.c.l.b16 %v872
      %v898 = vunpack.c.l.b16 %v873
      %v899 = vpack.c.b16 %v896, %v895
      %v900 = vpack.c.b16 %v898, %v897
      %vm901 = vsmask.f32 5376
      %v903 = vshrl.u32 %v899, 16
      %v905 = vrot.slane %v903, 2
      %v906 = vshll.u32 %v899, 16
      %v908 = vrot.slane %v906, 3
      %v909 = vor.u32 %v905, %v908
      %v911 = vshrl.u32 %v900, 16
      %v913 = vrot.slane %v911, 2
      %v914 = vshll.u32 %v900, 16
      %v916 = vrot.slane %v914, 3
      %v917 = vor.u32 %v913, %v916
      %v918 = vsel %vm901, %v909, %v917
      %v937 = vunpack.c.l.b16 %v875
      %v938 = vunpack.c.l.b16 %v876
      %v939 = vunpack.c.l.b16 %v877
      %v940 = vunpack.c.l.b16 %v878
      %v941 = vunpack.c.l.b16 %v879
      %v942 = vunpack.c.l.b16 %v880
      %v943 = vunpack.c.l.b16 %v881
      %v944 = vunpack.c.l.b16 %v882
      %v945 = vunpack.c.l.b16 %v883
      %v946 = vunpack.c.l.b16 %v884
      %v947 = vunpack.c.l.b16 %v885
      %v948 = vunpack.c.l.b16 %v886
      %v949 = vunpack.c.l.b16 %v887
      %v950 = vunpack.c.l.b16 %v888
      %v951 = vunpack.c.l.b16 %v889
      %v952 = vunpack.c.l.b16 %v890
      %v953 = vpack.c.b16 %v938, %v937
      %v954 = vpack.c.b16 %v940, %v939
      %v955 = vpack.c.b16 %v942, %v941
      %v956 = vpack.c.b16 %v944, %v943
      %v957 = vpack.c.b16 %v946, %v945
      %v958 = vpack.c.b16 %v948, %v947
      %v959 = vpack.c.b16 %v950, %v949
      %v960 = vpack.c.b16 %v952, %v951
      %969 = vmatpush.bf16.msra.mxu0 %v960
      %970 = vmatpush.bf16.msra.mxu0 %v959
      %971 = vmatpush.bf16.msra.mxu0 %v958
      %972 = vmatpush.bf16.msra.mxu0 %v957
      %973 = vmatpush.bf16.msra.mxu0 %v956
      %974 = vmatpush.bf16.msra.mxu0 %v955
      %975 = vmatpush.bf16.msra.mxu0 %v954
      %976 = vmatpush.bf16.msra.mxu0 %v953
      %977 = vmatmul.bf16.gmra.mxu0 %v918
      %v978 = vpop.f32.mrf.mxu0
      %v979 = vadd.f32 0.0, %v978
      %v980 = vpop.f32.mrf.mxu0
      %v981 = vadd.f32 0.0, %v980
      %982 = vmatmul.bf16.gmra.mxu0 %v917
      %v983 = vpop.f32.mrf.mxu0
      %v984 = vadd.f32 0.0, %v983
      %v985 = vpop.f32.mrf.mxu0
      %986 = vdwg.mxu0
      %v987 = vld [vmem:[#allocation2] sm:$0xff]
      %v988 = vld [vmem:[#allocation2 + $0x8] sm:$0xff]
      %v989 = vld [vmem:[#allocation2 + $0x10] sm:$0xff]
      %v990 = vadd.f32 %v987, %v979
      %v991 = vadd.f32 %v988, %v981
      %v992 = vadd.f32 %v989, %v984
      %993 = vst [vmem:[#allocation2] sm:$0xff] %v990
      %994 = vst [vmem:[#allocation2 + $0x8] sm:$0xff] %v991
      %995 = vst [vmem:[#allocation2 + $0x10] sm:$0xff] %v992
      %v996 = vld [vmem:[%s305] sm:$0xc]
      %v997 = vld [vmem:[%s305 + $0x4] sm:$0xf]
      %v998 = vld [vmem:[%s305 + $0x8] sm:$0xf]
      %v999 = vld [vmem:[%s305 + $0xc] sm:$0x7]
      %s1000 = scalar_lea.vmem %s1, 448
      %v1001 = vld [vmem:[%s1000] sm:$0xf]
      %v1002 = vld [vmem:[%s1000 + $0x4] sm:$0xf]
      %v1003 = vld [vmem:[%s1000 + $0x8] sm:$0xf]
      %v1004 = vld [vmem:[%s1000 + $0xc] sm:$0xf]
      %v1005 = vld [vmem:[%s1000 + $0x10] sm:$0xf]
      %v1006 = vld [vmem:[%s1000 + $0x14] sm:$0xf]
      %v1007 = vld [vmem:[%s1000 + $0x18] sm:$0xf]
      %v1008 = vld [vmem:[%s1000 + $0x1c] sm:$0xf]
      %v1009 = vld [vmem:[%s1000 + $0x20] sm:$0xf]
      %v1010 = vld [vmem:[%s1000 + $0x24] sm:$0xf]
      %v1011 = vld [vmem:[%s1000 + $0x28] sm:$0xf]
      %v1012 = vld [vmem:[%s1000 + $0x2c] sm:$0xf]
      %v1013 = vld [vmem:[%s1000 + $0x30] sm:$0xf]
      %v1014 = vld [vmem:[%s1000 + $0x34] sm:$0xf]
      %v1015 = vld [vmem:[%s1000 + $0x38] sm:$0xf]
      %v1016 = vld [vmem:[%s1000 + $0x3c] sm:$0xf]
      %v1021 = vunpack.c.l.b16 %v996
      %v1022 = vunpack.c.l.b16 %v997
      %v1023 = vunpack.c.l.b16 %v998
      %v1024 = vunpack.c.l.b16 %v999
      %v1025 = vpack.c.b16 %v1022, %v1021
      %v1026 = vpack.c.b16 %v1024, %v1023
      %v1028 = vshrl.u32 %v1025, 16
      %v1030 = vrot.slane %v1028, 2
      %v1031 = vshll.u32 %v1025, 16
      %v1033 = vrot.slane %v1031, 3
      %v1034 = vor.u32 %v1030, %v1033
      %v1036 = vshrl.u32 %v1026, 16
      %v1038 = vrot.slane %v1036, 2
      %v1039 = vshll.u32 %v1026, 16
      %v1041 = vrot.slane %v1039, 3
      %v1042 = vor.u32 %v1038, %v1041
      %v1043 = vsel %vm901, %v1034, %v1042
      %v1062 = vunpack.c.l.b16 %v1001
      %v1063 = vunpack.c.l.b16 %v1002
      %v1064 = vunpack.c.l.b16 %v1003
      %v1065 = vunpack.c.l.b16 %v1004
      %v1066 = vunpack.c.l.b16 %v1005
      %v1067 = vunpack.c.l.b16 %v1006
      %v1068 = vunpack.c.l.b16 %v1007
      %v1069 = vunpack.c.l.b16 %v1008
      %v1070 = vunpack.c.l.b16 %v1009
      %v1071 = vunpack.c.l.b16 %v1010
      %v1072 = vunpack.c.l.b16 %v1011
      %v1073 = vunpack.c.l.b16 %v1012
      %v1074 = vunpack.c.l.b16 %v1013
      %v1075 = vunpack.c.l.b16 %v1014
      %v1076 = vunpack.c.l.b16 %v1015
      %v1077 = vunpack.c.l.b16 %v1016
      %v1078 = vpack.c.b16 %v1063, %v1062
      %v1079 = vpack.c.b16 %v1065, %v1064
      %v1080 = vpack.c.b16 %v1067, %v1066
      %v1081 = vpack.c.b16 %v1069, %v1068
      %v1082 = vpack.c.b16 %v1071, %v1070
      %v1083 = vpack.c.b16 %v1073, %v1072
      %v1084 = vpack.c.b16 %v1075, %v1074
      %v1085 = vpack.c.b16 %v1077, %v1076
      %1094 = vmatpush.bf16.msra.mxu0 %v1085
      %1095 = vmatpush.bf16.msra.mxu0 %v1084
      %1096 = vmatpush.bf16.msra.mxu0 %v1083
      %1097 = vmatpush.bf16.msra.mxu0 %v1082
      %1098 = vmatpush.bf16.msra.mxu0 %v1081
      %1099 = vmatpush.bf16.msra.mxu0 %v1080
      %1100 = vmatpush.bf16.msra.mxu0 %v1079
      %1101 = vmatpush.bf16.msra.mxu0 %v1078
      %1102 = vmatmul.bf16.gmra.mxu0 %v1043
      %v1103 = vpop.f32.mrf.mxu0
      %v1104 = vadd.f32 0.0, %v1103
      %v1105 = vpop.f32.mrf.mxu0
      %v1106 = vadd.f32 0.0, %v1105
      %1107 = vmatmul.bf16.gmra.mxu0 %v1042
      %v1108 = vpop.f32.mrf.mxu0
      %v1109 = vadd.f32 0.0, %v1108
      %v1110 = vpop.f32.mrf.mxu0
      %1111 = vdwg.mxu0
      %v1112 = vld [vmem:[#allocation2] sm:$0xff]
      %v1113 = vld [vmem:[#allocation2 + $0x8] sm:$0xff]
      %v1114 = vld [vmem:[#allocation2 + $0x10] sm:$0xff]
      %v1115 = vadd.f32 %v1112, %v1104
      %v1116 = vadd.f32 %v1113, %v1106
      %v1117 = vadd.f32 %v1114, %v1109
      %1118 = vst [vmem:[#allocation2] sm:$0xff] %v1115
      %1119 = vst [vmem:[#allocation2 + $0x8] sm:$0xff] %v1116
      %1120 = vst [vmem:[#allocation2 + $0x10] sm:$0xff] %v1117
      %v1121 = vld [vmem:[%s197] sm:$0x8]
      %v1122 = vld [vmem:[%s197 + $0x4] sm:$0xf]
      %v1123 = vld [vmem:[%s197 + $0x8] sm:$0xf]
      %v1124 = vld [vmem:[%s197 + $0xc] sm:$0x7]
      %s1125 = scalar_lea.vmem %s1, 512
      %v1126 = vld [vmem:[%s1125] sm:$0xf]
      %v1127 = vld [vmem:[%s1125 + $0x4] sm:$0xf]
      %v1128 = vld [vmem:[%s1125 + $0x8] sm:$0xf]
      %v1129 = vld [vmem:[%s1125 + $0xc] sm:$0xf]
      %v1130 = vld [vmem:[%s1125 + $0x10] sm:$0xf]
      %v1131 = vld [vmem:[%s1125 + $0x14] sm:$0xf]
      %v1132 = vld [vmem:[%s1125 + $0x18] sm:$0xf]
      %v1133 = vld [vmem:[%s1125 + $0x1c] sm:$0xf]
      %v1134 = vld [vmem:[%s1125 + $0x20] sm:$0xf]
      %v1135 = vld [vmem:[%s1125 + $0x24] sm:$0xf]
      %v1136 = vld [vmem:[%s1125 + $0x28] sm:$0xf]
      %v1137 = vld [vmem:[%s1125 + $0x2c] sm:$0xf]
      %v1138 = vld [vmem:[%s1125 + $0x30] sm:$0xf]
      %v1139 = vld [vmem:[%s1125 + $0x34] sm:$0xf]
      %v1140 = vld [vmem:[%s1125 + $0x38] sm:$0xf]
      %v1141 = vld [vmem:[%s1125 + $0x3c] sm:$0xf]
      %v1146 = vunpack.c.l.b16 %v1121
      %v1147 = vunpack.c.l.b16 %v1122
      %v1148 = vunpack.c.l.b16 %v1123
      %v1149 = vunpack.c.l.b16 %v1124
      %v1150 = vpack.c.b16 %v1147, %v1146
      %v1151 = vpack.c.b16 %v1149, %v1148
      %vm1152 = vcmask 1044480
      %v1153 = vrot.slane %v1150, 3
      %v1154 = vrot.slane %v1151, 3
      %v1155 = vsel %vm1152, %v1153, %v1154
      %v1174 = vunpack.c.l.b16 %v1126
      %v1175 = vunpack.c.l.b16 %v1127
      %v1176 = vunpack.c.l.b16 %v1128
      %v1177 = vunpack.c.l.b16 %v1129
      %v1178 = vunpack.c.l.b16 %v1130
      %v1179 = vunpack.c.l.b16 %v1131
      %v1180 = vunpack.c.l.b16 %v1132
      %v1181 = vunpack.c.l.b16 %v1133
      %v1182 = vunpack.c.l.b16 %v1134
      %v1183 = vunpack.c.l.b16 %v1135
      %v1184 = vunpack.c.l.b16 %v1136
      %v1185 = vunpack.c.l.b16 %v1137
      %v1186 = vunpack.c.l.b16 %v1138
      %v1187 = vunpack.c.l.b16 %v1139
      %v1188 = vunpack.c.l.b16 %v1140
      %v1189 = vunpack.c.l.b16 %v1141
      %v1190 = vpack.c.b16 %v1175, %v1174
      %v1191 = vpack.c.b16 %v1177, %v1176
      %v1192 = vpack.c.b16 %v1179, %v1178
      %v1193 = vpack.c.b16 %v1181, %v1180
      %v1194 = vpack.c.b16 %v1183, %v1182
      %v1195 = vpack.c.b16 %v1185, %v1184
      %v1196 = vpack.c.b16 %v1187, %v1186
      %v1197 = vpack.c.b16 %v1189, %v1188
      %1206 = vmatpush.bf16.msra.mxu0 %v1197
      %1207 = vmatpush.bf16.msra.mxu0 %v1196
      %1208 = vmatpush.bf16.msra.mxu0 %v1195
      %1209 = vmatpush.bf16.msra.mxu0 %v1194
      %1210 = vmatpush.bf16.msra.mxu0 %v1193
      %1211 = vmatpush.bf16.msra.mxu0 %v1192
      %1212 = vmatpush.bf16.msra.mxu0 %v1191
      %1213 = vmatpush.bf16.msra.mxu0 %v1190
      %1214 = vmatmul.bf16.gmra.mxu0 %v1155
      %v1215 = vpop.f32.mrf.mxu0
      %v1216 = vadd.f32 0.0, %v1215
      %v1217 = vpop.f32.mrf.mxu0
      %v1218 = vadd.f32 0.0, %v1217
      %1219 = vmatmul.bf16.gmra.mxu0 %v1154
      %v1220 = vpop.f32.mrf.mxu0
      %v1221 = vadd.f32 0.0, %v1220
      %v1222 = vpop.f32.mrf.mxu0
      %1223 = vdwg.mxu0
      %v1224 = vld [vmem:[#allocation2] sm:$0xff]
      %v1225 = vld [vmem:[#allocation2 + $0x8] sm:$0xff]
      %v1226 = vld [vmem:[#allocation2 + $0x10] sm:$0xff]
      %v1227 = vadd.f32 %v1224, %v1216
      %v1228 = vadd.f32 %v1225, %v1218
      %v1229 = vadd.f32 %v1226, %v1221
      %1230 = vst [vmem:[#allocation2] sm:$0xff] %v1227
      %1231 = vst [vmem:[#allocation2 + $0x8] sm:$0xff] %v1228
      %1232 = vst [vmem:[#allocation2 + $0x10] sm:$0xff] %v1229
      %v1233 = vld [vmem:[#allocation2] sm:$0xff]
      %v1234 = vld [vmem:[#allocation2 + $0x8] sm:$0xff]
      %v1235 = vld [vmem:[#allocation2 + $0x10] sm:$0xff]
      %v1236 = vld [vmem:[%s2] sm:$0x1]
      %v1238 = vperm.slane %v1236, 0
      %v1240 = vadd.f32 %v1233, %v1238
      %v1241 = vadd.f32 %v1234, %v1238
      %v1242 = vadd.f32 %v1235, %v1238
      %v1243 = vmax.f32 %v1240, 0.0
      %v1244 = vmax.f32 %v1241, 0.0
      %v1245 = vmax.f32 %v1242, 0.0
      %v1246 = vpack.c.bf16 %v1243, %v1243
      %v1247 = vpack.c.bf16 %v1244, %v1244
      %v1248 = vpack.c.bf16 %v1245, %v1245
      %1249 = vst [vmem:[%s206] sm:$0xf] %v1246
      %1250 = vst [vmem:[%s206 + $0x4] sm:$0xf] %v1247
      %1251 = vst [vmem:[%s206 + $0x8] sm:$0xf] %v1248
      %p1252 = scmp.lt.s32.totalorder %s18, 1
      %s1253 = scalar_select %p1252, %s18, 1
      %p1254 = scmp.lt.s32.totalorder %s19, 0
      %s1255 = scalar_select %p1254, %s19, 0
      %s1256 = smul.addr %s1255, 3
      %s1257 = smul.addr %s1253, 3
      %s1258 = sadd.s32 %s1256, %s1257
      %s1259 = smul.addr %s1258, 4
      %s1260 = scalar_lea.vmem %s3, %s1259
      // Predicated region
      $region33: #{_lambda_.6} parent=31 // pred_check
        %p1261 = pneg %p116
      $region34: #{_lambda_.6} parent=31 // pred_check_branch
        %1263 = sbr.rel (%p1261) target = $region36
      $region35: #{_lambda_.6} parent=31 // pred_region
        _
      $region36: #{_lambda_.6} parent=31 // pred_fallthru
        _
    $region32: #{_lambda_.6} parent=5 // pred_fallthru
      _
    %p1264 = scmp.le.s32.totalorder 2, %s9
    // Predicated region
    $region37: #{_lambda_.6} parent=5 // pred_check
      %p1265 = pneg %p1264
    $region38: #{_lambda_.6} parent=5 // pred_check_branch
      %1267 = sbr.rel (%p1265) target = $region40
    $region39: #{_lambda_.6} parent=5 // pred_region
      %s1268 = ssub.s32 %s9, 2
      // Predicated region
      $region41: #{_lambda_.6} parent=39 // pred_check
        %p1269 = pneg %p122
      $region42: #{_lambda_.6} parent=39 // pred_check_branch
        %1271 = sbr.rel (%p1269) target = $region44
      $region43: #{_lambda_.6} parent=39 // pred_region
        %p1272 = scmp.lt.s32.totalorder %s20, 1
        %s1273 = scalar_select %p1272, %s20, 1
        %p1274 = scmp.lt.s32.totalorder %s21, 0
        %s1275 = scalar_select %p1274, %s21, 0
        %s1276 = smul.addr %s1275, 3
        %s1277 = smul.addr %s1273, 3
        %s1278 = sadd.s32 %s1276, %s1277
        %s1279 = smul.addr %s1278, 4
        %s1280 = scalar_lea.vmem %s3, %s1279
      $region44: #{_lambda_.6} parent=39 // pred_fallthru
        _
    $region40: #{_lambda_.6} parent=5 // pred_fallthru
      _
  $region6: #{_lambda_.6} parent=0 // loop_footer
    %s13 = sadd.s32 1, %s9
  $region7: #{_lambda_.6} parent=0 // loop_footer_branch
    %8 = sbr.rel target = $region3
  $region8: #{_lambda_.6} parent=0 // loop_exit
    _

// kernel: _lambda_.7
$region0: #{_lambda_.7}
  #allocation0 [shape = 'u32[]', space=smem, size = 0x4, offset = 0x4, fixed_abs, tag = 'smem constant byte address 0x4 - core index']
  #allocation1 [shape = 'u32[72,128]{1,0:T(1,128)}', space=vmem, size = 0x9000, scoped, tag = 'internal scratch']
  #allocation2 [shape = 'f32[8,128]{1,0:T(8,128)}', space=vmem, size = 0x1000, scoped, tag = 'scratch operand']
  %s0 = inlined_call_operand.vmem [shape: bf16[2,4,1,12,128], index: 0, kind: input, shape index: {}]
  %s1 = inlined_call_operand.vmem [shape: bf16[9,128,128], index: 1, kind: input, shape index: {}]
  %s2 = inlined_call_operand.vmem [shape: f32[1,128], index: 2, kind: input, shape index: {}]
  %s3 = inlined_call_operand.vmem [shape: bf16[2,1,8,128], index: 3, kind: output, shape index: {}]
  %s4 = sld [smem:[#allocation0]]
  $region45: #{_lambda_.7} parent=0
    _
  %s6 = ssub.s32 1, %s4
  %s7 = scalar_select 0, %s6, %s4
  loop: start=0, step=1, limit=4
  $region2: #{_lambda_.7} parent=0 // loop_pre_header
    _
  $region3: #{_lambda_.7} parent=0 // loop_header
    %s9 = sphi 0, %s13
    %p10 = scmp.ge.s32.totalorder %s9, 4
    %s16 = sphi 0, %s28
    %s17 = sphi 0, %s24
    %s18 = sphi 0, %s16
    %s19 = sphi 0, %s17
    %s20 = sphi 0, %s18
    %s21 = sphi 0, %s19
    %s33 = sphi 0, %s35
    %s36 = sphi 0, %s33
    %s37 = sphi 0, %s36
    %s53 = sphi 0, %s37
    %s57 = sphi 0, %s57
    %s59 = sphi 0, %s57
    %s60 = sphi 0, %s59
    %s74 = sphi 0, %s60
    %s78 = sphi 0, %s78
    %s80 = sphi 0, %s78
    %s81 = sphi 0, %s80
    %s95 = sphi 0, %s81
    %s103 = sphi 0, %s105
    %s106 = sphi 0, %s103
    %s107 = sphi 0, %s106
    %s123 = sphi 0, %s107
  $region4: #{_lambda_.7} parent=0 // loop_header_branch
    %12 = sbr.rel (%p10) target = $region8
  $region5: #{_lambda_.7} parent=0 // loop_body
    %s14 = ssub.s32 %s9, 1
    %s15 = ssub.s32 %s9, 2
    %s22 = sadd.s32 1, %s17
    %p23 = scmp.ge.s32.totalorder %s22, 1
    %s24 = scalar_select %p23, 0, %s22
    %s25 = sadd.s32 1, %s16
    %s26 = scalar_select %p23, %s25, %s16
    %p27 = scmp.ge.s32.totalorder %s26, 2
    %s28 = scalar_select %p27, 0, %s26
    %s29 = ssub.s32 %s16, %s28
    %s30 = ssub.s32 %s17, %s24
    %s31 = sor.u32 %s29, %s30
    %p32 = scmp.eq.s32.totalorder %s31, 0
    %s34 = sadd.s32 %s33, 1
    %s35 = scalar_select %p32, %s33, %s34
    %p38 = pneg %p32
    %p39 = scmp.eq.s32.totalorder %s9, 1
    %p40 = por %p38, %p39
    %p41 = scmp.ne.s32.totalorder %s33, %s36
    %p42 = scmp.eq.s32.totalorder %s9, 0
    %p43 = por %p41, %p42
    %p44 = scmp.ne.s32.totalorder %s33, %s36
    %p45 = scmp.eq.s32.totalorder %s14, 1
    %p46 = por %p44, %p45
    %p47 = scmp.ne.s32.totalorder %s36, %s37
    %p48 = scmp.eq.s32.totalorder %s14, 0
    %p49 = por %p47, %p48
    %p50 = scmp.ne.s32.totalorder %s36, %s37
    %p51 = scmp.eq.s32.totalorder %s15, 1
    %p52 = por %p50, %p51
    %p54 = scmp.ne.s32.totalorder %s37, %s53
    %p55 = scmp.eq.s32.totalorder %s15, 0
    %p56 = por %p54, %p55
    %s58 = sadd.s32 %s57, 1
    %p61 = scmp.eq.s32.totalorder %s9, 1
    %p62 = scmp.ne.s32.totalorder %s57, %s59
    %p63 = scmp.eq.s32.totalorder %s9, 0
    %p64 = por %p62, %p63
    %p65 = scmp.ne.s32.totalorder %s57, %s59
    %p66 = scmp.eq.s32.totalorder %s14, 1
    %p67 = por %p65, %p66
    %p68 = scmp.ne.s32.totalorder %s59, %s60
    %p69 = scmp.eq.s32.totalorder %s14, 0
    %p70 = por %p68, %p69
    %p71 = scmp.ne.s32.totalorder %s59, %s60
    %p72 = scmp.eq.s32.totalorder %s15, 1
    %p73 = por %p71, %p72
    %p75 = scmp.ne.s32.totalorder %s60, %s74
    %p76 = scmp.eq.s32.totalorder %s15, 0
    %p77 = por %p75, %p76
    %s79 = sadd.s32 %s78, 1
    %p82 = scmp.eq.s32.totalorder %s9, 1
    %p83 = scmp.ne.s32.totalorder %s78, %s80
    %p84 = scmp.eq.s32.totalorder %s9, 0
    %p85 = por %p83, %p84
    %p86 = scmp.ne.s32.totalorder %s78, %s80
    %p87 = scmp.eq.s32.totalorder %s14, 1
    %p88 = por %p86, %p87
    %p89 = scmp.ne.s32.totalorder %s80, %s81
    %p90 = scmp.eq.s32.totalorder %s14, 0
    %p91 = por %p89, %p90
    %p92 = scmp.ne.s32.totalorder %s80, %s81
    %p93 = scmp.eq.s32.totalorder %s15, 1
    %p94 = por %p92, %p93
    %p96 = scmp.ne.s32.totalorder %s81, %s95
    %p97 = scmp.eq.s32.totalorder %s15, 0
    %p98 = por %p96, %p97
    %s99 = ssub.s32 %s16, %s28
    %s100 = ssub.s32 %s17, %s24
    %s101 = sor.u32 %s99, %s100
    %p102 = scmp.eq.s32.totalorder %s101, 0
    %s104 = sadd.s32 %s103, 1
    %s105 = scalar_select %p102, %s103, %s104
    %p108 = pneg %p102
    %p109 = scmp.eq.s32.totalorder %s9, 1
    %p110 = por %p108, %p109
    %p111 = scmp.ne.s32.totalorder %s103, %s106
    %p112 = scmp.eq.s32.totalorder %s9, 0
    %p113 = por %p111, %p112
    %p114 = scmp.ne.s32.totalorder %s103, %s106
    %p115 = scmp.eq.s32.totalorder %s14, 1
    %p116 = por %p114, %p115
    %p117 = scmp.ne.s32.totalorder %s106, %s107
    %p118 = scmp.eq.s32.totalorder %s14, 0
    %p119 = por %p117, %p118
    %p120 = scmp.ne.s32.totalorder %s106, %s107
    %p121 = scmp.eq.s32.totalorder %s15, 1
    %p122 = por %p120, %p121
    %p124 = scmp.ne.s32.totalorder %s107, %s123
    %p125 = scmp.eq.s32.totalorder %s15, 0
    %p126 = por %p124, %p125
    %p127 = scmp.le.s32.totalorder 1, %s9
    %p128 = scmp.lt.s32.totalorder %s9, 3
    %p129 = pnand %p127, %p128
    %p130 = pneg %p129
    // Predicated region
    $region9: #{_lambda_.7} parent=5 // pred_check
      _
    $region10: #{_lambda_.7} parent=5 // pred_check_branch
      %132 = sbr.rel (%p129) target = $region12
    $region11: #{_lambda_.7} parent=5 // pred_region
      %s133 = ssub.s32 %s9, 1
      // Predicated region
      $region13: #{_lambda_.7} parent=11 // pred_check
        %p134 = pneg %p70
      $region14: #{_lambda_.7} parent=11 // pred_check_branch
        %136 = sbr.rel (%p134) target = $region16
      $region15: #{_lambda_.7} parent=11 // pred_region
        _
      $region16: #{_lambda_.7} parent=11 // pred_fallthru
        _
      // Predicated region
      $region17: #{_lambda_.7} parent=11 // pred_check
        %p137 = pneg %p91
      $region18: #{_lambda_.7} parent=11 // pred_check_branch
        %139 = sbr.rel (%p137) target = $region20
      $region19: #{_lambda_.7} parent=11 // pred_region
        _
      $region20: #{_lambda_.7} parent=11 // pred_fallthru
        _
    $region12: #{_lambda_.7} parent=5 // pred_fallthru
      _
    %p140 = scmp.lt.s32.totalorder %s9, 2
    // Predicated region
    $region21: #{_lambda_.7} parent=5 // pred_check
      %p141 = pneg %p140
    $region22: #{_lambda_.7} parent=5 // pred_check_branch
      %143 = sbr.rel (%p141) target = $region24
    $region23: #{_lambda_.7} parent=5 // pred_region
      // Predicated region
      $region25: #{_lambda_.7} parent=23 // pred_check
        %p144 = pneg %p43
      $region26: #{_lambda_.7} parent=23 // pred_check_branch
        %146 = sbr.rel (%p144) target = $region28
      $region27: #{_lambda_.7} parent=23 // pred_region
        %p147 = scmp.lt.s32.totalorder %s16, 1
        %s148 = scalar_select %p147, %s16, 1
        %p149 = scmp.lt.s32.totalorder %s17, 0
        %s150 = scalar_select %p149, %s17, 0
        %s151 = smul.addr %s150, 2
        %s152 = smul.addr %s148, 8
        %s153 = sadd.s32 %s151, %s152
        %s154 = smul.addr %s153, 4
        %s155 = scalar_lea.vmem %s0, %s154
      $region28: #{_lambda_.7} parent=23 // pred_fallthru
        _
    $region24: #{_lambda_.7} parent=5 // pred_fallthru
      _
    %p156 = scmp.le.s32.totalorder 1, %s9
    %p157 = scmp.lt.s32.totalorder %s9, 3
    %p158 = pnand %p156, %p157
    %p159 = pneg %p158
    // Predicated region
    $region29: #{_lambda_.7} parent=5 // pred_check
      _
    $region30: #{_lambda_.7} parent=5 // pred_check_branch
      %161 = sbr.rel (%p158) target = $region32
    $region31: #{_lambda_.7} parent=5 // pred_region
      %s162 = ssub.s32 %s9, 1
      %p163 = scmp.lt.s32.totalorder %s18, 1
      %s164 = scalar_select %p163, %s18, 1
      %p165 = scmp.lt.s32.totalorder %s19, 0
      %s166 = scalar_select %p165, %s19, 0
      %s167 = smul.addr %s166, 2
      %s168 = smul.addr %s164, 8
      %s169 = sadd.s32 %s167, %s168
      %s170 = smul.addr %s169, 4
      %s171 = scalar_lea.vmem %s0, %s170
      %p172 = pneg %p49
      %p173 = pneg %p46
      %p174 = pneg %p70
      %p175 = pneg %p67
      %p176 = pneg %p91
      %p177 = pneg %p88
      %p178 = pneg %p119
      %p179 = pneg %p116
      %p180 = scmp.lt.s32.totalorder %s18, 1
      %s181 = scalar_select %p180, %s18, 1
      %p182 = scmp.lt.s32.totalorder %s19, 0
      %s183 = scalar_select %p182, %s19, 0
      %s184 = sadd.s32 %s183, %s181
      %s185 = smul.addr %s184, 4
      %s186 = scalar_lea.vmem %s3, %s185
      %p187 = scmp.lt.s32.totalorder %s18, 1
      %s188 = scalar_select %p187, %s18, 1
      %p189 = scmp.lt.s32.totalorder %s19, 0
      %s190 = scalar_select %p189, %s19, 0
      %s191 = smul.addr %s190, 2
      %s192 = smul.addr %s188, 8
      %s193 = sadd.s32 %s191, %s192
      %s194 = smul.addr %s193, 4
      %s195 = scalar_lea.vmem %s0, %s194
      %p196 = scmp.lt.s32.totalorder %s18, 1
      %s197 = scalar_select %p196, %s18, 1
      %p198 = scmp.lt.s32.totalorder %s19, 0
      %s199 = scalar_select %p198, %s19, 0
      %s200 = sadd.s32 %s199, %s197
      %s201 = smul.addr %s200, 4
      %s202 = scalar_lea.vmem %s3, %s201
      %v203 = vld [vmem:[%s195] sm:$0xf]
      %v204 = vld [vmem:[%s1] sm:$0xf]
      %v205 = vld [vmem:[%s1 + $0x4] sm:$0xf]
      %v206 = vld [vmem:[%s1 + $0x8] sm:$0xf]
      %v207 = vld [vmem:[%s1 + $0xc] sm:$0xf]
      %v208 = vld [vmem:[%s1 + $0x10] sm:$0xf]
      %v209 = vld [vmem:[%s1 + $0x14] sm:$0xf]
      %v210 = vld [vmem:[%s1 + $0x18] sm:$0xf]
      %v211 = vld [vmem:[%s1 + $0x1c] sm:$0xf]
      %v212 = vld [vmem:[%s1 + $0x20] sm:$0xf]
      %v213 = vld [vmem:[%s1 + $0x24] sm:$0xf]
      %v214 = vld [vmem:[%s1 + $0x28] sm:$0xf]
      %v215 = vld [vmem:[%s1 + $0x2c] sm:$0xf]
      %v216 = vld [vmem:[%s1 + $0x30] sm:$0xf]
      %v217 = vld [vmem:[%s1 + $0x34] sm:$0xf]
      %v218 = vld [vmem:[%s1 + $0x38] sm:$0xf]
      %v219 = vld [vmem:[%s1 + $0x3c] sm:$0xf]
      %v236 = vunpack.c.l.b16 %v204
      %v237 = vunpack.c.l.b16 %v205
      %v238 = vunpack.c.l.b16 %v206
      %v239 = vunpack.c.l.b16 %v207
      %v240 = vunpack.c.l.b16 %v208
      %v241 = vunpack.c.l.b16 %v209
      %v242 = vunpack.c.l.b16 %v210
      %v243 = vunpack.c.l.b16 %v211
      %v244 = vunpack.c.l.b16 %v212
      %v245 = vunpack.c.l.b16 %v213
      %v246 = vunpack.c.l.b16 %v214
      %v247 = vunpack.c.l.b16 %v215
      %v248 = vunpack.c.l.b16 %v216
      %v249 = vunpack.c.l.b16 %v217
      %v250 = vunpack.c.l.b16 %v218
      %v251 = vunpack.c.l.b16 %v219
      %v252 = vpack.c.b16 %v237, %v236
      %v253 = vpack.c.b16 %v239, %v238
      %v254 = vpack.c.b16 %v241, %v240
      %v255 = vpack.c.b16 %v243, %v242
      %v256 = vpack.c.b16 %v245, %v244
      %v257 = vpack.c.b16 %v247, %v246
      %v258 = vpack.c.b16 %v249, %v248
      %v259 = vpack.c.b16 %v251, %v250
      %268 = vmatpush.bf16.msra.mxu0 %v259
      %269 = vmatpush.bf16.msra.mxu0 %v258
      %270 = vmatpush.bf16.msra.mxu0 %v257
      %271 = vmatpush.bf16.msra.mxu0 %v256
      %272 = vmatpush.bf16.msra.mxu0 %v255
      %273 = vmatpush.bf16.msra.mxu0 %v254
      %274 = vmatpush.bf16.msra.mxu0 %v253
      %275 = vmatpush.bf16.msra.mxu0 %v252
      %276 = vmatmul.bf16.gmra.mxu0 %v203
      %v277 = vpop.f32.mrf.mxu0
      %v278 = vadd.f32 0.0, %v277
      %v279 = vpop.f32.mrf.mxu0
      %280 = vdwg.mxu0
      %281 = vst [vmem:[#allocation2] sm:$0xff] %v278
      %s282 = scalar_lea.vmem %s195, 8
      %v283 = vld [vmem:[%s282] sm:$0xf]
      %s284 = scalar_lea.vmem %s1, 64
      %v285 = vld [vmem:[%s284] sm:$0xf]
      %v286 = vld [vmem:[%s284 + $0x4] sm:$0xf]
      %v287 = vld [vmem:[%s284 + $0x8] sm:$0xf]
      %v288 = vld [vmem:[%s284 + $0xc] sm:$0xf]
      %v289 = vld [vmem:[%s284 + $0x10] sm:$0xf]
      %v290 = vld [vmem:[%s284 + $0x14] sm:$0xf]
      %v291 = vld [vmem:[%s284 + $0x18] sm:$0xf]
      %v292 = vld [vmem:[%s284 + $0x1c] sm:$0xf]
      %v293 = vld [vmem:[%s284 + $0x20] sm:$0xf]
      %v294 = vld [vmem:[%s284 + $0x24] sm:$0xf]
      %v295 = vld [vmem:[%s284 + $0x28] sm:$0xf]
      %v296 = vld [vmem:[%s284 + $0x2c] sm:$0xf]
      %v297 = vld [vmem:[%s284 + $0x30] sm:$0xf]
      %v298 = vld [vmem:[%s284 + $0x34] sm:$0xf]
      %v299 = vld [vmem:[%s284 + $0x38] sm:$0xf]
      %v300 = vld [vmem:[%s284 + $0x3c] sm:$0xf]
      %v317 = vunpack.c.l.b16 %v285
      %v318 = vunpack.c.l.b16 %v286
      %v319 = vunpack.c.l.b16 %v287
      %v320 = vunpack.c.l.b16 %v288
      %v321 = vunpack.c.l.b16 %v289
      %v322 = vunpack.c.l.b16 %v290
      %v323 = vunpack.c.l.b16 %v291
      %v324 = vunpack.c.l.b16 %v292
      %v325 = vunpack.c.l.b16 %v293
      %v326 = vunpack.c.l.b16 %v294
      %v327 = vunpack.c.l.b16 %v295
      %v328 = vunpack.c.l.b16 %v296
      %v329 = vunpack.c.l.b16 %v297
      %v330 = vunpack.c.l.b16 %v298
      %v331 = vunpack.c.l.b16 %v299
      %v332 = vunpack.c.l.b16 %v300
      %v333 = vpack.c.b16 %v318, %v317
      %v334 = vpack.c.b16 %v320, %v319
      %v335 = vpack.c.b16 %v322, %v321
      %v336 = vpack.c.b16 %v324, %v323
      %v337 = vpack.c.b16 %v326, %v325
      %v338 = vpack.c.b16 %v328, %v327
      %v339 = vpack.c.b16 %v330, %v329
      %v340 = vpack.c.b16 %v332, %v331
      %349 = vmatpush.bf16.msra.mxu0 %v340
      %350 = vmatpush.bf16.msra.mxu0 %v339
      %351 = vmatpush.bf16.msra.mxu0 %v338
      %352 = vmatpush.bf16.msra.mxu0 %v337
      %353 = vmatpush.bf16.msra.mxu0 %v336
      %354 = vmatpush.bf16.msra.mxu0 %v335
      %355 = vmatpush.bf16.msra.mxu0 %v334
      %356 = vmatpush.bf16.msra.mxu0 %v333
      %357 = vmatmul.bf16.gmra.mxu0 %v283
      %v358 = vpop.f32.mrf.mxu0
      %v359 = vadd.f32 0.0, %v358
      %v360 = vpop.f32.mrf.mxu0
      %361 = vdwg.mxu0
      %v362 = vld [vmem:[#allocation2] sm:$0xff]
      %v363 = vadd.f32 %v362, %v359
      %364 = vst [vmem:[#allocation2] sm:$0xff] %v363
      %v365 = vld [vmem:[%s195] sm:$0xf]
      %v366 = vld [vmem:[%s195 + $0x4] sm:$0x1]
      %s367 = scalar_lea.vmem %s1, 128
      %v368 = vld [vmem:[%s367] sm:$0xf]
      %v369 = vld [vmem:[%s367 + $0x4] sm:$0xf]
      %v370 = vld [vmem:[%s367 + $0x8] sm:$0xf]
      %v371 = vld [vmem:[%s367 + $0xc] sm:$0xf]
      %v372 = vld [vmem:[%s367 + $0x10] sm:$0xf]
      %v373 = vld [vmem:[%s367 + $0x14] sm:$0xf]
      %v374 = vld [vmem:[%s367 + $0x18] sm:$0xf]
      %v375 = vld [vmem:[%s367 + $0x1c] sm:$0xf]
      %v376 = vld [vmem:[%s367 + $0x20] sm:$0xf]
      %v377 = vld [vmem:[%s367 + $0x24] sm:$0xf]
      %v378 = vld [vmem:[%s367 + $0x28] sm:$0xf]
      %v379 = vld [vmem:[%s367 + $0x2c] sm:$0xf]
      %v380 = vld [vmem:[%s367 + $0x30] sm:$0xf]
      %v381 = vld [vmem:[%s367 + $0x34] sm:$0xf]
      %v382 = vld [vmem:[%s367 + $0x38] sm:$0xf]
      %v383 = vld [vmem:[%s367 + $0x3c] sm:$0xf]
      %v386 = vunpack.c.l.b16 %v365
      %v387 = vunpack.c.l.b16 %v366
      %v388 = vpack.c.b16 %v387, %v386
      %v390 = vshrl.u32 %v388, 16
      %v392 = vshll.u32 %v388, 16
      %v394 = vrot.slane %v392, 1
      %v395 = vor.u32 %v390, %v394
      %v413 = vunpack.c.l.b16 %v368
      %v414 = vunpack.c.l.b16 %v369
      %v415 = vunpack.c.l.b16 %v370
      %v416 = vunpack.c.l.b16 %v371
      %v417 = vunpack.c.l.b16 %v372
      %v418 = vunpack.c.l.b16 %v373
      %v419 = vunpack.c.l.b16 %v374
      %v420 = vunpack.c.l.b16 %v375
      %v421 = vunpack.c.l.b16 %v376
      %v422 = vunpack.c.l.b16 %v377
      %v423 = vunpack.c.l.b16 %v378
      %v424 = vunpack.c.l.b16 %v379
      %v425 = vunpack.c.l.b16 %v380
      %v426 = vunpack.c.l.b16 %v381
      %v427 = vunpack.c.l.b16 %v382
      %v428 = vunpack.c.l.b16 %v383
      %v429 = vpack.c.b16 %v414, %v413
      %v430 = vpack.c.b16 %v416, %v415
      %v431 = vpack.c.b16 %v418, %v417
      %v432 = vpack.c.b16 %v420, %v419
      %v433 = vpack.c.b16 %v422, %v421
      %v434 = vpack.c.b16 %v424, %v423
      %v435 = vpack.c.b16 %v426, %v425
      %v436 = vpack.c.b16 %v428, %v427
      %445 = vmatpush.bf16.msra.mxu0 %v436
      %446 = vmatpush.bf16.msra.mxu0 %v435
      %447 = vmatpush.bf16.msra.mxu0 %v434
      %448 = vmatpush.bf16.msra.mxu0 %v433
      %449 = vmatpush.bf16.msra.mxu0 %v432
      %450 = vmatpush.bf16.msra.mxu0 %v431
      %451 = vmatpush.bf16.msra.mxu0 %v430
      %452 = vmatpush.bf16.msra.mxu0 %v429
      %453 = vmatmul.bf16.gmra.mxu0 %v395
      %v454 = vpop.f32.mrf.mxu0
      %v455 = vadd.f32 0.0, %v454
      %v456 = vpop.f32.mrf.mxu0
      %457 = vdwg.mxu0
      %v458 = vld [vmem:[#allocation2] sm:$0xff]
      %v459 = vadd.f32 %v458, %v455
      %460 = vst [vmem:[#allocation2] sm:$0xff] %v459
      %s461 = scalar_lea.vmem %s195, 16
      %v462 = vld [vmem:[%s461] sm:$0xf]
      %s463 = scalar_lea.vmem %s1, 192
      %v464 = vld [vmem:[%s463] sm:$0xf]
      %v465 = vld [vmem:[%s463 + $0x4] sm:$0xf]
      %v466 = vld [vmem:[%s463 + $0x8] sm:$0xf]
      %v467 = vld [vmem:[%s463 + $0xc] sm:$0xf]
      %v468 = vld [vmem:[%s463 + $0x10] sm:$0xf]
      %v469 = vld [vmem:[%s463 + $0x14] sm:$0xf]
      %v470 = vld [vmem:[%s463 + $0x18] sm:$0xf]
      %v471 = vld [vmem:[%s463 + $0x1c] sm:$0xf]
      %v472 = vld [vmem:[%s463 + $0x20] sm:$0xf]
      %v473 = vld [vmem:[%s463 + $0x24] sm:$0xf]
      %v474 = vld [vmem:[%s463 + $0x28] sm:$0xf]
      %v475 = vld [vmem:[%s463 + $0x2c] sm:$0xf]
      %v476 = vld [vmem:[%s463 + $0x30] sm:$0xf]
      %v477 = vld [vmem:[%s463 + $0x34] sm:$0xf]
      %v478 = vld [vmem:[%s463 + $0x38] sm:$0xf]
      %v479 = vld [vmem:[%s463 + $0x3c] sm:$0xf]
      %v496 = vunpack.c.l.b16 %v464
      %v497 = vunpack.c.l.b16 %v465
      %v498 = vunpack.c.l.b16 %v466
      %v499 = vunpack.c.l.b16 %v467
      %v500 = vunpack.c.l.b16 %v468
      %v501 = vunpack.c.l.b16 %v469
      %v502 = vunpack.c.l.b16 %v470
      %v503 = vunpack.c.l.b16 %v471
      %v504 = vunpack.c.l.b16 %v472
      %v505 = vunpack.c.l.b16 %v473
      %v506 = vunpack.c.l.b16 %v474
      %v507 = vunpack.c.l.b16 %v475
      %v508 = vunpack.c.l.b16 %v476
      %v509 = vunpack.c.l.b16 %v477
      %v510 = vunpack.c.l.b16 %v478
      %v511 = vunpack.c.l.b16 %v479
      %v512 = vpack.c.b16 %v497, %v496
      %v513 = vpack.c.b16 %v499, %v498
      %v514 = vpack.c.b16 %v501, %v500
      %v515 = vpack.c.b16 %v503, %v502
      %v516 = vpack.c.b16 %v505, %v504
      %v517 = vpack.c.b16 %v507, %v506
      %v518 = vpack.c.b16 %v509, %v508
      %v519 = vpack.c.b16 %v511, %v510
      %528 = vmatpush.bf16.msra.mxu0 %v519
      %529 = vmatpush.bf16.msra.mxu0 %v518
      %530 = vmatpush.bf16.msra.mxu0 %v517
      %531 = vmatpush.bf16.msra.mxu0 %v516
      %532 = vmatpush.bf16.msra.mxu0 %v515
      %533 = vmatpush.bf16.msra.mxu0 %v514
      %534 = vmatpush.bf16.msra.mxu0 %v513
      %535 = vmatpush.bf16.msra.mxu0 %v512
      %536 = vmatmul.bf16.gmra.mxu0 %v462
      %v537 = vpop.f32.mrf.mxu0
      %v538 = vadd.f32 0.0, %v537
      %v539 = vpop.f32.mrf.mxu0
      %540 = vdwg.mxu0
      %v541 = vld [vmem:[#allocation2] sm:$0xff]
      %v542 = vadd.f32 %v541, %v538
      %543 = vst [vmem:[#allocation2] sm:$0xff] %v542
      %s544 = scalar_lea.vmem %s195, 24
      %v545 = vld [vmem:[%s544] sm:$0xf]
      %s546 = scalar_lea.vmem %s1, 256
      %v547 = vld [vmem:[%s546] sm:$0xf]
      %v548 = vld [vmem:[%s546 + $0x4] sm:$0xf]
      %v549 = vld [vmem:[%s546 + $0x8] sm:$0xf]
      %v550 = vld [vmem:[%s546 + $0xc] sm:$0xf]
      %v551 = vld [vmem:[%s546 + $0x10] sm:$0xf]
      %v552 = vld [vmem:[%s546 + $0x14] sm:$0xf]
      %v553 = vld [vmem:[%s546 + $0x18] sm:$0xf]
      %v554 = vld [vmem:[%s546 + $0x1c] sm:$0xf]
      %v555 = vld [vmem:[%s546 + $0x20] sm:$0xf]
      %v556 = vld [vmem:[%s546 + $0x24] sm:$0xf]
      %v557 = vld [vmem:[%s546 + $0x28] sm:$0xf]
      %v558 = vld [vmem:[%s546 + $0x2c] sm:$0xf]
      %v559 = vld [vmem:[%s546 + $0x30] sm:$0xf]
      %v560 = vld [vmem:[%s546 + $0x34] sm:$0xf]
      %v561 = vld [vmem:[%s546 + $0x38] sm:$0xf]
      %v562 = vld [vmem:[%s546 + $0x3c] sm:$0xf]
      %v579 = vunpack.c.l.b16 %v547
      %v580 = vunpack.c.l.b16 %v548
      %v581 = vunpack.c.l.b16 %v549
      %v582 = vunpack.c.l.b16 %v550
      %v583 = vunpack.c.l.b16 %v551
      %v584 = vunpack.c.l.b16 %v552
      %v585 = vunpack.c.l.b16 %v553
      %v586 = vunpack.c.l.b16 %v554
      %v587 = vunpack.c.l.b16 %v555
      %v588 = vunpack.c.l.b16 %v556
      %v589 = vunpack.c.l.b16 %v557
      %v590 = vunpack.c.l.b16 %v558
      %v591 = vunpack.c.l.b16 %v559
      %v592 = vunpack.c.l.b16 %v560
      %v593 = vunpack.c.l.b16 %v561
      %v594 = vunpack.c.l.b16 %v562
      %v595 = vpack.c.b16 %v580, %v579
      %v596 = vpack.c.b16 %v582, %v581
      %v597 = vpack.c.b16 %v584, %v583
      %v598 = vpack.c.b16 %v586, %v585
      %v599 = vpack.c.b16 %v588, %v587
      %v600 = vpack.c.b16 %v590, %v589
      %v601 = vpack.c.b16 %v592, %v591
      %v602 = vpack.c.b16 %v594, %v593
      %611 = vmatpush.bf16.msra.mxu0 %v602
      %612 = vmatpush.bf16.msra.mxu0 %v601
      %613 = vmatpush.bf16.msra.mxu0 %v600
      %614 = vmatpush.bf16.msra.mxu0 %v599
      %615 = vmatpush.bf16.msra.mxu0 %v598
      %616 = vmatpush.bf16.msra.mxu0 %v597
      %617 = vmatpush.bf16.msra.mxu0 %v596
      %618 = vmatpush.bf16.msra.mxu0 %v595
      %619 = vmatmul.bf16.gmra.mxu0 %v545
      %v620 = vpop.f32.mrf.mxu0
      %v621 = vadd.f32 0.0, %v620
      %v622 = vpop.f32.mrf.mxu0
      %623 = vdwg.mxu0
      %v624 = vld [vmem:[#allocation2] sm:$0xff]
      %v625 = vadd.f32 %v624, %v621
      %626 = vst [vmem:[#allocation2] sm:$0xff] %v625
      %v627 = vld [vmem:[%s461] sm:$0xf]
      %v628 = vld [vmem:[%s461 + $0x4] sm:$0x1]
      %s629 = scalar_lea.vmem %s1, 320
      %v630 = vld [vmem:[%s629] sm:$0xf]
      %v631 = vld [vmem:[%s629 + $0x4] sm:$0xf]
      %v632 = vld [vmem:[%s629 + $0x8] sm:$0xf]
      %v633 = vld [vmem:[%s629 + $0xc] sm:$0xf]
      %v634 = vld [vmem:[%s629 + $0x10] sm:$0xf]
      %v635 = vld [vmem:[%s629 + $0x14] sm:$0xf]
      %v636 = vld [vmem:[%s629 + $0x18] sm:$0xf]
      %v637 = vld [vmem:[%s629 + $0x1c] sm:$0xf]
      %v638 = vld [vmem:[%s629 + $0x20] sm:$0xf]
      %v639 = vld [vmem:[%s629 + $0x24] sm:$0xf]
      %v640 = vld [vmem:[%s629 + $0x28] sm:$0xf]
      %v641 = vld [vmem:[%s629 + $0x2c] sm:$0xf]
      %v642 = vld [vmem:[%s629 + $0x30] sm:$0xf]
      %v643 = vld [vmem:[%s629 + $0x34] sm:$0xf]
      %v644 = vld [vmem:[%s629 + $0x38] sm:$0xf]
      %v645 = vld [vmem:[%s629 + $0x3c] sm:$0xf]
      %v648 = vunpack.c.l.b16 %v627
      %v649 = vunpack.c.l.b16 %v628
      %v650 = vpack.c.b16 %v649, %v648
      %v652 = vshrl.u32 %v650, 16
      %v654 = vshll.u32 %v650, 16
      %v656 = vrot.slane %v654, 1
      %v657 = vor.u32 %v652, %v656
      %v675 = vunpack.c.l.b16 %v630
      %v676 = vunpack.c.l.b16 %v631
      %v677 = vunpack.c.l.b16 %v632
      %v678 = vunpack.c.l.b16 %v633
      %v679 = vunpack.c.l.b16 %v634
      %v680 = vunpack.c.l.b16 %v635
      %v681 = vunpack.c.l.b16 %v636
      %v682 = vunpack.c.l.b16 %v637
      %v683 = vunpack.c.l.b16 %v638
      %v684 = vunpack.c.l.b16 %v639
      %v685 = vunpack.c.l.b16 %v640
      %v686 = vunpack.c.l.b16 %v641
      %v687 = vunpack.c.l.b16 %v642
      %v688 = vunpack.c.l.b16 %v643
      %v689 = vunpack.c.l.b16 %v644
      %v690 = vunpack.c.l.b16 %v645
      %v691 = vpack.c.b16 %v676, %v675
      %v692 = vpack.c.b16 %v678, %v677
      %v693 = vpack.c.b16 %v680, %v679
      %v694 = vpack.c.b16 %v682, %v681
      %v695 = vpack.c.b16 %v684, %v683
      %v696 = vpack.c.b16 %v686, %v685
      %v697 = vpack.c.b16 %v688, %v687
      %v698 = vpack.c.b16 %v690, %v689
      %707 = vmatpush.bf16.msra.mxu0 %v698
      %708 = vmatpush.bf16.msra.mxu0 %v697
      %709 = vmatpush.bf16.msra.mxu0 %v696
      %710 = vmatpush.bf16.msra.mxu0 %v695
      %711 = vmatpush.bf16.msra.mxu0 %v694
      %712 = vmatpush.bf16.msra.mxu0 %v693
      %713 = vmatpush.bf16.msra.mxu0 %v692
      %714 = vmatpush.bf16.msra.mxu0 %v691
      %715 = vmatmul.bf16.gmra.mxu0 %v657
      %v716 = vpop.f32.mrf.mxu0
      %v717 = vadd.f32 0.0, %v716
      %v718 = vpop.f32.mrf.mxu0
      %719 = vdwg.mxu0
      %v720 = vld [vmem:[#allocation2] sm:$0xff]
      %v721 = vadd.f32 %v720, %v717
      %722 = vst [vmem:[#allocation2] sm:$0xff] %v721
      %v723 = vld [vmem:[%s195] sm:$0xe]
      %v724 = vld [vmem:[%s195 + $0x4] sm:$0x3]
      %s725 = scalar_lea.vmem %s1, 384
      %v726 = vld [vmem:[%s725] sm:$0xf]
      %v727 = vld [vmem:[%s725 + $0x4] sm:$0xf]
      %v728 = vld [vmem:[%s725 + $0x8] sm:$0xf]
      %v729 = vld [vmem:[%s725 + $0xc] sm:$0xf]
      %v730 = vld [vmem:[%s725 + $0x10] sm:$0xf]
      %v731 = vld [vmem:[%s725 + $0x14] sm:$0xf]
      %v732 = vld [vmem:[%s725 + $0x18] sm:$0xf]
      %v733 = vld [vmem:[%s725 + $0x1c] sm:$0xf]
      %v734 = vld [vmem:[%s725 + $0x20] sm:$0xf]
      %v735 = vld [vmem:[%s725 + $0x24] sm:$0xf]
      %v736 = vld [vmem:[%s725 + $0x28] sm:$0xf]
      %v737 = vld [vmem:[%s725 + $0x2c] sm:$0xf]
      %v738 = vld [vmem:[%s725 + $0x30] sm:$0xf]
      %v739 = vld [vmem:[%s725 + $0x34] sm:$0xf]
      %v740 = vld [vmem:[%s725 + $0x38] sm:$0xf]
      %v741 = vld [vmem:[%s725 + $0x3c] sm:$0xf]
      %v744 = vunpack.c.l.b16 %v723
      %v745 = vunpack.c.l.b16 %v724
      %v746 = vpack.c.b16 %v745, %v744
      %v748 = vshrl.u32 %v746, 16
      %v750 = vrot.slane %v748, 1
      %v751 = vshll.u32 %v746, 16
      %v753 = vrot.slane %v751, 2
      %v754 = vor.u32 %v750, %v753
      %v772 = vunpack.c.l.b16 %v726
      %v773 = vunpack.c.l.b16 %v727
      %v774 = vunpack.c.l.b16 %v728
      %v775 = vunpack.c.l.b16 %v729
      %v776 = vunpack.c.l.b16 %v730
      %v777 = vunpack.c.l.b16 %v731
      %v778 = vunpack.c.l.b16 %v732
      %v779 = vunpack.c.l.b16 %v733
      %v780 = vunpack.c.l.b16 %v734
      %v781 = vunpack.c.l.b16 %v735
      %v782 = vunpack.c.l.b16 %v736
      %v783 = vunpack.c.l.b16 %v737
      %v784 = vunpack.c.l.b16 %v738
      %v785 = vunpack.c.l.b16 %v739
      %v786 = vunpack.c.l.b16 %v740
      %v787 = vunpack.c.l.b16 %v741
      %v788 = vpack.c.b16 %v773, %v772
      %v789 = vpack.c.b16 %v775, %v774
      %v790 = vpack.c.b16 %v777, %v776
      %v791 = vpack.c.b16 %v779, %v778
      %v792 = vpack.c.b16 %v781, %v780
      %v793 = vpack.c.b16 %v783, %v782
      %v794 = vpack.c.b16 %v785, %v784
      %v795 = vpack.c.b16 %v787, %v786
      %804 = vmatpush.bf16.msra.mxu0 %v795
      %805 = vmatpush.bf16.msra.mxu0 %v794
      %806 = vmatpush.bf16.msra.mxu0 %v793
      %807 = vmatpush.bf16.msra.mxu0 %v792
      %808 = vmatpush.bf16.msra.mxu0 %v791
      %809 = vmatpush.bf16.msra.mxu0 %v790
      %810 = vmatpush.bf16.msra.mxu0 %v789
      %811 = vmatpush.bf16.msra.mxu0 %v788
      %812 = vmatmul.bf16.gmra.mxu0 %v754
      %v813 = vpop.f32.mrf.mxu0
      %v814 = vadd.f32 0.0, %v813
      %v815 = vpop.f32.mrf.mxu0
      %816 = vdwg.mxu0
      %v817 = vld [vmem:[#allocation2] sm:$0xff]
      %v818 = vadd.f32 %v817, %v814
      %819 = vst [vmem:[#allocation2] sm:$0xff] %v818
      %v820 = vld [vmem:[%s282] sm:$0xe]
      %v821 = vld [vmem:[%s282 + $0x4] sm:$0x3]
      %s822 = scalar_lea.vmem %s1, 448
      %v823 = vld [vmem:[%s822] sm:$0xf]
      %v824 = vld [vmem:[%s822 + $0x4] sm:$0xf]
      %v825 = vld [vmem:[%s822 + $0x8] sm:$0xf]
      %v826 = vld [vmem:[%s822 + $0xc] sm:$0xf]
      %v827 = vld [vmem:[%s822 + $0x10] sm:$0xf]
      %v828 = vld [vmem:[%s822 + $0x14] sm:$0xf]
      %v829 = vld [vmem:[%s822 + $0x18] sm:$0xf]
      %v830 = vld [vmem:[%s822 + $0x1c] sm:$0xf]
      %v831 = vld [vmem:[%s822 + $0x20] sm:$0xf]
      %v832 = vld [vmem:[%s822 + $0x24] sm:$0xf]
      %v833 = vld [vmem:[%s822 + $0x28] sm:$0xf]
      %v834 = vld [vmem:[%s822 + $0x2c] sm:$0xf]
      %v835 = vld [vmem:[%s822 + $0x30] sm:$0xf]
      %v836 = vld [vmem:[%s822 + $0x34] sm:$0xf]
      %v837 = vld [vmem:[%s822 + $0x38] sm:$0xf]
      %v838 = vld [vmem:[%s822 + $0x3c] sm:$0xf]
      %v841 = vunpack.c.l.b16 %v820
      %v842 = vunpack.c.l.b16 %v821
      %v843 = vpack.c.b16 %v842, %v841
      %v845 = vshrl.u32 %v843, 16
      %v847 = vrot.slane %v845, 1
      %v848 = vshll.u32 %v843, 16
      %v850 = vrot.slane %v848, 2
      %v851 = vor.u32 %v847, %v850
      %v869 = vunpack.c.l.b16 %v823
      %v870 = vunpack.c.l.b16 %v824
      %v871 = vunpack.c.l.b16 %v825
      %v872 = vunpack.c.l.b16 %v826
      %v873 = vunpack.c.l.b16 %v827
      %v874 = vunpack.c.l.b16 %v828
      %v875 = vunpack.c.l.b16 %v829
      %v876 = vunpack.c.l.b16 %v830
      %v877 = vunpack.c.l.b16 %v831
      %v878 = vunpack.c.l.b16 %v832
      %v879 = vunpack.c.l.b16 %v833
      %v880 = vunpack.c.l.b16 %v834
      %v881 = vunpack.c.l.b16 %v835
      %v882 = vunpack.c.l.b16 %v836
      %v883 = vunpack.c.l.b16 %v837
      %v884 = vunpack.c.l.b16 %v838
      %v885 = vpack.c.b16 %v870, %v869
      %v886 = vpack.c.b16 %v872, %v871
      %v887 = vpack.c.b16 %v874, %v873
      %v888 = vpack.c.b16 %v876, %v875
      %v889 = vpack.c.b16 %v878, %v877
      %v890 = vpack.c.b16 %v880, %v879
      %v891 = vpack.c.b16 %v882, %v881
      %v892 = vpack.c.b16 %v884, %v883
      %901 = vmatpush.bf16.msra.mxu0 %v892
      %902 = vmatpush.bf16.msra.mxu0 %v891
      %903 = vmatpush.bf16.msra.mxu0 %v890
      %904 = vmatpush.bf16.msra.mxu0 %v889
      %905 = vmatpush.bf16.msra.mxu0 %v888
      %906 = vmatpush.bf16.msra.mxu0 %v887
      %907 = vmatpush.bf16.msra.mxu0 %v886
      %908 = vmatpush.bf16.msra.mxu0 %v885
      %909 = vmatmul.bf16.gmra.mxu0 %v851
      %v910 = vpop.f32.mrf.mxu0
      %v911 = vadd.f32 0.0, %v910
      %v912 = vpop.f32.mrf.mxu0
      %913 = vdwg.mxu0
      %v914 = vld [vmem:[#allocation2] sm:$0xff]
      %v915 = vadd.f32 %v914, %v911
      %916 = vst [vmem:[#allocation2] sm:$0xff] %v915
      %v917 = vld [vmem:[%s195] sm:$0xc]
      %v918 = vld [vmem:[%s195 + $0x4] sm:$0x3]
      %s919 = scalar_lea.vmem %s1, 512
      %v920 = vld [vmem:[%s919] sm:$0xf]
      %v921 = vld [vmem:[%s919 + $0x4] sm:$0xf]
      %v922 = vld [vmem:[%s919 + $0x8] sm:$0xf]
      %v923 = vld [vmem:[%s919 + $0xc] sm:$0xf]
      %v924 = vld [vmem:[%s919 + $0x10] sm:$0xf]
      %v925 = vld [vmem:[%s919 + $0x14] sm:$0xf]
      %v926 = vld [vmem:[%s919 + $0x18] sm:$0xf]
      %v927 = vld [vmem:[%s919 + $0x1c] sm:$0xf]
      %v928 = vld [vmem:[%s919 + $0x20] sm:$0xf]
      %v929 = vld [vmem:[%s919 + $0x24] sm:$0xf]
      %v930 = vld [vmem:[%s919 + $0x28] sm:$0xf]
      %v931 = vld [vmem:[%s919 + $0x2c] sm:$0xf]
      %v932 = vld [vmem:[%s919 + $0x30] sm:$0xf]
      %v933 = vld [vmem:[%s919 + $0x34] sm:$0xf]
      %v934 = vld [vmem:[%s919 + $0x38] sm:$0xf]
      %v935 = vld [vmem:[%s919 + $0x3c] sm:$0xf]
      %v938 = vunpack.c.l.b16 %v917
      %v939 = vunpack.c.l.b16 %v918
      %v940 = vpack.c.b16 %v939, %v938
      %v941 = vrot.slane %v940, 2
      %v959 = vunpack.c.l.b16 %v920
      %v960 = vunpack.c.l.b16 %v921
      %v961 = vunpack.c.l.b16 %v922
      %v962 = vunpack.c.l.b16 %v923
      %v963 = vunpack.c.l.b16 %v924
      %v964 = vunpack.c.l.b16 %v925
      %v965 = vunpack.c.l.b16 %v926
      %v966 = vunpack.c.l.b16 %v927
      %v967 = vunpack.c.l.b16 %v928
      %v968 = vunpack.c.l.b16 %v929
      %v969 = vunpack.c.l.b16 %v930
      %v970 = vunpack.c.l.b16 %v931
      %v971 = vunpack.c.l.b16 %v932
      %v972 = vunpack.c.l.b16 %v933
      %v973 = vunpack.c.l.b16 %v934
      %v974 = vunpack.c.l.b16 %v935
      %v975 = vpack.c.b16 %v960, %v959
      %v976 = vpack.c.b16 %v962, %v961
      %v977 = vpack.c.b16 %v964, %v963
      %v978 = vpack.c.b16 %v966, %v965
      %v979 = vpack.c.b16 %v968, %v967
      %v980 = vpack.c.b16 %v970, %v969
      %v981 = vpack.c.b16 %v972, %v971
      %v982 = vpack.c.b16 %v974, %v973
      %991 = vmatpush.bf16.msra.mxu0 %v982
      %992 = vmatpush.bf16.msra.mxu0 %v981
      %993 = vmatpush.bf16.msra.mxu0 %v980
      %994 = vmatpush.bf16.msra.mxu0 %v979
      %995 = vmatpush.bf16.msra.mxu0 %v978
      %996 = vmatpush.bf16.msra.mxu0 %v977
      %997 = vmatpush.bf16.msra.mxu0 %v976
      %998 = vmatpush.bf16.msra.mxu0 %v975
      %999 = vmatmul.bf16.gmra.mxu0 %v941
      %v1000 = vpop.f32.mrf.mxu0
      %v1001 = vadd.f32 0.0, %v1000
      %v1002 = vpop.f32.mrf.mxu0
      %1003 = vdwg.mxu0
      %v1004 = vld [vmem:[#allocation2] sm:$0xff]
      %v1005 = vadd.f32 %v1004, %v1001
      %1006 = vst [vmem:[#allocation2] sm:$0xff] %v1005
      %v1007 = vld [vmem:[#allocation2] sm:$0xff]
      %v1008 = vld [vmem:[%s2] sm:$0x1]
      %v1010 = vperm.slane %v1008, 0
      %v1012 = vadd.f32 %v1007, %v1010
      %v1013 = vmax.f32 %v1012, 0.0
      %v1014 = vpack.c.bf16 %v1013, %v1013
      %1015 = vst [vmem:[%s202] sm:$0xf] %v1014
      %p1016 = scmp.lt.s32.totalorder %s18, 1
      %s1017 = scalar_select %p1016, %s18, 1
      %p1018 = scmp.lt.s32.totalorder %s19, 0
      %s1019 = scalar_select %p1018, %s19, 0
      %s1020 = sadd.s32 %s1019, %s1017
      %s1021 = smul.addr %s1020, 4
      %s1022 = scalar_lea.vmem %s3, %s1021
      // Predicated region
      $region33: #{_lambda_.7} parent=31 // pred_check
        %p1023 = pneg %p116
      $region34: #{_lambda_.7} parent=31 // pred_check_branch
        %1025 = sbr.rel (%p1023) target = $region36
      $region35: #{_lambda_.7} parent=31 // pred_region
        _
      $region36: #{_lambda_.7} parent=31 // pred_fallthru
        _
    $region32: #{_lambda_.7} parent=5 // pred_fallthru
      _
    %p1026 = scmp.le.s32.totalorder 2, %s9
    // Predicated region
    $region37: #{_lambda_.7} parent=5 // pred_check
      %p1027 = pneg %p1026
    $region38: #{_lambda_.7} parent=5 // pred_check_branch
      %1029 = sbr.rel (%p1027) target = $region40
    $region39: #{_lambda_.7} parent=5 // pred_region
      %s1030 = ssub.s32 %s9, 2
      // Predicated region
      $region41: #{_lambda_.7} parent=39 // pred_check
        %p1031 = pneg %p122
      $region42: #{_lambda_.7} parent=39 // pred_check_branch
        %1033 = sbr.rel (%p1031) target = $region44
      $region43: #{_lambda_.7} parent=39 // pred_region
        %p1034 = scmp.lt.s32.totalorder %s20, 1
        %s1035 = scalar_select %p1034, %s20, 1
        %p1036 = scmp.lt.s32.totalorder %s21, 0
        %s1037 = scalar_select %p1036, %s21, 0
        %s1038 = sadd.s32 %s1037, %s1035
        %s1039 = smul.addr %s1038, 4
        %s1040 = scalar_lea.vmem %s3, %s1039
      $region44: #{_lambda_.7} parent=39 // pred_fallthru
        _
    $region40: #{_lambda_.7} parent=5 // pred_fallthru
      _
  $region6: #{_lambda_.7} parent=0 // loop_footer
    %s13 = sadd.s32 1, %s9
  $region7: #{_lambda_.7} parent=0 // loop_footer_branch
    %8 = sbr.rel target = $region3
  $region8: #{_lambda_.7} parent=0 // loop_exit
    _

</llo_original>
